<compile_context>
chip_gen: v7x
topology: tpu7x:2x2x1
jax: 0.10.0
libtpu: 0.0.40
codegen_flags: <defaults>
</compile_context>

<pallas_src>
import functools

import jax
import jax.numpy as jnp
from jax import lax
from jax.experimental import pallas as pl
from jax.experimental.pallas import tpu as pltpu


def mlp_kernel(x_ref, w1_ref, b1_ref, w2_ref, b2_ref, w3_ref, b3_ref,
               w4c_ref, b4_ref, o_ref):
    # x block: (bt, in) f32 in natural layout (one contiguous HBM slab per step).
    # Weights in PyTorch (out, in) layout, bf16.  Biases are (out, 1) f32 columns.
    x_bf = x_ref[...].astype(jnp.bfloat16)                                   # (bt, in)

    # Layer 1: contract the shared `in` axis of w1 (256, in) and x (bt, in) directly,
    # so the result lands as (256, bt) with batch on lanes -- no wrapper transpose.
    h1 = lax.dot_general(w1_ref[...], x_bf,
                         dimension_numbers=(((1,), (1,)), ((), ())),
                         preferred_element_type=jnp.float32) + b1_ref[...]   # (256, bt)
    h1 = jnp.maximum(h1, 0.0)

    h2 = jnp.dot(w2_ref[...], h1.astype(jnp.bfloat16),
                 preferred_element_type=jnp.float32) + b2_ref[...]           # (128, bt)
    h2 = jnp.maximum(h2, 0.0)

    h3 = jnp.dot(w3_ref[...], h2.astype(jnp.bfloat16),
                 preferred_element_type=jnp.float32) + b3_ref[...]           # (64, bt)
    h3 = jnp.maximum(h3, 0.0)

    # Final 64 -> 1 layer on VPU (multiply) + XLU (sublane reduce): no MXU pass for a
    # single live output column.  Result is a lane-dense (1, bt) row.
    o_ref[...] = (jnp.sum(h3 * w4c_ref[...], axis=0, keepdims=True)
                  + b4_ref[...]).astype(o_ref.dtype)


def _rep_spec(arr, single_buffer):
    # Replicated parameter: same (0, 0) block every grid step -> fetched exactly once.
    if single_buffer:
        return pl.BlockSpec(arr.shape, lambda i: (0, 0),
                            pipeline_mode=pl.Buffered(1))
    return pl.BlockSpec(arr.shape, lambda i: (0, 0))


@functools.partial(jax.jit, static_argnames=("batch_tile", "single_buffer_params"))
def _mlp_forward_impl(x, params, batch_tile, single_buffer_params):
    B, in_features = x.shape

    # Small batches get a single full-extent block (no (8,128) constraint, no pad).
    bt = min(batch_tile, B)
    num_tiles = pl.cdiv(B, bt)
    if num_tiles > 1 and bt % 128 != 0:
        raise ValueError("batch_tile must be a multiple of 128 when B > batch_tile")
    B_pad = num_tiles * bt
    # Only the rare ragged-tail case pads x (padded rows are sliced off at the end).
    x_in = x if B_pad == B else jnp.pad(x, ((0, B_pad - B), (0, 0)))

    w1 = params["w1"].astype(jnp.bfloat16)             # (256, in)
    w2 = params["w2"].astype(jnp.bfloat16)             # (128, 256)
    w3 = params["w3"].astype(jnp.bfloat16)             # (64, 128)
    w4c = params["w4"].reshape(-1, 1)                  # (64, 1) f32 (stays on VPU)
    b1 = params["b1"].reshape(-1, 1)                   # (256, 1) f32
    b2 = params["b2"].reshape(-1, 1)                   # (128, 1)
    b3 = params["b3"].reshape(-1, 1)                   # (64, 1)
    b4 = params["b4"].reshape(1, 1)                    # (1, 1)

    rep = functools.partial(_rep_spec, single_buffer=single_buffer_params)

    out_row = pl.pallas_call(
        mlp_kernel,
        out_shape=jax.ShapeDtypeStruct((1, B_pad), jnp.float32),
        grid_spec=pltpu.PrefetchScalarGridSpec(
            num_scalar_prefetch=0,
            grid=(num_tiles,),
            in_specs=[
                # Natural-layout x block: contiguous rows, 4 B/elem, bf16 cast in VMEM.
                pl.BlockSpec((bt, in_features), lambda i: (i, 0)),
                rep(w1), rep(b1),
                rep(w2), rep(b2),
                rep(w3), rep(b3),
                rep(w4c), rep(b4),
            ],
            # Lane-dense output slab: wide unmasked stores.
            out_specs=pl.BlockSpec((1, bt), lambda i: (0, i)),
        ),
        compiler_params=pltpu.CompilerParams(
            dimension_semantics=("parallel",)),
    )(x_in, w1, b1, w2, b2, w3, b3, w4c, b4)

    # Back to the module's (B, 1) output shape; drop any padded columns.
    return out_row[0, :B].reshape(B, 1)


def mlp_forward(x, params, batch_tile=1024):
    """x: (B, input_size) f32. params: PyTorch-layout weights (out, in), biases (out,).

    Returns (B, 1) f32, matching MLPRegression.forward (to bf16 matmul precision).
    """
    try:
        return _mlp_forward_impl(x, params, batch_tile, True)
    except Exception:
        # pipeline_mode=pl.Buffered(1) unsupported in this build: params are ~0.2 MiB,
        # so falling back to default double-buffering costs essentially nothing.
        return _mlp_forward_impl(x, params, batch_tile, False)


def init_params(key, input_size):
    """PyTorch nn.Linear layout: weight (out, in), bias (out,), U(-1/sqrt(in), 1/sqrt(in))."""
    sizes = [(256, input_size), (128, 256), (64, 128), (1, 64)]
    params = {}
    for idx, (fan_out, fan_in) in enumerate(sizes, start=1):
        key, kw, kb = jax.random.split(key, 3)
        bound = 1.0 / (fan_in ** 0.5)
        params[f"w{idx}"] = jax.random.uniform(
            kw, (fan_out, fan_in), jnp.float32, minval=-bound, maxval=bound)
        params[f"b{idx}"] = jax.random.uniform(
            kb, (fan_out,), jnp.float32, minval=-bound, maxval=bound)
    return params


def mlp_reference_f32(x, params):
    """Pure-JAX f32 reference matching the PyTorch module exactly."""
    h = x
    for i in (1, 2, 3):
        h = jnp.maximum(h @ params[f"w{i}"].T + params[f"b{i}"], 0.0)
    return h @ params["w4"].T + params["b4"]


def mlp_reference(x, params):
    """Reference applying the same bf16-in / f32-accumulate casts as the kernel."""
    h = x
    for i in (1, 2, 3):
        w = params[f"w{i}"].astype(jnp.bfloat16)
        h = jnp.dot(h.astype(jnp.bfloat16), w.T,
                    preferred_element_type=jnp.float32) + params[f"b{i}"]
        h = jnp.maximum(h, 0.0)
    return h @ params["w4"].T + params["b4"]


if __name__ == "__main__":
    key = jax.random.PRNGKey(0)
    input_size = 32
    batch = 600

    kx, kp = jax.random.split(key)
    x = jax.random.normal(kx, (batch, input_size), jnp.float32)
    params = init_params(kp, input_size)

    # Default path: B <= batch_tile -> single full-extent block, no padding.
    out = jax.block_until_ready(mlp_forward(x, params))
    # Multi-tile path: small tile forces grid=(3,) and a padded ragged tail block.
    out_tiled = jax.block_until_ready(mlp_forward(x, params, batch_tile=256))

    ref = mlp_reference(x, params).reshape(batch, 1)
    ref32 = mlp_reference_f32(x, params).reshape(batch, 1)

    assert out.shape == (batch, 1)
    assert jnp.allclose(out, ref, atol=1e-3, rtol=1e-3), "mismatch vs bf16 reference"
    assert jnp.allclose(out_tiled, ref, atol=1e-3, rtol=1e-3), "tiled mismatch vs bf16 ref"
    # Loose sanity check against the exact f32 PyTorch-equivalent math (bf16 matmuls).
    assert jnp.allclose(out, ref32, atol=1e-1, rtol=1e-1), "mismatch vs f32 reference"

    print("KERNEL_OK")
</pallas_src>

<mosaic_0001>
module attributes {stable_mosaic.version = 11 : i64} {
  func.func @mlp_kernel(%arg0: i32, %arg1: memref<600x32xf32, #tpu.memory_space<vmem>>, %arg2: memref<256x32xbf16, #tpu.memory_space<vmem>>, %arg3: memref<256x1xf32, #tpu.memory_space<vmem>>, %arg4: memref<128x256xbf16, #tpu.memory_space<vmem>>, %arg5: memref<128x1xf32, #tpu.memory_space<vmem>>, %arg6: memref<64x128xbf16, #tpu.memory_space<vmem>>, %arg7: memref<64x1xf32, #tpu.memory_space<vmem>>, %arg8: memref<64x1xf32, #tpu.memory_space<vmem>>, %arg9: memref<1x1xf32, #tpu.memory_space<vmem>>, %arg10: memref<1x600xf32, #tpu.memory_space<vmem>>) attributes {dimension_semantics = [#tpu.dimension_semantics<parallel>], iteration_bounds = array<i64: 1>, scalar_prefetch = 0 : i64, scratch_operands = 0 : i64, tpu.core_type = #tpu.core_type<tc>, window_params = [{transform_indices = @transform_0, window_bounds = array<i64: 600, 32>}, {pipeline_mode = #tpu.pipeline_mode<synchronous>, transform_indices = @transform_1, window_bounds = array<i64: 256, 32>}, {pipeline_mode = #tpu.pipeline_mode<synchronous>, transform_indices = @transform_2, window_bounds = array<i64: 256, 1>}, {pipeline_mode = #tpu.pipeline_mode<synchronous>, transform_indices = @transform_3, window_bounds = array<i64: 128, 256>}, {pipeline_mode = #tpu.pipeline_mode<synchronous>, transform_indices = @transform_4, window_bounds = array<i64: 128, 1>}, {pipeline_mode = #tpu.pipeline_mode<synchronous>, transform_indices = @transform_5, window_bounds = array<i64: 64, 128>}, {pipeline_mode = #tpu.pipeline_mode<synchronous>, transform_indices = @transform_6, window_bounds = array<i64: 64, 1>}, {pipeline_mode = #tpu.pipeline_mode<synchronous>, transform_indices = @transform_7, window_bounds = array<i64: 64, 1>}, {pipeline_mode = #tpu.pipeline_mode<synchronous>, transform_indices = @transform_8, window_bounds = array<i64: 1, 1>}, {transform_indices = @transform_9, window_bounds = array<i64: 1, 600>}]} {
    %c0 = arith.constant 0 : index
    %c0_0 = arith.constant 0 : index
    %0 = vector.load %arg1[%c0, %c0_0] : memref<600x32xf32, #tpu.memory_space<vmem>>, vector<600x32xf32>
    %1 = arith.truncf %0 : vector<600x32xf32> to vector<600x32xbf16>
    %c0_1 = arith.constant 0 : index
    %c0_2 = arith.constant 0 : index
    %2 = vector.load %arg2[%c0_1, %c0_2] : memref<256x32xbf16, #tpu.memory_space<vmem>>, vector<256x32xbf16>
    %cst = arith.constant dense<0.000000e+00> : vector<256x600xf32>
    %3 = tpu.matmul %2, %1, %cst {dimension_numbers = #tpu.dot_dimension_numbers<[1], [1], [0], [0], [0, 0, 1, 0], [], []>} : vector<256x32xbf16>, vector<600x32xbf16>, vector<256x600xf32> -> vector<256x600xf32>
    %c0_3 = arith.constant 0 : index
    %c0_4 = arith.constant 0 : index
    %4 = vector.load %arg3[%c0_3, %c0_4] : memref<256x1xf32, #tpu.memory_space<vmem>>, vector<256x1xf32>
    %5 = vector.broadcast %4 : vector<256x1xf32> to vector<256x600xf32>
    %6 = arith.addf %3, %5 : vector<256x600xf32>
    %cst_5 = arith.constant 0.000000e+00 : f32
    %7 = vector.broadcast %cst_5 : f32 to vector<256x600xf32>
    %8 = arith.maximumf %6, %7 : vector<256x600xf32>
    %c0_6 = arith.constant 0 : index
    %c0_7 = arith.constant 0 : index
    %9 = vector.load %arg4[%c0_6, %c0_7] : memref<128x256xbf16, #tpu.memory_space<vmem>>, vector<128x256xbf16>
    %10 = arith.truncf %8 : vector<256x600xf32> to vector<256x600xbf16>
    %cst_8 = arith.constant dense<0.000000e+00> : vector<128x600xf32>
    %11 = tpu.matmul %9, %10, %cst_8 {dimension_numbers = #tpu.dot_dimension_numbers<[1], [0], [0], [1], [0, 0, 1, 1], [], []>} : vector<128x256xbf16>, vector<256x600xbf16>, vector<128x600xf32> -> vector<128x600xf32>
    %c0_9 = arith.constant 0 : index
    %c0_10 = arith.constant 0 : index
    %12 = vector.load %arg5[%c0_9, %c0_10] : memref<128x1xf32, #tpu.memory_space<vmem>>, vector<128x1xf32>
    %13 = vector.broadcast %12 : vector<128x1xf32> to vector<128x600xf32>
    %14 = arith.addf %11, %13 : vector<128x600xf32>
    %cst_11 = arith.constant 0.000000e+00 : f32
    %15 = vector.broadcast %cst_11 : f32 to vector<128x600xf32>
    %16 = arith.maximumf %14, %15 : vector<128x600xf32>
    %c0_12 = arith.constant 0 : index
    %c0_13 = arith.constant 0 : index
    %17 = vector.load %arg6[%c0_12, %c0_13] : memref<64x128xbf16, #tpu.memory_space<vmem>>, vector<64x128xbf16>
    %18 = arith.truncf %16 : vector<128x600xf32> to vector<128x600xbf16>
    %cst_14 = arith.constant dense<0.000000e+00> : vector<64x600xf32>
    %19 = tpu.matmul %17, %18, %cst_14 {dimension_numbers = #tpu.dot_dimension_numbers<[1], [0], [0], [1], [0, 0, 1, 1], [], []>} : vector<64x128xbf16>, vector<128x600xbf16>, vector<64x600xf32> -> vector<64x600xf32>
    %c0_15 = arith.constant 0 : index
    %c0_16 = arith.constant 0 : index
    %20 = vector.load %arg7[%c0_15, %c0_16] : memref<64x1xf32, #tpu.memory_space<vmem>>, vector<64x1xf32>
    %21 = vector.broadcast %20 : vector<64x1xf32> to vector<64x600xf32>
    %22 = arith.addf %19, %21 : vector<64x600xf32>
    %cst_17 = arith.constant 0.000000e+00 : f32
    %23 = vector.broadcast %cst_17 : f32 to vector<64x600xf32>
    %24 = arith.maximumf %22, %23 : vector<64x600xf32>
    %c0_18 = arith.constant 0 : index
    %c0_19 = arith.constant 0 : index
    %25 = vector.load %arg8[%c0_18, %c0_19] : memref<64x1xf32, #tpu.memory_space<vmem>>, vector<64x1xf32>
    %26 = vector.broadcast %25 : vector<64x1xf32> to vector<64x600xf32>
    %27 = arith.mulf %24, %26 : vector<64x600xf32>
    %cst_20 = arith.constant dense<0.000000e+00> : vector<600xf32>
    %28 = vector.multi_reduction <add>, %27, %cst_20 [0] : vector<64x600xf32> to vector<600xf32>
    %29 = vector.shape_cast %28 : vector<600xf32> to vector<1x600xf32>
    %c0_21 = arith.constant 0 : index
    %c0_22 = arith.constant 0 : index
    %30 = vector.load %arg9[%c0_21, %c0_22] : memref<1x1xf32, #tpu.memory_space<vmem>>, vector<1x1xf32>
    %31 = vector.broadcast %30 : vector<1x1xf32> to vector<1x600xf32>
    %32 = arith.addf %29, %31 : vector<1x600xf32>
    %c0_23 = arith.constant 0 : index
    %c0_24 = arith.constant 0 : index
    %33 = vector.load %arg10[%c0_23, %c0_24] : memref<1x600xf32, #tpu.memory_space<vmem>>, vector<1x600xf32>
    tpu.vector_store %arg10[%c0_23, %c0_24], %32 {strides = array<i32>} : memref<1x600xf32, #tpu.memory_space<vmem>>, vector<1x600xf32>,
    return
  }
  func.func @transform_0(%arg0: i32) -> (i32, i32) {
    %c0_i32 = arith.constant 0 : i32
    %c0_i32_0 = arith.constant 0 : i32
    return %arg0, %c0_i32 : i32, i32
  }
  func.func @transform_1(%arg0: i32) -> (i32, i32) {
    %c0_i32 = arith.constant 0 : i32
    %c0_i32_0 = arith.constant 0 : i32
    %c0_i32_1 = arith.constant 0 : i32
    return %c0_i32, %c0_i32_0 : i32, i32
  }
  func.func @transform_2(%arg0: i32) -> (i32, i32) {
    %c0_i32 = arith.constant 0 : i32
    %c0_i32_0 = arith.constant 0 : i32
    %c0_i32_1 = arith.constant 0 : i32
    return %c0_i32, %c0_i32_0 : i32, i32
  }
  func.func @transform_3(%arg0: i32) -> (i32, i32) {
    %c0_i32 = arith.constant 0 : i32
    %c0_i32_0 = arith.constant 0 : i32
    %c0_i32_1 = arith.constant 0 : i32
    return %c0_i32, %c0_i32_0 : i32, i32
  }
  func.func @transform_4(%arg0: i32) -> (i32, i32) {
    %c0_i32 = arith.constant 0 : i32
    %c0_i32_0 = arith.constant 0 : i32
    %c0_i32_1 = arith.constant 0 : i32
    return %c0_i32, %c0_i32_0 : i32, i32
  }
  func.func @transform_5(%arg0: i32) -> (i32, i32) {
    %c0_i32 = arith.constant 0 : i32
    %c0_i32_0 = arith.constant 0 : i32
    %c0_i32_1 = arith.constant 0 : i32
    return %c0_i32, %c0_i32_0 : i32, i32
  }
  func.func @transform_6(%arg0: i32) -> (i32, i32) {
    %c0_i32 = arith.constant 0 : i32
    %c0_i32_0 = arith.constant 0 : i32
    %c0_i32_1 = arith.constant 0 : i32
    return %c0_i32, %c0_i32_0 : i32, i32
  }
  func.func @transform_7(%arg0: i32) -> (i32, i32) {
    %c0_i32 = arith.constant 0 : i32
    %c0_i32_0 = arith.constant 0 : i32
    %c0_i32_1 = arith.constant 0 : i32
    return %c0_i32, %c0_i32_0 : i32, i32
  }
  func.func @transform_8(%arg0: i32) -> (i32, i32) {
    %c0_i32 = arith.constant 0 : i32
    %c0_i32_0 = arith.constant 0 : i32
    %c0_i32_1 = arith.constant 0 : i32
    return %c0_i32, %c0_i32_0 : i32, i32
  }
  func.func @transform_9(%arg0: i32) -> (i32, i32) {
    %c0_i32 = arith.constant 0 : i32
    %c0_i32_0 = arith.constant 0 : i32
    return %c0_i32, %arg0 : i32, i32
  }
}

module attributes {stable_mosaic.version = 11 : i64} {
  func.func @mlp_kernel(%arg0: i32, %arg1: memref<600x32xf32, #tpu.memory_space<vmem>>, %arg2: memref<256x32xbf16, #tpu.memory_space<vmem>>, %arg3: memref<256x1xf32, #tpu.memory_space<vmem>>, %arg4: memref<128x256xbf16, #tpu.memory_space<vmem>>, %arg5: memref<128x1xf32, #tpu.memory_space<vmem>>, %arg6: memref<64x128xbf16, #tpu.memory_space<vmem>>, %arg7: memref<64x1xf32, #tpu.memory_space<vmem>>, %arg8: memref<64x1xf32, #tpu.memory_space<vmem>>, %arg9: memref<1x1xf32, #tpu.memory_space<vmem>>, %arg10: memref<1x600xf32, #tpu.memory_space<vmem>>) attributes {dimension_semantics = [#tpu.dimension_semantics<parallel>], iteration_bounds = array<i64: 1>, scalar_prefetch = 0 : i64, scratch_operands = 0 : i64, tpu.core_type = #tpu.core_type<tc>, window_params = [{transform_indices = @transform_0, window_bounds = array<i64: 600, 32>}, {pipeline_mode = #tpu.pipeline_mode<synchronous>, transform_indices = @transform_1, window_bounds = array<i64: 256, 32>}, {pipeline_mode = #tpu.pipeline_mode<synchronous>, transform_indices = @transform_2, window_bounds = array<i64: 256, 1>}, {pipeline_mode = #tpu.pipeline_mode<synchronous>, transform_indices = @transform_3, window_bounds = array<i64: 128, 256>}, {pipeline_mode = #tpu.pipeline_mode<synchronous>, transform_indices = @transform_4, window_bounds = array<i64: 128, 1>}, {pipeline_mode = #tpu.pipeline_mode<synchronous>, transform_indices = @transform_5, window_bounds = array<i64: 64, 128>}, {pipeline_mode = #tpu.pipeline_mode<synchronous>, transform_indices = @transform_6, window_bounds = array<i64: 64, 1>}, {pipeline_mode = #tpu.pipeline_mode<synchronous>, transform_indices = @transform_7, window_bounds = array<i64: 64, 1>}, {pipeline_mode = #tpu.pipeline_mode<synchronous>, transform_indices = @transform_8, window_bounds = array<i64: 1, 1>}, {transform_indices = @transform_9, window_bounds = array<i64: 1, 600>}]} {
    %c0 = arith.constant 0 : index
    %c0_0 = arith.constant 0 : index
    %0 = vector.load %arg1[%c0, %c0_0] : memref<600x32xf32, #tpu.memory_space<vmem>>, vector<600x32xf32>
    %1 = arith.truncf %0 : vector<600x32xf32> to vector<600x32xbf16>
    %c0_1 = arith.constant 0 : index
    %c0_2 = arith.constant 0 : index
    %2 = vector.load %arg2[%c0_1, %c0_2] : memref<256x32xbf16, #tpu.memory_space<vmem>>, vector<256x32xbf16>
    %cst = arith.constant dense<0.000000e+00> : vector<256x600xf32>
    %3 = tpu.matmul %2, %1, %cst {dimension_numbers = #tpu.dot_dimension_numbers<[1], [1], [0], [0], [0, 0, 1, 0], [], []>} : vector<256x32xbf16>, vector<600x32xbf16>, vector<256x600xf32> -> vector<256x600xf32>
    %c0_3 = arith.constant 0 : index
    %c0_4 = arith.constant 0 : index
    %4 = vector.load %arg3[%c0_3, %c0_4] : memref<256x1xf32, #tpu.memory_space<vmem>>, vector<256x1xf32>
    %5 = vector.broadcast %4 : vector<256x1xf32> to vector<256x600xf32>
    %6 = arith.addf %3, %5 : vector<256x600xf32>
    %cst_5 = arith.constant 0.000000e+00 : f32
    %7 = vector.broadcast %cst_5 : f32 to vector<256x600xf32>
    %8 = arith.maximumf %6, %7 : vector<256x600xf32>
    %c0_6 = arith.constant 0 : index
    %c0_7 = arith.constant 0 : index
    %9 = vector.load %arg4[%c0_6, %c0_7] : memref<128x256xbf16, #tpu.memory_space<vmem>>, vector<128x256xbf16>
    %10 = arith.truncf %8 : vector<256x600xf32> to vector<256x600xbf16>
    %cst_8 = arith.constant dense<0.000000e+00> : vector<128x600xf32>
    %11 = tpu.matmul %9, %10, %cst_8 {dimension_numbers = #tpu.dot_dimension_numbers<[1], [0], [0], [1], [0, 0, 1, 1], [], []>} : vector<128x256xbf16>, vector<256x600xbf16>, vector<128x600xf32> -> vector<128x600xf32>
    %c0_9 = arith.constant 0 : index
    %c0_10 = arith.constant 0 : index
    %12 = vector.load %arg5[%c0_9, %c0_10] : memref<128x1xf32, #tpu.memory_space<vmem>>, vector<128x1xf32>
    %13 = vector.broadcast %12 : vector<128x1xf32> to vector<128x600xf32>
    %14 = arith.addf %11, %13 : vector<128x600xf32>
    %cst_11 = arith.constant 0.000000e+00 : f32
    %15 = vector.broadcast %cst_11 : f32 to vector<128x600xf32>
    %16 = arith.maximumf %14, %15 : vector<128x600xf32>
    %c0_12 = arith.constant 0 : index
    %c0_13 = arith.constant 0 : index
    %17 = vector.load %arg6[%c0_12, %c0_13] : memref<64x128xbf16, #tpu.memory_space<vmem>>, vector<64x128xbf16>
    %18 = arith.truncf %16 : vector<128x600xf32> to vector<128x600xbf16>
    %cst_14 = arith.constant dense<0.000000e+00> : vector<64x600xf32>
    %19 = tpu.matmul %17, %18, %cst_14 {dimension_numbers = #tpu.dot_dimension_numbers<[1], [0], [0], [1], [0, 0, 1, 1], [], []>} : vector<64x128xbf16>, vector<128x600xbf16>, vector<64x600xf32> -> vector<64x600xf32>
    %c0_15 = arith.constant 0 : index
    %c0_16 = arith.constant 0 : index
    %20 = vector.load %arg7[%c0_15, %c0_16] : memref<64x1xf32, #tpu.memory_space<vmem>>, vector<64x1xf32>
    %21 = vector.broadcast %20 : vector<64x1xf32> to vector<64x600xf32>
    %22 = arith.addf %19, %21 : vector<64x600xf32>
    %cst_17 = arith.constant 0.000000e+00 : f32
    %23 = vector.broadcast %cst_17 : f32 to vector<64x600xf32>
    %24 = arith.maximumf %22, %23 : vector<64x600xf32>
    %c0_18 = arith.constant 0 : index
    %c0_19 = arith.constant 0 : index
    %25 = vector.load %arg8[%c0_18, %c0_19] : memref<64x1xf32, #tpu.memory_space<vmem>>, vector<64x1xf32>
    %26 = vector.broadcast %25 : vector<64x1xf32> to vector<64x600xf32>
    %27 = arith.mulf %24, %26 : vector<64x600xf32>
    %cst_20 = arith.constant dense<0.000000e+00> : vector<600xf32>
    %28 = vector.multi_reduction <add>, %27, %cst_20 [0] : vector<64x600xf32> to vector<600xf32>
    %29 = vector.shape_cast %28 : vector<600xf32> to vector<1x600xf32>
    %c0_21 = arith.constant 0 : index
    %c0_22 = arith.constant 0 : index
    %30 = vector.load %arg9[%c0_21, %c0_22] : memref<1x1xf32, #tpu.memory_space<vmem>>, vector<1x1xf32>
    %31 = vector.broadcast %30 : vector<1x1xf32> to vector<1x600xf32>
    %32 = arith.addf %29, %31 : vector<1x600xf32>
    %c0_23 = arith.constant 0 : index
    %c0_24 = arith.constant 0 : index
    %33 = vector.load %arg10[%c0_23, %c0_24] : memref<1x600xf32, #tpu.memory_space<vmem>>, vector<1x600xf32>
    tpu.vector_store %arg10[%c0_23, %c0_24], %32 {strides = array<i32>} : memref<1x600xf32, #tpu.memory_space<vmem>>, vector<1x600xf32>,
    return
  }
  func.func @transform_0(%arg0: i32) -> (i32, i32) {
    %c0_i32 = arith.constant 0 : i32
    %c0_i32_0 = arith.constant 0 : i32
    return %arg0, %c0_i32 : i32, i32
  }
  func.func @transform_1(%arg0: i32) -> (i32, i32) {
    %c0_i32 = arith.constant 0 : i32
    %c0_i32_0 = arith.constant 0 : i32
    %c0_i32_1 = arith.constant 0 : i32
    return %c0_i32, %c0_i32_0 : i32, i32
  }
  func.func @transform_2(%arg0: i32) -> (i32, i32) {
    %c0_i32 = arith.constant 0 : i32
    %c0_i32_0 = arith.constant 0 : i32
    %c0_i32_1 = arith.constant 0 : i32
    return %c0_i32, %c0_i32_0 : i32, i32
  }
  func.func @transform_3(%arg0: i32) -> (i32, i32) {
    %c0_i32 = arith.constant 0 : i32
    %c0_i32_0 = arith.constant 0 : i32
    %c0_i32_1 = arith.constant 0 : i32
    return %c0_i32, %c0_i32_0 : i32, i32
  }
  func.func @transform_4(%arg0: i32) -> (i32, i32) {
    %c0_i32 = arith.constant 0 : i32
    %c0_i32_0 = arith.constant 0 : i32
    %c0_i32_1 = arith.constant 0 : i32
    return %c0_i32, %c0_i32_0 : i32, i32
  }
  func.func @transform_5(%arg0: i32) -> (i32, i32) {
    %c0_i32 = arith.constant 0 : i32
    %c0_i32_0 = arith.constant 0 : i32
    %c0_i32_1 = arith.constant 0 : i32
    return %c0_i32, %c0_i32_0 : i32, i32
  }
  func.func @transform_6(%arg0: i32) -> (i32, i32) {
    %c0_i32 = arith.constant 0 : i32
    %c0_i32_0 = arith.constant 0 : i32
    %c0_i32_1 = arith.constant 0 : i32
    return %c0_i32, %c0_i32_0 : i32, i32
  }
  func.func @transform_7(%arg0: i32) -> (i32, i32) {
    %c0_i32 = arith.constant 0 : i32
    %c0_i32_0 = arith.constant 0 : i32
    %c0_i32_1 = arith.constant 0 : i32
    return %c0_i32, %c0_i32_0 : i32, i32
  }
  func.func @transform_8(%arg0: i32) -> (i32, i32) {
    %c0_i32 = arith.constant 0 : i32
    %c0_i32_0 = arith.constant 0 : i32
    %c0_i32_1 = arith.constant 0 : i32
    return %c0_i32, %c0_i32_0 : i32, i32
  }
  func.func @transform_9(%arg0: i32) -> (i32, i32) {
    %c0_i32 = arith.constant 0 : i32
    %c0_i32_0 = arith.constant 0 : i32
    return %c0_i32, %arg0 : i32, i32
  }
}

</mosaic_0001>

<llo_original>
// kernel: _mlp_forward_impl.1
$region0: #{_mlp_forward_impl.1}
  #allocation0 [shape = 'u32[]', space=smem, size = 0x4, offset = 0x4, fixed_abs, tag = 'smem constant byte address 0x4 - core index']
  #allocation1 [shape = 'u32[144,128]{1,0:T(1,128)}', space=vmem, size = 0x12000, scoped, tag = 'internal scratch']
  #allocation2 [shape = 'f32[1,1]{1,0:T(1,128)S(1)}', space=vmem, size = 0x200, scoped, tag = 'scoped memory for _mlp_forward_impl.1']
  %s0 = inlined_call_operand.vmem [shape: f32[600,32], index: 0, kind: input, shape index: {}]
  %s1 = inlined_call_operand.vmem [shape: bf16[256,32], index: 1, kind: input, shape index: {}]
  %s2 = inlined_call_operand.vmem [shape: f32[256,1], index: 2, kind: input, shape index: {}]
  %s3 = inlined_call_operand.vmem [shape: bf16[128,256], index: 3, kind: input, shape index: {}]
  %s4 = inlined_call_operand.vmem [shape: f32[128,1], index: 4, kind: input, shape index: {}]
  %s5 = inlined_call_operand.vmem [shape: bf16[64,128], index: 5, kind: input, shape index: {}]
  %s6 = inlined_call_operand.vmem [shape: f32[64,1], index: 6, kind: input, shape index: {}]
  %s7 = inlined_call_operand.vmem [shape: f32[64,1], index: 7, kind: input, shape index: {}]
  %s8 = inlined_call_operand.<no memory space> [shape: f32[1,1], index: 8, kind: input, shape index: {}]
  %s9 = inlined_call_operand.hbm [shape: f32[1,600], index: 9, kind: output, shape index: {}]
  %s10 = sld [smem:[#allocation0]]
  $region46: #{_mlp_forward_impl.1} parent=0
    _
  %s12 = ssub.s32 1, %s10
  %s13 = scalar_select 0, %s12, %s10
  %v14 = vstv %s8
  %15 = vst [vmem:[#allocation2] sm:$0x1] %v14
  $region1: #{_mlp_forward_impl.1} parent=0
    #allocation3 [shape = 'u8[2560]{0}', space=vmem, size = 0xc00, scoped, tag = 'output window, operand 0, single buffered']
    #allocation4 [shape = 's32[1]{0}', space=sflag, size = 0x4, scoped, tag = 'scoped memory for _mlp_forward_impl.1']
    %16 = vsyncpa [#allocation4], 0
    // Predicated region
    $region2: #{_mlp_forward_impl.1} parent=1 // pred_check
      _
    $region3: #{_mlp_forward_impl.1} parent=1 // pred_check_branch
      %18 = sbr.rel (0) target = $region5
    $region4: #{_mlp_forward_impl.1} parent=1 // pred_region
      _
    $region5: #{_mlp_forward_impl.1} parent=1 // pred_fallthru
      _
    // Predicated region
    $region6: #{_mlp_forward_impl.1} parent=1 // pred_check
      _
    $region7: #{_mlp_forward_impl.1} parent=1 // pred_check_branch
      %20 = sbr.rel (0) target = $region9
    $region8: #{_mlp_forward_impl.1} parent=1 // pred_region
      _
    $region9: #{_mlp_forward_impl.1} parent=1 // pred_fallthru
      _
    // Predicated region
    $region10: #{_mlp_forward_impl.1} parent=1 // pred_check
      _
    $region11: #{_mlp_forward_impl.1} parent=1 // pred_check_branch
      %22 = sbr.rel (0) target = $region13
    $region12: #{_mlp_forward_impl.1} parent=1 // pred_region
      _
    $region13: #{_mlp_forward_impl.1} parent=1 // pred_fallthru
      _
    // Predicated region
    $region14: #{_mlp_forward_impl.1} parent=1 // pred_check
      _
    $region15: #{_mlp_forward_impl.1} parent=1 // pred_check_branch
      %24 = sbr.rel (0) target = $region17
    $region16: #{_mlp_forward_impl.1} parent=1 // pred_region
      _
    $region17: #{_mlp_forward_impl.1} parent=1 // pred_fallthru
      _
    // Predicated region
    $region18: #{_mlp_forward_impl.1} parent=1 // pred_check
      _
    $region19: #{_mlp_forward_impl.1} parent=1 // pred_check_branch
      %26 = sbr.rel (0) target = $region21
    $region20: #{_mlp_forward_impl.1} parent=1 // pred_region
      _
    $region21: #{_mlp_forward_impl.1} parent=1 // pred_fallthru
      _
    // Predicated region
    $region22: #{_mlp_forward_impl.1} parent=1 // pred_check
      _
    $region23: #{_mlp_forward_impl.1} parent=1 // pred_check_branch
      %28 = sbr.rel (0) target = $region25
    $region24: #{_mlp_forward_impl.1} parent=1 // pred_region
      _
    $region25: #{_mlp_forward_impl.1} parent=1 // pred_fallthru
      _
    // Predicated region
    $region26: #{_mlp_forward_impl.1} parent=1 // pred_check
      _
    $region27: #{_mlp_forward_impl.1} parent=1 // pred_check_branch
      %30 = sbr.rel (0) target = $region29
    $region28: #{_mlp_forward_impl.1} parent=1 // pred_region
      _
    $region29: #{_mlp_forward_impl.1} parent=1 // pred_fallthru
      _
    // Predicated region
    $region30: #{_mlp_forward_impl.1} parent=1 // pred_check
      _
    $region31: #{_mlp_forward_impl.1} parent=1 // pred_check_branch
      %32 = sbr.rel (0) target = $region33
    $region32: #{_mlp_forward_impl.1} parent=1 // pred_region
      _
    $region33: #{_mlp_forward_impl.1} parent=1 // pred_fallthru
      _
    // Predicated region
    $region34: #{_mlp_forward_impl.1} parent=1 // pred_check
      _
    $region35: #{_mlp_forward_impl.1} parent=1 // pred_check_branch
      %34 = sbr.rel (0) target = $region37
    $region36: #{_mlp_forward_impl.1} parent=1 // pred_region
      _
    $region37: #{_mlp_forward_impl.1} parent=1 // pred_fallthru
      _
    %v36 = vld [vmem:[%s0] sm:$0xff]
    %v37 = vld [vmem:[%s0 + $0x8] sm:$0xff]
    %v38 = vld [vmem:[%s0 + $0x10] sm:$0xff]
    %v39 = vld [vmem:[%s0 + $0x18] sm:$0xff]
    %v40 = vld [vmem:[%s0 + $0x20] sm:$0xff]
    %v41 = vld [vmem:[%s0 + $0x28] sm:$0xff]
    %v42 = vld [vmem:[%s0 + $0x30] sm:$0xff]
    %v43 = vld [vmem:[%s0 + $0x38] sm:$0xff]
    %v44 = vld [vmem:[%s0 + $0x40] sm:$0xff]
    %v45 = vld [vmem:[%s0 + $0x48] sm:$0xff]
    %v46 = vld [vmem:[%s0 + $0x50] sm:$0xff]
    %v47 = vld [vmem:[%s0 + $0x58] sm:$0xff]
    %v48 = vld [vmem:[%s0 + $0x60] sm:$0xff]
    %v49 = vld [vmem:[%s0 + $0x68] sm:$0xff]
    %v50 = vld [vmem:[%s0 + $0x70] sm:$0xff]
    %v51 = vld [vmem:[%s0 + $0x78] sm:$0xff]
    %v52 = vld [vmem:[%s0 + $0x80] sm:$0xff]
    %v53 = vld [vmem:[%s0 + $0x88] sm:$0xff]
    %v54 = vld [vmem:[%s0 + $0x90] sm:$0xff]
    %v55 = vld [vmem:[%s0 + $0x98] sm:$0xff]
    %v56 = vld [vmem:[%s0 + $0xa0] sm:$0xff]
    %v57 = vld [vmem:[%s0 + $0xa8] sm:$0xff]
    %v58 = vld [vmem:[%s0 + $0xb0] sm:$0xff]
    %v59 = vld [vmem:[%s0 + $0xb8] sm:$0xff]
    %v60 = vld [vmem:[%s0 + $0xc0] sm:$0xff]
    %v61 = vld [vmem:[%s0 + $0xc8] sm:$0xff]
    %v62 = vld [vmem:[%s0 + $0xd0] sm:$0xff]
    %v63 = vld [vmem:[%s0 + $0xd8] sm:$0xff]
    %v64 = vld [vmem:[%s0 + $0xe0] sm:$0xff]
    %v65 = vld [vmem:[%s0 + $0xe8] sm:$0xff]
    %v66 = vld [vmem:[%s0 + $0xf0] sm:$0xff]
    %v67 = vld [vmem:[%s0 + $0xf8] sm:$0xff]
    %v68 = vld [vmem:[%s0 + $0x100] sm:$0xff]
    %v69 = vld [vmem:[%s0 + $0x108] sm:$0xff]
    %v70 = vld [vmem:[%s0 + $0x110] sm:$0xff]
    %v71 = vld [vmem:[%s0 + $0x118] sm:$0xff]
    %v72 = vld [vmem:[%s0 + $0x120] sm:$0xff]
    %v73 = vld [vmem:[%s0 + $0x128] sm:$0xff]
    %v74 = vld [vmem:[%s0 + $0x130] sm:$0xff]
    %v75 = vld [vmem:[%s0 + $0x138] sm:$0xff]
    %v76 = vld [vmem:[%s0 + $0x140] sm:$0xff]
    %v77 = vld [vmem:[%s0 + $0x148] sm:$0xff]
    %v78 = vld [vmem:[%s0 + $0x150] sm:$0xff]
    %v79 = vld [vmem:[%s0 + $0x158] sm:$0xff]
    %v80 = vld [vmem:[%s0 + $0x160] sm:$0xff]
    %v81 = vld [vmem:[%s0 + $0x168] sm:$0xff]
    %v82 = vld [vmem:[%s0 + $0x170] sm:$0xff]
    %v83 = vld [vmem:[%s0 + $0x178] sm:$0xff]
    %v84 = vld [vmem:[%s0 + $0x180] sm:$0xff]
    %v85 = vld [vmem:[%s0 + $0x188] sm:$0xff]
    %v86 = vld [vmem:[%s0 + $0x190] sm:$0xff]
    %v87 = vld [vmem:[%s0 + $0x198] sm:$0xff]
    %v88 = vld [vmem:[%s0 + $0x1a0] sm:$0xff]
    %v89 = vld [vmem:[%s0 + $0x1a8] sm:$0xff]
    %v90 = vld [vmem:[%s0 + $0x1b0] sm:$0xff]
    %v91 = vld [vmem:[%s0 + $0x1b8] sm:$0xff]
    %v92 = vld [vmem:[%s0 + $0x1c0] sm:$0xff]
    %v93 = vld [vmem:[%s0 + $0x1c8] sm:$0xff]
    %v94 = vld [vmem:[%s0 + $0x1d0] sm:$0xff]
    %v95 = vld [vmem:[%s0 + $0x1d8] sm:$0xff]
    %v96 = vld [vmem:[%s0 + $0x1e0] sm:$0xff]
    %v97 = vld [vmem:[%s0 + $0x1e8] sm:$0xff]
    %v98 = vld [vmem:[%s0 + $0x1f0] sm:$0xff]
    %v99 = vld [vmem:[%s0 + $0x1f8] sm:$0xff]
    %v100 = vld [vmem:[%s0 + $0x200] sm:$0xff]
    %v101 = vld [vmem:[%s0 + $0x208] sm:$0xff]
    %v102 = vld [vmem:[%s0 + $0x210] sm:$0xff]
    %v103 = vld [vmem:[%s0 + $0x218] sm:$0xff]
    %v104 = vld [vmem:[%s0 + $0x220] sm:$0xff]
    %v105 = vld [vmem:[%s0 + $0x228] sm:$0xff]
    %v106 = vld [vmem:[%s0 + $0x230] sm:$0xff]
    %v107 = vld [vmem:[%s0 + $0x238] sm:$0xff]
    %v108 = vld [vmem:[%s0 + $0x240] sm:$0xff]
    %v109 = vld [vmem:[%s0 + $0x248] sm:$0xff]
    %v110 = vld [vmem:[%s0 + $0x250] sm:$0xff]
    %v111 = vpack.c.bf16 %v37, %v36
    %v112 = vpack.c.bf16 %v39, %v38
    %v113 = vpack.c.bf16 %v41, %v40
    %v114 = vpack.c.bf16 %v43, %v42
    %v115 = vpack.c.bf16 %v45, %v44
    %v116 = vpack.c.bf16 %v47, %v46
    %v117 = vpack.c.bf16 %v49, %v48
    %v118 = vpack.c.bf16 %v51, %v50
    %v119 = vpack.c.bf16 %v53, %v52
    %v120 = vpack.c.bf16 %v55, %v54
    %v121 = vpack.c.bf16 %v57, %v56
    %v122 = vpack.c.bf16 %v59, %v58
    %v123 = vpack.c.bf16 %v61, %v60
    %v124 = vpack.c.bf16 %v63, %v62
    %v125 = vpack.c.bf16 %v65, %v64
    %v126 = vpack.c.bf16 %v67, %v66
    %v127 = vpack.c.bf16 %v69, %v68
    %v128 = vpack.c.bf16 %v71, %v70
    %v129 = vpack.c.bf16 %v73, %v72
    %v130 = vpack.c.bf16 %v75, %v74
    %v131 = vpack.c.bf16 %v77, %v76
    %v132 = vpack.c.bf16 %v79, %v78
    %v133 = vpack.c.bf16 %v81, %v80
    %v134 = vpack.c.bf16 %v83, %v82
    %v135 = vpack.c.bf16 %v85, %v84
    %v136 = vpack.c.bf16 %v87, %v86
    %v137 = vpack.c.bf16 %v89, %v88
    %v138 = vpack.c.bf16 %v91, %v90
    %v139 = vpack.c.bf16 %v93, %v92
    %v140 = vpack.c.bf16 %v95, %v94
    %v141 = vpack.c.bf16 %v97, %v96
    %v142 = vpack.c.bf16 %v99, %v98
    %v143 = vpack.c.bf16 %v101, %v100
    %v144 = vpack.c.bf16 %v103, %v102
    %v145 = vpack.c.bf16 %v105, %v104
    %v146 = vpack.c.bf16 %v107, %v106
    %v147 = vpack.c.bf16 %v109, %v108
    %v148 = vpack.c.bf16 %v110, %v110
    %v149 = vld [vmem:[%s1] sm:$0xf]
    %v150 = vld [vmem:[%s1 + $0x4] sm:$0xf]
    %v151 = vld [vmem:[%s1 + $0x8] sm:$0xf]
    %v152 = vld [vmem:[%s1 + $0xc] sm:$0xf]
    %v153 = vld [vmem:[%s1 + $0x10] sm:$0xf]
    %v154 = vld [vmem:[%s1 + $0x14] sm:$0xf]
    %v155 = vld [vmem:[%s1 + $0x18] sm:$0xf]
    %v156 = vld [vmem:[%s1 + $0x1c] sm:$0xf]
    %v157 = vld [vmem:[%s1 + $0x20] sm:$0xf]
    %v158 = vld [vmem:[%s1 + $0x24] sm:$0xf]
    %v159 = vld [vmem:[%s1 + $0x28] sm:$0xf]
    %v160 = vld [vmem:[%s1 + $0x2c] sm:$0xf]
    %v161 = vld [vmem:[%s1 + $0x30] sm:$0xf]
    %v162 = vld [vmem:[%s1 + $0x34] sm:$0xf]
    %v163 = vld [vmem:[%s1 + $0x38] sm:$0xf]
    %v164 = vld [vmem:[%s1 + $0x3c] sm:$0xf]
    %v165 = vld [vmem:[%s1 + $0x40] sm:$0xf]
    %v166 = vld [vmem:[%s1 + $0x44] sm:$0xf]
    %v167 = vld [vmem:[%s1 + $0x48] sm:$0xf]
    %v168 = vld [vmem:[%s1 + $0x4c] sm:$0xf]
    %v169 = vld [vmem:[%s1 + $0x50] sm:$0xf]
    %v170 = vld [vmem:[%s1 + $0x54] sm:$0xf]
    %v171 = vld [vmem:[%s1 + $0x58] sm:$0xf]
    %v172 = vld [vmem:[%s1 + $0x5c] sm:$0xf]
    %v173 = vld [vmem:[%s1 + $0x60] sm:$0xf]
    %v174 = vld [vmem:[%s1 + $0x64] sm:$0xf]
    %v175 = vld [vmem:[%s1 + $0x68] sm:$0xf]
    %v176 = vld [vmem:[%s1 + $0x6c] sm:$0xf]
    %v177 = vld [vmem:[%s1 + $0x70] sm:$0xf]
    %v178 = vld [vmem:[%s1 + $0x74] sm:$0xf]
    %v179 = vld [vmem:[%s1 + $0x78] sm:$0xf]
    %v180 = vld [vmem:[%s1 + $0x7c] sm:$0xf]
    %v181 = vld [vmem:[%s2] sm:$0xff]
    %v182 = vld [vmem:[%s2 + $0x8] sm:$0xff]
    %v183 = vld [vmem:[%s2 + $0x10] sm:$0xff]
    %v184 = vld [vmem:[%s2 + $0x18] sm:$0xff]
    %v185 = vld [vmem:[%s2 + $0x20] sm:$0xff]
    %v186 = vld [vmem:[%s2 + $0x28] sm:$0xff]
    %v187 = vld [vmem:[%s2 + $0x30] sm:$0xff]
    %v188 = vld [vmem:[%s2 + $0x38] sm:$0xff]
    %v189 = vld [vmem:[%s2 + $0x40] sm:$0xff]
    %v190 = vld [vmem:[%s2 + $0x48] sm:$0xff]
    %v191 = vld [vmem:[%s2 + $0x50] sm:$0xff]
    %v192 = vld [vmem:[%s2 + $0x58] sm:$0xff]
    %v193 = vld [vmem:[%s2 + $0x60] sm:$0xff]
    %v194 = vld [vmem:[%s2 + $0x68] sm:$0xff]
    %v195 = vld [vmem:[%s2 + $0x70] sm:$0xff]
    %v196 = vld [vmem:[%s2 + $0x78] sm:$0xff]
    %v197 = vld [vmem:[%s2 + $0x80] sm:$0xff]
    %v198 = vld [vmem:[%s2 + $0x88] sm:$0xff]
    %v199 = vld [vmem:[%s2 + $0x90] sm:$0xff]
    %v200 = vld [vmem:[%s2 + $0x98] sm:$0xff]
    %v201 = vld [vmem:[%s2 + $0xa0] sm:$0xff]
    %v202 = vld [vmem:[%s2 + $0xa8] sm:$0xff]
    %v203 = vld [vmem:[%s2 + $0xb0] sm:$0xff]
    %v204 = vld [vmem:[%s2 + $0xb8] sm:$0xff]
    %v205 = vld [vmem:[%s2 + $0xc0] sm:$0xff]
    %v206 = vld [vmem:[%s2 + $0xc8] sm:$0xff]
    %v207 = vld [vmem:[%s2 + $0xd0] sm:$0xff]
    %v208 = vld [vmem:[%s2 + $0xd8] sm:$0xff]
    %v209 = vld [vmem:[%s2 + $0xe0] sm:$0xff]
    %v210 = vld [vmem:[%s2 + $0xe8] sm:$0xff]
    %v211 = vld [vmem:[%s2 + $0xf0] sm:$0xff]
    %v212 = vld [vmem:[%s2 + $0xf8] sm:$0xff]
    %214 = vset.pattern.permute.xlu0 0
    %215 = vperm.xlu0 %214, %v181
    %v216 = vpop.permute.xlu0 %215
    %219 = vset.pattern.permute.xlu0 0
    %220 = vperm.xlu0 %219, %v182
    %v221 = vpop.permute.xlu0 %220
    %224 = vset.pattern.permute.xlu0 0
    %225 = vperm.xlu0 %224, %v183
    %v226 = vpop.permute.xlu0 %225
    %229 = vset.pattern.permute.xlu0 0
    %230 = vperm.xlu0 %229, %v184
    %v231 = vpop.permute.xlu0 %230
    %234 = vset.pattern.permute.xlu0 0
    %235 = vperm.xlu0 %234, %v185
    %v236 = vpop.permute.xlu0 %235
    %239 = vset.pattern.permute.xlu0 0
    %240 = vperm.xlu0 %239, %v186
    %v241 = vpop.permute.xlu0 %240
    %244 = vset.pattern.permute.xlu0 0
    %245 = vperm.xlu0 %244, %v187
    %v246 = vpop.permute.xlu0 %245
    %249 = vset.pattern.permute.xlu0 0
    %250 = vperm.xlu0 %249, %v188
    %v251 = vpop.permute.xlu0 %250
    %254 = vset.pattern.permute.xlu0 0
    %255 = vperm.xlu0 %254, %v189
    %v256 = vpop.permute.xlu0 %255
    %259 = vset.pattern.permute.xlu0 0
    %260 = vperm.xlu0 %259, %v190
    %v261 = vpop.permute.xlu0 %260
    %264 = vset.pattern.permute.xlu0 0
    %265 = vperm.xlu0 %264, %v191
    %v266 = vpop.permute.xlu0 %265
    %269 = vset.pattern.permute.xlu0 0
    %270 = vperm.xlu0 %269, %v192
    %v271 = vpop.permute.xlu0 %270
    %274 = vset.pattern.permute.xlu0 0
    %275 = vperm.xlu0 %274, %v193
    %v276 = vpop.permute.xlu0 %275
    %279 = vset.pattern.permute.xlu0 0
    %280 = vperm.xlu0 %279, %v194
    %v281 = vpop.permute.xlu0 %280
    %284 = vset.pattern.permute.xlu0 0
    %285 = vperm.xlu0 %284, %v195
    %v286 = vpop.permute.xlu0 %285
    %289 = vset.pattern.permute.xlu0 0
    %290 = vperm.xlu0 %289, %v196
    %v291 = vpop.permute.xlu0 %290
    %294 = vset.pattern.permute.xlu0 0
    %295 = vperm.xlu0 %294, %v197
    %v296 = vpop.permute.xlu0 %295
    %299 = vset.pattern.permute.xlu0 0
    %300 = vperm.xlu0 %299, %v198
    %v301 = vpop.permute.xlu0 %300
    %304 = vset.pattern.permute.xlu0 0
    %305 = vperm.xlu0 %304, %v199
    %v306 = vpop.permute.xlu0 %305
    %309 = vset.pattern.permute.xlu0 0
    %310 = vperm.xlu0 %309, %v200
    %v311 = vpop.permute.xlu0 %310
    %314 = vset.pattern.permute.xlu0 0
    %315 = vperm.xlu0 %314, %v201
    %v316 = vpop.permute.xlu0 %315
    %319 = vset.pattern.permute.xlu0 0
    %320 = vperm.xlu0 %319, %v202
    %v321 = vpop.permute.xlu0 %320
    %324 = vset.pattern.permute.xlu0 0
    %325 = vperm.xlu0 %324, %v203
    %v326 = vpop.permute.xlu0 %325
    %329 = vset.pattern.permute.xlu0 0
    %330 = vperm.xlu0 %329, %v204
    %v331 = vpop.permute.xlu0 %330
    %334 = vset.pattern.permute.xlu0 0
    %335 = vperm.xlu0 %334, %v205
    %v336 = vpop.permute.xlu0 %335
    %339 = vset.pattern.permute.xlu0 0
    %340 = vperm.xlu0 %339, %v206
    %v341 = vpop.permute.xlu0 %340
    %344 = vset.pattern.permute.xlu0 0
    %345 = vperm.xlu0 %344, %v207
    %v346 = vpop.permute.xlu0 %345
    %349 = vset.pattern.permute.xlu0 0
    %350 = vperm.xlu0 %349, %v208
    %v351 = vpop.permute.xlu0 %350
    %354 = vset.pattern.permute.xlu0 0
    %355 = vperm.xlu0 %354, %v209
    %v356 = vpop.permute.xlu0 %355
    %359 = vset.pattern.permute.xlu0 0
    %360 = vperm.xlu0 %359, %v210
    %v361 = vpop.permute.xlu0 %360
    %364 = vset.pattern.permute.xlu0 0
    %365 = vperm.xlu0 %364, %v211
    %v366 = vpop.permute.xlu0 %365
    %369 = vset.pattern.permute.xlu0 0
    %370 = vperm.xlu0 %369, %v212
    %v371 = vpop.permute.xlu0 %370
    %v405 = vunpack.c.l.b16 %v149
    %v406 = vunpack.c.l.b16 %v150
    %v407 = vunpack.c.l.b16 %v151
    %v408 = vunpack.c.l.b16 %v152
    %v409 = vunpack.c.l.b16 %v153
    %v410 = vunpack.c.l.b16 %v154
    %v411 = vunpack.c.l.b16 %v155
    %v412 = vunpack.c.l.b16 %v156
    %v413 = vunpack.c.l.b16 %v157
    %v414 = vunpack.c.l.b16 %v158
    %v415 = vunpack.c.l.b16 %v159
    %v416 = vunpack.c.l.b16 %v160
    %v417 = vunpack.c.l.b16 %v161
    %v418 = vunpack.c.l.b16 %v162
    %v419 = vunpack.c.l.b16 %v163
    %v420 = vunpack.c.l.b16 %v164
    %v421 = vunpack.c.l.b16 %v165
    %v422 = vunpack.c.l.b16 %v166
    %v423 = vunpack.c.l.b16 %v167
    %v424 = vunpack.c.l.b16 %v168
    %v425 = vunpack.c.l.b16 %v169
    %v426 = vunpack.c.l.b16 %v170
    %v427 = vunpack.c.l.b16 %v171
    %v428 = vunpack.c.l.b16 %v172
    %v429 = vunpack.c.l.b16 %v173
    %v430 = vunpack.c.l.b16 %v174
    %v431 = vunpack.c.l.b16 %v175
    %v432 = vunpack.c.l.b16 %v176
    %v433 = vunpack.c.l.b16 %v177
    %v434 = vunpack.c.l.b16 %v178
    %v435 = vunpack.c.l.b16 %v179
    %v436 = vunpack.c.l.b16 %v180
    %v437 = vpack.c.b16 %v406, %v405
    %v438 = vpack.c.b16 %v408, %v407
    %v439 = vpack.c.b16 %v410, %v409
    %v440 = vpack.c.b16 %v412, %v411
    %v441 = vpack.c.b16 %v414, %v413
    %v442 = vpack.c.b16 %v416, %v415
    %v443 = vpack.c.b16 %v418, %v417
    %v444 = vpack.c.b16 %v420, %v419
    %v445 = vpack.c.b16 %v422, %v421
    %v446 = vpack.c.b16 %v424, %v423
    %v447 = vpack.c.b16 %v426, %v425
    %v448 = vpack.c.b16 %v428, %v427
    %v449 = vpack.c.b16 %v430, %v429
    %v450 = vpack.c.b16 %v432, %v431
    %v451 = vpack.c.b16 %v434, %v433
    %v452 = vpack.c.b16 %v436, %v435
    %vm453 = vcmask 261120
    %v455 = vsel %vm453, %v437, 0
    %v458 = vsel %vm453, %v438, 0
    %v461 = vsel %vm453, %v439, 0
    %v464 = vsel %vm453, %v440, 0
    %v467 = vsel %vm453, %v441, 0
    %v470 = vsel %vm453, %v442, 0
    %v473 = vsel %vm453, %v443, 0
    %v476 = vsel %vm453, %v444, 0
    %v479 = vsel %vm453, %v445, 0
    %v482 = vsel %vm453, %v446, 0
    %v485 = vsel %vm453, %v447, 0
    %v488 = vsel %vm453, %v448, 0
    %v491 = vsel %vm453, %v449, 0
    %v494 = vsel %vm453, %v450, 0
    %v497 = vsel %vm453, %v451, 0
    %v500 = vsel %vm453, %v452, 0
    %v503 = vsel %vm453, %v111, 0
    %v506 = vsel %vm453, %v112, 0
    %v509 = vsel %vm453, %v113, 0
    %v512 = vsel %vm453, %v114, 0
    %v515 = vsel %vm453, %v115, 0
    %v518 = vsel %vm453, %v116, 0
    %v521 = vsel %vm453, %v117, 0
    %v524 = vsel %vm453, %v118, 0
    %v527 = vsel %vm453, %v119, 0
    %v530 = vsel %vm453, %v120, 0
    %v533 = vsel %vm453, %v121, 0
    %v536 = vsel %vm453, %v122, 0
    %v539 = vsel %vm453, %v123, 0
    %v542 = vsel %vm453, %v124, 0
    %v545 = vsel %vm453, %v125, 0
    %v548 = vsel %vm453, %v126, 0
    %v551 = vsel %vm453, %v127, 0
    %v554 = vsel %vm453, %v128, 0
    %v557 = vsel %vm453, %v129, 0
    %v560 = vsel %vm453, %v130, 0
    %v563 = vsel %vm453, %v131, 0
    %v566 = vsel %vm453, %v132, 0
    %v569 = vsel %vm453, %v133, 0
    %v572 = vsel %vm453, %v134, 0
    %v575 = vsel %vm453, %v135, 0
    %v578 = vsel %vm453, %v136, 0
    %v581 = vsel %vm453, %v137, 0
    %v584 = vsel %vm453, %v138, 0
    %v587 = vsel %vm453, %v139, 0
    %v590 = vsel %vm453, %v140, 0
    %v593 = vsel %vm453, %v141, 0
    %v596 = vsel %vm453, %v142, 0
    %v599 = vsel %vm453, %v143, 0
    %v602 = vsel %vm453, %v144, 0
    %v605 = vsel %vm453, %v145, 0
    %v608 = vsel %vm453, %v146, 0
    %v611 = vsel %vm453, %v147, 0
    %v614 = vsel %vm453, %v148, 0
    %616 = vmatprep.subr.bf16.mxu0 0
    %617 = vmatpush1.bf16.xpose.msra.mxu0 %v503
    %618 = vmatprep.subr.bf16.mxu0 0
    %619 = vmatpush1.bf16.xpose.msra.mxu0 %v506
    %620 = vmatprep.subr.bf16.mxu0 0
    %621 = vmatpush1.bf16.xpose.msra.mxu0 %v509
    %622 = vmatprep.subr.bf16.mxu0 0
    %623 = vmatpush1.bf16.xpose.msra.mxu0 %v512
    %624 = vmatprep.subr.bf16.mxu0 0
    %625 = vmatpush1.bf16.xpose.msra.mxu0 %v515
    %626 = vmatprep.subr.bf16.mxu0 0
    %627 = vmatpush1.bf16.xpose.msra.mxu0 %v518
    %628 = vmatprep.subr.bf16.mxu0 0
    %629 = vmatpush1.bf16.xpose.msra.mxu0 %v521
    %630 = vmatprep.subr.bf16.mxu0 0
    %631 = vmatpush1.bf16.xpose.msra.mxu0 %v524
    %632 = vmatprep.subr.bf16.mxu0 0
    %633 = vmatpush1.bf16.xpose.msra.mxu0 %v527
    %634 = vmatprep.subr.bf16.mxu0 0
    %635 = vmatpush1.bf16.xpose.msra.mxu0 %v530
    %636 = vmatprep.subr.bf16.mxu0 0
    %637 = vmatpush1.bf16.xpose.msra.mxu0 %v533
    %638 = vmatprep.subr.bf16.mxu0 0
    %639 = vmatpush1.bf16.xpose.msra.mxu0 %v536
    %640 = vmatprep.subr.bf16.mxu0 0
    %641 = vmatpush1.bf16.xpose.msra.mxu0 %v539
    %642 = vmatprep.subr.bf16.mxu0 0
    %643 = vmatpush1.bf16.xpose.msra.mxu0 %v542
    %644 = vmatprep.subr.bf16.mxu0 0
    %645 = vmatpush1.bf16.xpose.msra.mxu0 %v545
    %646 = vmatprep.subr.bf16.mxu0 0
    %647 = vmatpush1.bf16.xpose.msra.mxu0 %v548
    %648 = vmatprep.mubr.bf16.mxu0 0
    %649 = vmatmul.mubr.bf16.gmra.mrb[0].mxu0 %v455
    %v650 = vpop.f32.mrb[0].mxu0
    %v651 = vadd.f32 %v216, %v650
    %v652 = vpop.f32.mrb[0].mxu0
    %v653 = vadd.f32 %v216, %v652
    %v654 = vpop.f32.mrb[0].mxu0
    %v655 = vadd.f32 %v221, %v654
    %v656 = vpop.f32.mrb[0].mxu0
    %v657 = vadd.f32 %v221, %v656
    %658 = vmatprep.mubr.bf16.mxu0 0
    %659 = vmatmul.mubr.bf16.gmra.mrb[0].mxu0 %v458
    %v660 = vpop.f32.mrb[0].mxu0
    %v661 = vadd.f32 %v226, %v660
    %v662 = vpop.f32.mrb[0].mxu0
    %v663 = vadd.f32 %v226, %v662
    %v664 = vpop.f32.mrb[0].mxu0
    %v665 = vadd.f32 %v231, %v664
    %v666 = vpop.f32.mrb[0].mxu0
    %v667 = vadd.f32 %v231, %v666
    %668 = vmatprep.mubr.bf16.mxu0 0
    %669 = vmatmul.mubr.bf16.gmra.mrb[0].mxu0 %v461
    %v670 = vpop.f32.mrb[0].mxu0
    %v671 = vadd.f32 %v236, %v670
    %v672 = vpop.f32.mrb[0].mxu0
    %v673 = vadd.f32 %v236, %v672
    %v674 = vpop.f32.mrb[0].mxu0
    %v675 = vadd.f32 %v241, %v674
    %v676 = vpop.f32.mrb[0].mxu0
    %v677 = vadd.f32 %v241, %v676
    %678 = vmatprep.mubr.bf16.mxu0 0
    %679 = vmatmul.mubr.bf16.gmra.mrb[0].mxu0 %v464
    %v680 = vpop.f32.mrb[0].mxu0
    %v681 = vadd.f32 %v246, %v680
    %v682 = vpop.f32.mrb[0].mxu0
    %v683 = vadd.f32 %v246, %v682
    %v684 = vpop.f32.mrb[0].mxu0
    %v685 = vadd.f32 %v251, %v684
    %v686 = vpop.f32.mrb[0].mxu0
    %v687 = vadd.f32 %v251, %v686
    %688 = vmatprep.mubr.bf16.mxu0 0
    %689 = vmatmul.mubr.bf16.gmra.mrb[0].mxu0 %v467
    %v690 = vpop.f32.mrb[0].mxu0
    %v691 = vadd.f32 %v256, %v690
    %v692 = vpop.f32.mrb[0].mxu0
    %v693 = vadd.f32 %v256, %v692
    %v694 = vpop.f32.mrb[0].mxu0
    %v695 = vadd.f32 %v261, %v694
    %v696 = vpop.f32.mrb[0].mxu0
    %v697 = vadd.f32 %v261, %v696
    %698 = vmatprep.mubr.bf16.mxu0 0
    %699 = vmatmul.mubr.bf16.gmra.mrb[0].mxu0 %v470
    %v700 = vpop.f32.mrb[0].mxu0
    %v701 = vadd.f32 %v266, %v700
    %v702 = vpop.f32.mrb[0].mxu0
    %v703 = vadd.f32 %v266, %v702
    %v704 = vpop.f32.mrb[0].mxu0
    %v705 = vadd.f32 %v271, %v704
    %v706 = vpop.f32.mrb[0].mxu0
    %v707 = vadd.f32 %v271, %v706
    %708 = vmatprep.mubr.bf16.mxu0 0
    %709 = vmatmul.mubr.bf16.gmra.mrb[0].mxu0 %v473
    %v710 = vpop.f32.mrb[0].mxu0
    %v711 = vadd.f32 %v276, %v710
    %v712 = vpop.f32.mrb[0].mxu0
    %v713 = vadd.f32 %v276, %v712
    %v714 = vpop.f32.mrb[0].mxu0
    %v715 = vadd.f32 %v281, %v714
    %v716 = vpop.f32.mrb[0].mxu0
    %v717 = vadd.f32 %v281, %v716
    %718 = vmatprep.mubr.bf16.mxu0 0
    %719 = vmatmul.mubr.bf16.gmra.mrb[0].mxu0 %v476
    %v720 = vpop.f32.mrb[0].mxu0
    %v721 = vadd.f32 %v286, %v720
    %v722 = vpop.f32.mrb[0].mxu0
    %v723 = vadd.f32 %v286, %v722
    %v724 = vpop.f32.mrb[0].mxu0
    %v725 = vadd.f32 %v291, %v724
    %v726 = vpop.f32.mrb[0].mxu0
    %v727 = vadd.f32 %v291, %v726
    %728 = vmatprep.mubr.bf16.mxu0 0
    %729 = vmatmul.mubr.bf16.gmra.mrb[0].mxu0 %v479
    %v730 = vpop.f32.mrb[0].mxu0
    %v731 = vadd.f32 %v296, %v730
    %v732 = vpop.f32.mrb[0].mxu0
    %v733 = vadd.f32 %v296, %v732
    %v734 = vpop.f32.mrb[0].mxu0
    %v735 = vadd.f32 %v301, %v734
    %v736 = vpop.f32.mrb[0].mxu0
    %v737 = vadd.f32 %v301, %v736
    %738 = vmatprep.mubr.bf16.mxu0 0
    %739 = vmatmul.mubr.bf16.gmra.mrb[0].mxu0 %v482
    %v740 = vpop.f32.mrb[0].mxu0
    %v741 = vadd.f32 %v306, %v740
    %v742 = vpop.f32.mrb[0].mxu0
    %v743 = vadd.f32 %v306, %v742
    %v744 = vpop.f32.mrb[0].mxu0
    %v745 = vadd.f32 %v311, %v744
    %v746 = vpop.f32.mrb[0].mxu0
    %v747 = vadd.f32 %v311, %v746
    %748 = vmatprep.mubr.bf16.mxu0 0
    %749 = vmatmul.mubr.bf16.gmra.mrb[0].mxu0 %v485
    %v750 = vpop.f32.mrb[0].mxu0
    %v751 = vadd.f32 %v316, %v750
    %v752 = vpop.f32.mrb[0].mxu0
    %v753 = vadd.f32 %v316, %v752
    %v754 = vpop.f32.mrb[0].mxu0
    %v755 = vadd.f32 %v321, %v754
    %v756 = vpop.f32.mrb[0].mxu0
    %v757 = vadd.f32 %v321, %v756
    %758 = vmatprep.mubr.bf16.mxu0 0
    %759 = vmatmul.mubr.bf16.gmra.mrb[0].mxu0 %v488
    %v760 = vpop.f32.mrb[0].mxu0
    %v761 = vadd.f32 %v326, %v760
    %v762 = vpop.f32.mrb[0].mxu0
    %v763 = vadd.f32 %v326, %v762
    %v764 = vpop.f32.mrb[0].mxu0
    %v765 = vadd.f32 %v331, %v764
    %v766 = vpop.f32.mrb[0].mxu0
    %v767 = vadd.f32 %v331, %v766
    %768 = vmatprep.mubr.bf16.mxu0 0
    %769 = vmatmul.mubr.bf16.gmra.mrb[0].mxu0 %v491
    %v770 = vpop.f32.mrb[0].mxu0
    %v771 = vadd.f32 %v336, %v770
    %v772 = vpop.f32.mrb[0].mxu0
    %v773 = vadd.f32 %v336, %v772
    %v774 = vpop.f32.mrb[0].mxu0
    %v775 = vadd.f32 %v341, %v774
    %v776 = vpop.f32.mrb[0].mxu0
    %v777 = vadd.f32 %v341, %v776
    %778 = vmatprep.mubr.bf16.mxu0 0
    %779 = vmatmul.mubr.bf16.gmra.mrb[0].mxu0 %v494
    %v780 = vpop.f32.mrb[0].mxu0
    %v781 = vadd.f32 %v346, %v780
    %v782 = vpop.f32.mrb[0].mxu0
    %v783 = vadd.f32 %v346, %v782
    %v784 = vpop.f32.mrb[0].mxu0
    %v785 = vadd.f32 %v351, %v784
    %v786 = vpop.f32.mrb[0].mxu0
    %v787 = vadd.f32 %v351, %v786
    %788 = vmatprep.mubr.bf16.mxu0 0
    %789 = vmatmul.mubr.bf16.gmra.mrb[0].mxu0 %v497
    %v790 = vpop.f32.mrb[0].mxu0
    %v791 = vadd.f32 %v356, %v790
    %v792 = vpop.f32.mrb[0].mxu0
    %v793 = vadd.f32 %v356, %v792
    %v794 = vpop.f32.mrb[0].mxu0
    %v795 = vadd.f32 %v361, %v794
    %v796 = vpop.f32.mrb[0].mxu0
    %v797 = vadd.f32 %v361, %v796
    %798 = vmatprep.mubr.bf16.mxu0 0
    %799 = vmatmul.mubr.bf16.gmra.mrb[0].mxu0 %v500
    %v800 = vpop.f32.mrb[0].mxu0
    %v801 = vadd.f32 %v366, %v800
    %v802 = vpop.f32.mrb[0].mxu0
    %v803 = vadd.f32 %v366, %v802
    %v804 = vpop.f32.mrb[0].mxu0
    %v805 = vadd.f32 %v371, %v804
    %v806 = vpop.f32.mrb[0].mxu0
    %v807 = vadd.f32 %v371, %v806
    %808 = vdwg.mxu0
    %809 = vmatprep.subr.bf16.mxu0 0
    %810 = vmatpush1.bf16.xpose.msra.mxu0 %v551
    %811 = vmatprep.subr.bf16.mxu0 0
    %812 = vmatpush1.bf16.xpose.msra.mxu0 %v554
    %813 = vmatprep.subr.bf16.mxu0 0
    %814 = vmatpush1.bf16.xpose.msra.mxu0 %v557
    %815 = vmatprep.subr.bf16.mxu0 0
    %816 = vmatpush1.bf16.xpose.msra.mxu0 %v560
    %817 = vmatprep.subr.bf16.mxu0 0
    %818 = vmatpush1.bf16.xpose.msra.mxu0 %v563
    %819 = vmatprep.subr.bf16.mxu0 0
    %820 = vmatpush1.bf16.xpose.msra.mxu0 %v566
    %821 = vmatprep.subr.bf16.mxu0 0
    %822 = vmatpush1.bf16.xpose.msra.mxu0 %v569
    %823 = vmatprep.subr.bf16.mxu0 0
    %824 = vmatpush1.bf16.xpose.msra.mxu0 %v572
    %825 = vmatprep.subr.bf16.mxu0 0
    %826 = vmatpush1.bf16.xpose.msra.mxu0 %v575
    %827 = vmatprep.subr.bf16.mxu0 0
    %828 = vmatpush1.bf16.xpose.msra.mxu0 %v578
    %829 = vmatprep.subr.bf16.mxu0 0
    %830 = vmatpush1.bf16.xpose.msra.mxu0 %v581
    %831 = vmatprep.subr.bf16.mxu0 0
    %832 = vmatpush1.bf16.xpose.msra.mxu0 %v584
    %833 = vmatprep.subr.bf16.mxu0 0
    %834 = vmatpush1.bf16.xpose.msra.mxu0 %v587
    %835 = vmatprep.subr.bf16.mxu0 0
    %836 = vmatpush1.bf16.xpose.msra.mxu0 %v590
    %837 = vmatprep.subr.bf16.mxu0 0
    %838 = vmatpush1.bf16.xpose.msra.mxu0 %v593
    %839 = vmatprep.subr.bf16.mxu0 0
    %840 = vmatpush1.bf16.xpose.msra.mxu0 %v596
    %841 = vmatprep.mubr.bf16.mxu0 0
    %842 = vmatmul.mubr.bf16.gmra.mrb[0].mxu0 %v455
    %v843 = vpop.f32.mrb[0].mxu0
    %v844 = vadd.f32 %v216, %v843
    %v845 = vpop.f32.mrb[0].mxu0
    %v846 = vadd.f32 %v216, %v845
    %v847 = vpop.f32.mrb[0].mxu0
    %v848 = vadd.f32 %v221, %v847
    %v849 = vpop.f32.mrb[0].mxu0
    %v850 = vadd.f32 %v221, %v849
    %851 = vmatprep.mubr.bf16.mxu0 0
    %852 = vmatmul.mubr.bf16.gmra.mrb[0].mxu0 %v458
    %v853 = vpop.f32.mrb[0].mxu0
    %v854 = vadd.f32 %v226, %v853
    %v855 = vpop.f32.mrb[0].mxu0
    %v856 = vadd.f32 %v226, %v855
    %v857 = vpop.f32.mrb[0].mxu0
    %v858 = vadd.f32 %v231, %v857
    %v859 = vpop.f32.mrb[0].mxu0
    %v860 = vadd.f32 %v231, %v859
    %861 = vmatprep.mubr.bf16.mxu0 0
    %862 = vmatmul.mubr.bf16.gmra.mrb[0].mxu0 %v461
    %v863 = vpop.f32.mrb[0].mxu0
    %v864 = vadd.f32 %v236, %v863
    %v865 = vpop.f32.mrb[0].mxu0
    %v866 = vadd.f32 %v236, %v865
    %v867 = vpop.f32.mrb[0].mxu0
    %v868 = vadd.f32 %v241, %v867
    %v869 = vpop.f32.mrb[0].mxu0
    %v870 = vadd.f32 %v241, %v869
    %871 = vmatprep.mubr.bf16.mxu0 0
    %872 = vmatmul.mubr.bf16.gmra.mrb[0].mxu0 %v464
    %v873 = vpop.f32.mrb[0].mxu0
    %v874 = vadd.f32 %v246, %v873
    %v875 = vpop.f32.mrb[0].mxu0
    %v876 = vadd.f32 %v246, %v875
    %v877 = vpop.f32.mrb[0].mxu0
    %v878 = vadd.f32 %v251, %v877
    %v879 = vpop.f32.mrb[0].mxu0
    %v880 = vadd.f32 %v251, %v879
    %881 = vmatprep.mubr.bf16.mxu0 0
    %882 = vmatmul.mubr.bf16.gmra.mrb[0].mxu0 %v467
    %v883 = vpop.f32.mrb[0].mxu0
    %v884 = vadd.f32 %v256, %v883
    %v885 = vpop.f32.mrb[0].mxu0
    %v886 = vadd.f32 %v256, %v885
    %v887 = vpop.f32.mrb[0].mxu0
    %v888 = vadd.f32 %v261, %v887
    %v889 = vpop.f32.mrb[0].mxu0
    %v890 = vadd.f32 %v261, %v889
    %891 = vmatprep.mubr.bf16.mxu0 0
    %892 = vmatmul.mubr.bf16.gmra.mrb[0].mxu0 %v470
    %v893 = vpop.f32.mrb[0].mxu0
    %v894 = vadd.f32 %v266, %v893
    %v895 = vpop.f32.mrb[0].mxu0
    %v896 = vadd.f32 %v266, %v895
    %v897 = vpop.f32.mrb[0].mxu0
    %v898 = vadd.f32 %v271, %v897
    %v899 = vpop.f32.mrb[0].mxu0
    %v900 = vadd.f32 %v271, %v899
    %901 = vmatprep.mubr.bf16.mxu0 0
    %902 = vmatmul.mubr.bf16.gmra.mrb[0].mxu0 %v473
    %v903 = vpop.f32.mrb[0].mxu0
    %v904 = vadd.f32 %v276, %v903
    %v905 = vpop.f32.mrb[0].mxu0
    %v906 = vadd.f32 %v276, %v905
    %v907 = vpop.f32.mrb[0].mxu0
    %v908 = vadd.f32 %v281, %v907
    %v909 = vpop.f32.mrb[0].mxu0
    %v910 = vadd.f32 %v281, %v909
    %911 = vmatprep.mubr.bf16.mxu0 0
    %912 = vmatmul.mubr.bf16.gmra.mrb[0].mxu0 %v476
    %v913 = vpop.f32.mrb[0].mxu0
    %v914 = vadd.f32 %v286, %v913
    %v915 = vpop.f32.mrb[0].mxu0
    %v916 = vadd.f32 %v286, %v915
    %v917 = vpop.f32.mrb[0].mxu0
    %v918 = vadd.f32 %v291, %v917
    %v919 = vpop.f32.mrb[0].mxu0
    %v920 = vadd.f32 %v291, %v919
    %921 = vmatprep.mubr.bf16.mxu0 0
    %922 = vmatmul.mubr.bf16.gmra.mrb[0].mxu0 %v479
    %v923 = vpop.f32.mrb[0].mxu0
    %v924 = vadd.f32 %v296, %v923
    %v925 = vpop.f32.mrb[0].mxu0
    %v926 = vadd.f32 %v296, %v925
    %v927 = vpop.f32.mrb[0].mxu0
    %v928 = vadd.f32 %v301, %v927
    %v929 = vpop.f32.mrb[0].mxu0
    %v930 = vadd.f32 %v301, %v929
    %931 = vmatprep.mubr.bf16.mxu0 0
    %932 = vmatmul.mubr.bf16.gmra.mrb[0].mxu0 %v482
    %v933 = vpop.f32.mrb[0].mxu0
    %v934 = vadd.f32 %v306, %v933
    %v935 = vpop.f32.mrb[0].mxu0
    %v936 = vadd.f32 %v306, %v935
    %v937 = vpop.f32.mrb[0].mxu0
    %v938 = vadd.f32 %v311, %v937
    %v939 = vpop.f32.mrb[0].mxu0
    %v940 = vadd.f32 %v311, %v939
    %941 = vmatprep.mubr.bf16.mxu0 0
    %942 = vmatmul.mubr.bf16.gmra.mrb[0].mxu0 %v485
    %v943 = vpop.f32.mrb[0].mxu0
    %v944 = vadd.f32 %v316, %v943
    %v945 = vpop.f32.mrb[0].mxu0
    %v946 = vadd.f32 %v316, %v945
    %v947 = vpop.f32.mrb[0].mxu0
    %v948 = vadd.f32 %v321, %v947
    %v949 = vpop.f32.mrb[0].mxu0
    %v950 = vadd.f32 %v321, %v949
    %951 = vmatprep.mubr.bf16.mxu0 0
    %952 = vmatmul.mubr.bf16.gmra.mrb[0].mxu0 %v488
    %v953 = vpop.f32.mrb[0].mxu0
    %v954 = vadd.f32 %v326, %v953
    %v955 = vpop.f32.mrb[0].mxu0
    %v956 = vadd.f32 %v326, %v955
    %v957 = vpop.f32.mrb[0].mxu0
    %v958 = vadd.f32 %v331, %v957
    %v959 = vpop.f32.mrb[0].mxu0
    %v960 = vadd.f32 %v331, %v959
    %961 = vmatprep.mubr.bf16.mxu0 0
    %962 = vmatmul.mubr.bf16.gmra.mrb[0].mxu0 %v491
    %v963 = vpop.f32.mrb[0].mxu0
    %v964 = vadd.f32 %v336, %v963
    %v965 = vpop.f32.mrb[0].mxu0
    %v966 = vadd.f32 %v336, %v965
    %v967 = vpop.f32.mrb[0].mxu0
    %v968 = vadd.f32 %v341, %v967
    %v969 = vpop.f32.mrb[0].mxu0
    %v970 = vadd.f32 %v341, %v969
    %971 = vmatprep.mubr.bf16.mxu0 0
    %972 = vmatmul.mubr.bf16.gmra.mrb[0].mxu0 %v494
    %v973 = vpop.f32.mrb[0].mxu0
    %v974 = vadd.f32 %v346, %v973
    %v975 = vpop.f32.mrb[0].mxu0
    %v976 = vadd.f32 %v346, %v975
    %v977 = vpop.f32.mrb[0].mxu0
    %v978 = vadd.f32 %v351, %v977
    %v979 = vpop.f32.mrb[0].mxu0
    %v980 = vadd.f32 %v351, %v979
    %981 = vmatprep.mubr.bf16.mxu0 0
    %982 = vmatmul.mubr.bf16.gmra.mrb[0].mxu0 %v497
    %v983 = vpop.f32.mrb[0].mxu0
    %v984 = vadd.f32 %v356, %v983
    %v985 = vpop.f32.mrb[0].mxu0
    %v986 = vadd.f32 %v356, %v985
    %v987 = vpop.f32.mrb[0].mxu0
    %v988 = vadd.f32 %v361, %v987
    %v989 = vpop.f32.mrb[0].mxu0
    %v990 = vadd.f32 %v361, %v989
    %991 = vmatprep.mubr.bf16.mxu0 0
    %992 = vmatmul.mubr.bf16.gmra.mrb[0].mxu0 %v500
    %v993 = vpop.f32.mrb[0].mxu0
    %v994 = vadd.f32 %v366, %v993
    %v995 = vpop.f32.mrb[0].mxu0
    %v996 = vadd.f32 %v366, %v995
    %v997 = vpop.f32.mrb[0].mxu0
    %v998 = vadd.f32 %v371, %v997
    %v999 = vpop.f32.mrb[0].mxu0
    %v1000 = vadd.f32 %v371, %v999
    %1001 = vdwg.mxu0
    %1002 = vmatprep.subr.bf16.mxu0 0
    %1003 = vmatpush1.bf16.xpose.msra.mxu0 %v599
    %1004 = vmatprep.subr.bf16.mxu0 0
    %1005 = vmatpush1.bf16.xpose.msra.mxu0 %v602
    %1006 = vmatprep.subr.bf16.mxu0 0
    %1007 = vmatpush1.bf16.xpose.msra.mxu0 %v605
    %1008 = vmatprep.subr.bf16.mxu0 0
    %1009 = vmatpush1.bf16.xpose.msra.mxu0 %v608
    %1010 = vmatprep.subr.bf16.mxu0 0
    %1011 = vmatpush1.bf16.xpose.msra.mxu0 %v611
    %1012 = vmatprep.subr.bf16.mxu0 0
    %1013 = vmatpush1.bf16.xpose.msra.mxu0 %v614
    %1014 = vmatprep.subr.bf16.mxu0 0
    %1015 = vmatpush1.bf16.xpose.msra.mxu0 0
    %1016 = vmatprep.subr.bf16.mxu0 0
    %1017 = vmatpush1.bf16.xpose.msra.mxu0 0
    %1018 = vmatprep.subr.bf16.mxu0 0
    %1019 = vmatpush1.bf16.xpose.msra.mxu0 0
    %1020 = vmatprep.subr.bf16.mxu0 0
    %1021 = vmatpush1.bf16.xpose.msra.mxu0 0
    %1022 = vmatprep.subr.bf16.mxu0 0
    %1023 = vmatpush1.bf16.xpose.msra.mxu0 0
    %1024 = vmatprep.subr.bf16.mxu0 0
    %1025 = vmatpush1.bf16.xpose.msra.mxu0 0
    %1026 = vmatprep.subr.bf16.mxu0 0
    %1027 = vmatpush1.bf16.xpose.msra.mxu0 0
    %1028 = vmatprep.subr.bf16.mxu0 0
    %1029 = vmatpush1.bf16.xpose.msra.mxu0 0
    %1030 = vmatprep.subr.bf16.mxu0 0
    %1031 = vmatpush1.bf16.xpose.msra.mxu0 0
    %1032 = vmatprep.subr.bf16.mxu0 0
    %1033 = vmatpush1.bf16.xpose.msra.mxu0 0
    %1034 = vmatprep.mubr.bf16.mxu0 0
    %1035 = vmatmul.mubr.bf16.gmra.mrb[0].mxu0 %v455
    %v1036 = vpop.f32.mrb[0].mxu0
    %v1037 = vadd.f32 %v216, %v1036
    %v1038 = vpop.f32.mrb[0].mxu0
    %v1039 = vpop.f32.mrb[0].mxu0
    %v1040 = vadd.f32 %v221, %v1039
    %v1041 = vpop.f32.mrb[0].mxu0
    %1042 = vmatprep.mubr.bf16.mxu0 0
    %1043 = vmatmul.mubr.bf16.gmra.mrb[0].mxu0 %v458
    %v1044 = vpop.f32.mrb[0].mxu0
    %v1045 = vadd.f32 %v226, %v1044
    %v1046 = vpop.f32.mrb[0].mxu0
    %v1047 = vpop.f32.mrb[0].mxu0
    %v1048 = vadd.f32 %v231, %v1047
    %v1049 = vpop.f32.mrb[0].mxu0
    %1050 = vmatprep.mubr.bf16.mxu0 0
    %1051 = vmatmul.mubr.bf16.gmra.mrb[0].mxu0 %v461
    %v1052 = vpop.f32.mrb[0].mxu0
    %v1053 = vadd.f32 %v236, %v1052
    %v1054 = vpop.f32.mrb[0].mxu0
    %v1055 = vpop.f32.mrb[0].mxu0
    %v1056 = vadd.f32 %v241, %v1055
    %v1057 = vpop.f32.mrb[0].mxu0
    %1058 = vmatprep.mubr.bf16.mxu0 0
    %1059 = vmatmul.mubr.bf16.gmra.mrb[0].mxu0 %v464
    %v1060 = vpop.f32.mrb[0].mxu0
    %v1061 = vadd.f32 %v246, %v1060
    %v1062 = vpop.f32.mrb[0].mxu0
    %v1063 = vpop.f32.mrb[0].mxu0
    %v1064 = vadd.f32 %v251, %v1063
    %v1065 = vpop.f32.mrb[0].mxu0
    %1066 = vmatprep.mubr.bf16.mxu0 0
    %1067 = vmatmul.mubr.bf16.gmra.mrb[0].mxu0 %v467
    %v1068 = vpop.f32.mrb[0].mxu0
    %v1069 = vadd.f32 %v256, %v1068
    %v1070 = vpop.f32.mrb[0].mxu0
    %v1071 = vpop.f32.mrb[0].mxu0
    %v1072 = vadd.f32 %v261, %v1071
    %v1073 = vpop.f32.mrb[0].mxu0
    %1074 = vmatprep.mubr.bf16.mxu0 0
    %1075 = vmatmul.mubr.bf16.gmra.mrb[0].mxu0 %v470
    %v1076 = vpop.f32.mrb[0].mxu0
    %v1077 = vadd.f32 %v266, %v1076
    %v1078 = vpop.f32.mrb[0].mxu0
    %v1079 = vpop.f32.mrb[0].mxu0
    %v1080 = vadd.f32 %v271, %v1079
    %v1081 = vpop.f32.mrb[0].mxu0
    %1082 = vmatprep.mubr.bf16.mxu0 0
    %1083 = vmatmul.mubr.bf16.gmra.mrb[0].mxu0 %v473
    %v1084 = vpop.f32.mrb[0].mxu0
    %v1085 = vadd.f32 %v276, %v1084
    %v1086 = vpop.f32.mrb[0].mxu0
    %v1087 = vpop.f32.mrb[0].mxu0
    %v1088 = vadd.f32 %v281, %v1087
    %v1089 = vpop.f32.mrb[0].mxu0
    %1090 = vmatprep.mubr.bf16.mxu0 0
    %1091 = vmatmul.mubr.bf16.gmra.mrb[0].mxu0 %v476
    %v1092 = vpop.f32.mrb[0].mxu0
    %v1093 = vadd.f32 %v286, %v1092
    %v1094 = vpop.f32.mrb[0].mxu0
    %v1095 = vpop.f32.mrb[0].mxu0
    %v1096 = vadd.f32 %v291, %v1095
    %v1097 = vpop.f32.mrb[0].mxu0
    %1098 = vmatprep.mubr.bf16.mxu0 0
    %1099 = vmatmul.mubr.bf16.gmra.mrb[0].mxu0 %v479
    %v1100 = vpop.f32.mrb[0].mxu0
    %v1101 = vadd.f32 %v296, %v1100
    %v1102 = vpop.f32.mrb[0].mxu0
    %v1103 = vpop.f32.mrb[0].mxu0
    %v1104 = vadd.f32 %v301, %v1103
    %v1105 = vpop.f32.mrb[0].mxu0
    %1106 = vmatprep.mubr.bf16.mxu0 0
    %1107 = vmatmul.mubr.bf16.gmra.mrb[0].mxu0 %v482
    %v1108 = vpop.f32.mrb[0].mxu0
    %v1109 = vadd.f32 %v306, %v1108
    %v1110 = vpop.f32.mrb[0].mxu0
    %v1111 = vpop.f32.mrb[0].mxu0
    %v1112 = vadd.f32 %v311, %v1111
    %v1113 = vpop.f32.mrb[0].mxu0
    %1114 = vmatprep.mubr.bf16.mxu0 0
    %1115 = vmatmul.mubr.bf16.gmra.mrb[0].mxu0 %v485
    %v1116 = vpop.f32.mrb[0].mxu0
    %v1117 = vadd.f32 %v316, %v1116
    %v1118 = vpop.f32.mrb[0].mxu0
    %v1119 = vpop.f32.mrb[0].mxu0
    %v1120 = vadd.f32 %v321, %v1119
    %v1121 = vpop.f32.mrb[0].mxu0
    %1122 = vmatprep.mubr.bf16.mxu0 0
    %1123 = vmatmul.mubr.bf16.gmra.mrb[0].mxu0 %v488
    %v1124 = vpop.f32.mrb[0].mxu0
    %v1125 = vadd.f32 %v326, %v1124
    %v1126 = vpop.f32.mrb[0].mxu0
    %v1127 = vpop.f32.mrb[0].mxu0
    %v1128 = vadd.f32 %v331, %v1127
    %v1129 = vpop.f32.mrb[0].mxu0
    %1130 = vmatprep.mubr.bf16.mxu0 0
    %1131 = vmatmul.mubr.bf16.gmra.mrb[0].mxu0 %v491
    %v1132 = vpop.f32.mrb[0].mxu0
    %v1133 = vadd.f32 %v336, %v1132
    %v1134 = vpop.f32.mrb[0].mxu0
    %v1135 = vpop.f32.mrb[0].mxu0
    %v1136 = vadd.f32 %v341, %v1135
    %v1137 = vpop.f32.mrb[0].mxu0
    %1138 = vmatprep.mubr.bf16.mxu0 0
    %1139 = vmatmul.mubr.bf16.gmra.mrb[0].mxu0 %v494
    %v1140 = vpop.f32.mrb[0].mxu0
    %v1141 = vadd.f32 %v346, %v1140
    %v1142 = vpop.f32.mrb[0].mxu0
    %v1143 = vpop.f32.mrb[0].mxu0
    %v1144 = vadd.f32 %v351, %v1143
    %v1145 = vpop.f32.mrb[0].mxu0
    %1146 = vmatprep.mubr.bf16.mxu0 0
    %1147 = vmatmul.mubr.bf16.gmra.mrb[0].mxu0 %v497
    %v1148 = vpop.f32.mrb[0].mxu0
    %v1149 = vadd.f32 %v356, %v1148
    %v1150 = vpop.f32.mrb[0].mxu0
    %v1151 = vpop.f32.mrb[0].mxu0
    %v1152 = vadd.f32 %v361, %v1151
    %v1153 = vpop.f32.mrb[0].mxu0
    %1154 = vmatprep.mubr.bf16.mxu0 0
    %1155 = vmatmul.mubr.bf16.gmra.mrb[0].mxu0 %v500
    %v1156 = vpop.f32.mrb[0].mxu0
    %v1157 = vadd.f32 %v366, %v1156
    %v1158 = vpop.f32.mrb[0].mxu0
    %v1159 = vpop.f32.mrb[0].mxu0
    %v1160 = vadd.f32 %v371, %v1159
    %v1161 = vpop.f32.mrb[0].mxu0
    %1162 = vdwg.mxu0
    %v1163 = vmax.f32 %v651, 0.0
    %v1164 = vmax.f32 %v653, 0.0
    %v1165 = vmax.f32 %v844, 0.0
    %v1166 = vmax.f32 %v846, 0.0
    %v1167 = vmax.f32 %v1037, 0.0
    %v1168 = vmax.f32 %v655, 0.0
    %v1169 = vmax.f32 %v657, 0.0
    %v1170 = vmax.f32 %v848, 0.0
    %v1171 = vmax.f32 %v850, 0.0
    %v1172 = vmax.f32 %v1040, 0.0
    %v1173 = vmax.f32 %v661, 0.0
    %v1174 = vmax.f32 %v663, 0.0
    %v1175 = vmax.f32 %v854, 0.0
    %v1176 = vmax.f32 %v856, 0.0
    %v1177 = vmax.f32 %v1045, 0.0
    %v1178 = vmax.f32 %v665, 0.0
    %v1179 = vmax.f32 %v667, 0.0
    %v1180 = vmax.f32 %v858, 0.0
    %v1181 = vmax.f32 %v860, 0.0
    %v1182 = vmax.f32 %v1048, 0.0
    %v1183 = vmax.f32 %v671, 0.0
    %v1184 = vmax.f32 %v673, 0.0
    %v1185 = vmax.f32 %v864, 0.0
    %v1186 = vmax.f32 %v866, 0.0
    %v1187 = vmax.f32 %v1053, 0.0
    %v1188 = vmax.f32 %v675, 0.0
    %v1189 = vmax.f32 %v677, 0.0
    %v1190 = vmax.f32 %v868, 0.0
    %v1191 = vmax.f32 %v870, 0.0
    %v1192 = vmax.f32 %v1056, 0.0
    %v1193 = vmax.f32 %v681, 0.0
    %v1194 = vmax.f32 %v683, 0.0
    %v1195 = vmax.f32 %v874, 0.0
    %v1196 = vmax.f32 %v876, 0.0
    %v1197 = vmax.f32 %v1061, 0.0
    %v1198 = vmax.f32 %v685, 0.0
    %v1199 = vmax.f32 %v687, 0.0
    %v1200 = vmax.f32 %v878, 0.0
    %v1201 = vmax.f32 %v880, 0.0
    %v1202 = vmax.f32 %v1064, 0.0
    %v1203 = vmax.f32 %v691, 0.0
    %v1204 = vmax.f32 %v693, 0.0
    %v1205 = vmax.f32 %v884, 0.0
    %v1206 = vmax.f32 %v886, 0.0
    %v1207 = vmax.f32 %v1069, 0.0
    %v1208 = vmax.f32 %v695, 0.0
    %v1209 = vmax.f32 %v697, 0.0
    %v1210 = vmax.f32 %v888, 0.0
    %v1211 = vmax.f32 %v890, 0.0
    %v1212 = vmax.f32 %v1072, 0.0
    %v1213 = vmax.f32 %v701, 0.0
    %v1214 = vmax.f32 %v703, 0.0
    %v1215 = vmax.f32 %v894, 0.0
    %v1216 = vmax.f32 %v896, 0.0
    %v1217 = vmax.f32 %v1077, 0.0
    %v1218 = vmax.f32 %v705, 0.0
    %v1219 = vmax.f32 %v707, 0.0
    %v1220 = vmax.f32 %v898, 0.0
    %v1221 = vmax.f32 %v900, 0.0
    %v1222 = vmax.f32 %v1080, 0.0
    %v1223 = vmax.f32 %v711, 0.0
    %v1224 = vmax.f32 %v713, 0.0
    %v1225 = vmax.f32 %v904, 0.0
    %v1226 = vmax.f32 %v906, 0.0
    %v1227 = vmax.f32 %v1085, 0.0
    %v1228 = vmax.f32 %v715, 0.0
    %v1229 = vmax.f32 %v717, 0.0
    %v1230 = vmax.f32 %v908, 0.0
    %v1231 = vmax.f32 %v910, 0.0
    %v1232 = vmax.f32 %v1088, 0.0
    %v1233 = vmax.f32 %v721, 0.0
    %v1234 = vmax.f32 %v723, 0.0
    %v1235 = vmax.f32 %v914, 0.0
    %v1236 = vmax.f32 %v916, 0.0
    %v1237 = vmax.f32 %v1093, 0.0
    %v1238 = vmax.f32 %v725, 0.0
    %v1239 = vmax.f32 %v727, 0.0
    %v1240 = vmax.f32 %v918, 0.0
    %v1241 = vmax.f32 %v920, 0.0
    %v1242 = vmax.f32 %v1096, 0.0
    %v1243 = vmax.f32 %v731, 0.0
    %v1244 = vmax.f32 %v733, 0.0
    %v1245 = vmax.f32 %v924, 0.0
    %v1246 = vmax.f32 %v926, 0.0
    %v1247 = vmax.f32 %v1101, 0.0
    %v1248 = vmax.f32 %v735, 0.0
    %v1249 = vmax.f32 %v737, 0.0
    %v1250 = vmax.f32 %v928, 0.0
    %v1251 = vmax.f32 %v930, 0.0
    %v1252 = vmax.f32 %v1104, 0.0
    %v1253 = vmax.f32 %v741, 0.0
    %v1254 = vmax.f32 %v743, 0.0
    %v1255 = vmax.f32 %v934, 0.0
    %v1256 = vmax.f32 %v936, 0.0
    %v1257 = vmax.f32 %v1109, 0.0
    %v1258 = vmax.f32 %v745, 0.0
    %v1259 = vmax.f32 %v747, 0.0
    %v1260 = vmax.f32 %v938, 0.0
    %v1261 = vmax.f32 %v940, 0.0
    %v1262 = vmax.f32 %v1112, 0.0
    %v1263 = vmax.f32 %v751, 0.0
    %v1264 = vmax.f32 %v753, 0.0
    %v1265 = vmax.f32 %v944, 0.0
    %v1266 = vmax.f32 %v946, 0.0
    %v1267 = vmax.f32 %v1117, 0.0
    %v1268 = vmax.f32 %v755, 0.0
    %v1269 = vmax.f32 %v757, 0.0
    %v1270 = vmax.f32 %v948, 0.0
    %v1271 = vmax.f32 %v950, 0.0
    %v1272 = vmax.f32 %v1120, 0.0
    %v1273 = vmax.f32 %v761, 0.0
    %v1274 = vmax.f32 %v763, 0.0
    %v1275 = vmax.f32 %v954, 0.0
    %v1276 = vmax.f32 %v956, 0.0
    %v1277 = vmax.f32 %v1125, 0.0
    %v1278 = vmax.f32 %v765, 0.0
    %v1279 = vmax.f32 %v767, 0.0
    %v1280 = vmax.f32 %v958, 0.0
    %v1281 = vmax.f32 %v960, 0.0
    %v1282 = vmax.f32 %v1128, 0.0
    %v1283 = vmax.f32 %v771, 0.0
    %v1284 = vmax.f32 %v773, 0.0
    %v1285 = vmax.f32 %v964, 0.0
    %v1286 = vmax.f32 %v966, 0.0
    %v1287 = vmax.f32 %v1133, 0.0
    %v1288 = vmax.f32 %v775, 0.0
    %v1289 = vmax.f32 %v777, 0.0
    %v1290 = vmax.f32 %v968, 0.0
    %v1291 = vmax.f32 %v970, 0.0
    %v1292 = vmax.f32 %v1136, 0.0
    %v1293 = vmax.f32 %v781, 0.0
    %v1294 = vmax.f32 %v783, 0.0
    %v1295 = vmax.f32 %v974, 0.0
    %v1296 = vmax.f32 %v976, 0.0
    %v1297 = vmax.f32 %v1141, 0.0
    %v1298 = vmax.f32 %v785, 0.0
    %v1299 = vmax.f32 %v787, 0.0
    %v1300 = vmax.f32 %v978, 0.0
    %v1301 = vmax.f32 %v980, 0.0
    %v1302 = vmax.f32 %v1144, 0.0
    %v1303 = vmax.f32 %v791, 0.0
    %v1304 = vmax.f32 %v793, 0.0
    %v1305 = vmax.f32 %v984, 0.0
    %v1306 = vmax.f32 %v986, 0.0
    %v1307 = vmax.f32 %v1149, 0.0
    %v1308 = vmax.f32 %v795, 0.0
    %v1309 = vmax.f32 %v797, 0.0
    %v1310 = vmax.f32 %v988, 0.0
    %v1311 = vmax.f32 %v990, 0.0
    %v1312 = vmax.f32 %v1152, 0.0
    %v1313 = vmax.f32 %v801, 0.0
    %v1314 = vmax.f32 %v803, 0.0
    %v1315 = vmax.f32 %v994, 0.0
    %v1316 = vmax.f32 %v996, 0.0
    %v1317 = vmax.f32 %v1157, 0.0
    %v1318 = vmax.f32 %v805, 0.0
    %v1319 = vmax.f32 %v807, 0.0
    %v1320 = vmax.f32 %v998, 0.0
    %v1321 = vmax.f32 %v1000, 0.0
    %v1322 = vmax.f32 %v1160, 0.0
    %v1323 = vld [vmem:[%s3] sm:$0xff]
    %v1324 = vld [vmem:[%s3 + $0x8] sm:$0xff]
    %v1325 = vld [vmem:[%s3 + $0x10] sm:$0xff]
    %v1326 = vld [vmem:[%s3 + $0x18] sm:$0xff]
    %v1327 = vld [vmem:[%s3 + $0x20] sm:$0xff]
    %v1328 = vld [vmem:[%s3 + $0x28] sm:$0xff]
    %v1329 = vld [vmem:[%s3 + $0x30] sm:$0xff]
    %v1330 = vld [vmem:[%s3 + $0x38] sm:$0xff]
    %v1331 = vld [vmem:[%s3 + $0x40] sm:$0xff]
    %v1332 = vld [vmem:[%s3 + $0x48] sm:$0xff]
    %v1333 = vld [vmem:[%s3 + $0x50] sm:$0xff]
    %v1334 = vld [vmem:[%s3 + $0x58] sm:$0xff]
    %v1335 = vld [vmem:[%s3 + $0x60] sm:$0xff]
    %v1336 = vld [vmem:[%s3 + $0x68] sm:$0xff]
    %v1337 = vld [vmem:[%s3 + $0x70] sm:$0xff]
    %v1338 = vld [vmem:[%s3 + $0x78] sm:$0xff]
    %v1339 = vpack.c.bf16 %v1168, %v1163
    %v1340 = vpack.c.bf16 %v1169, %v1164
    %v1341 = vpack.c.bf16 %v1170, %v1165
    %v1342 = vpack.c.bf16 %v1171, %v1166
    %v1343 = vpack.c.bf16 %v1172, %v1167
    %v1344 = vpack.c.bf16 %v1178, %v1173
    %v1345 = vpack.c.bf16 %v1179, %v1174
    %v1346 = vpack.c.bf16 %v1180, %v1175
    %v1347 = vpack.c.bf16 %v1181, %v1176
    %v1348 = vpack.c.bf16 %v1182, %v1177
    %v1349 = vpack.c.bf16 %v1188, %v1183
    %v1350 = vpack.c.bf16 %v1189, %v1184
    %v1351 = vpack.c.bf16 %v1190, %v1185
    %v1352 = vpack.c.bf16 %v1191, %v1186
    %v1353 = vpack.c.bf16 %v1192, %v1187
    %v1354 = vpack.c.bf16 %v1198, %v1193
    %v1355 = vpack.c.bf16 %v1199, %v1194
    %v1356 = vpack.c.bf16 %v1200, %v1195
    %v1357 = vpack.c.bf16 %v1201, %v1196
    %v1358 = vpack.c.bf16 %v1202, %v1197
    %v1359 = vpack.c.bf16 %v1208, %v1203
    %v1360 = vpack.c.bf16 %v1209, %v1204
    %v1361 = vpack.c.bf16 %v1210, %v1205
    %v1362 = vpack.c.bf16 %v1211, %v1206
    %v1363 = vpack.c.bf16 %v1212, %v1207
    %v1364 = vpack.c.bf16 %v1218, %v1213
    %v1365 = vpack.c.bf16 %v1219, %v1214
    %v1366 = vpack.c.bf16 %v1220, %v1215
    %v1367 = vpack.c.bf16 %v1221, %v1216
    %v1368 = vpack.c.bf16 %v1222, %v1217
    %v1369 = vpack.c.bf16 %v1228, %v1223
    %v1370 = vpack.c.bf16 %v1229, %v1224
    %v1371 = vpack.c.bf16 %v1230, %v1225
    %v1372 = vpack.c.bf16 %v1231, %v1226
    %v1373 = vpack.c.bf16 %v1232, %v1227
    %v1374 = vpack.c.bf16 %v1238, %v1233
    %v1375 = vpack.c.bf16 %v1239, %v1234
    %v1376 = vpack.c.bf16 %v1240, %v1235
    %v1377 = vpack.c.bf16 %v1241, %v1236
    %v1378 = vpack.c.bf16 %v1242, %v1237
    %v1379 = vpack.c.bf16 %v1248, %v1243
    %v1380 = vpack.c.bf16 %v1249, %v1244
    %v1381 = vpack.c.bf16 %v1250, %v1245
    %v1382 = vpack.c.bf16 %v1251, %v1246
    %v1383 = vpack.c.bf16 %v1252, %v1247
    %v1384 = vpack.c.bf16 %v1258, %v1253
    %v1385 = vpack.c.bf16 %v1259, %v1254
    %v1386 = vpack.c.bf16 %v1260, %v1255
    %v1387 = vpack.c.bf16 %v1261, %v1256
    %v1388 = vpack.c.bf16 %v1262, %v1257
    %v1389 = vpack.c.bf16 %v1268, %v1263
    %v1390 = vpack.c.bf16 %v1269, %v1264
    %v1391 = vpack.c.bf16 %v1270, %v1265
    %v1392 = vpack.c.bf16 %v1271, %v1266
    %v1393 = vpack.c.bf16 %v1272, %v1267
    %v1394 = vpack.c.bf16 %v1278, %v1273
    %v1395 = vpack.c.bf16 %v1279, %v1274
    %v1396 = vpack.c.bf16 %v1280, %v1275
    %v1397 = vpack.c.bf16 %v1281, %v1276
    %v1398 = vpack.c.bf16 %v1282, %v1277
    %v1399 = vpack.c.bf16 %v1288, %v1283
    %v1400 = vpack.c.bf16 %v1289, %v1284
    %v1401 = vpack.c.bf16 %v1290, %v1285
    %v1402 = vpack.c.bf16 %v1291, %v1286
    %v1403 = vpack.c.bf16 %v1292, %v1287
    %v1404 = vpack.c.bf16 %v1298, %v1293
    %v1405 = vpack.c.bf16 %v1299, %v1294
    %v1406 = vpack.c.bf16 %v1300, %v1295
    %v1407 = vpack.c.bf16 %v1301, %v1296
    %v1408 = vpack.c.bf16 %v1302, %v1297
    %v1409 = vpack.c.bf16 %v1308, %v1303
    %v1410 = vpack.c.bf16 %v1309, %v1304
    %v1411 = vpack.c.bf16 %v1310, %v1305
    %v1412 = vpack.c.bf16 %v1311, %v1306
    %v1413 = vpack.c.bf16 %v1312, %v1307
    %v1414 = vpack.c.bf16 %v1318, %v1313
    %v1415 = vpack.c.bf16 %v1319, %v1314
    %v1416 = vpack.c.bf16 %v1320, %v1315
    %v1417 = vpack.c.bf16 %v1321, %v1316
    %v1418 = vpack.c.bf16 %v1322, %v1317
    %v1419 = vld [vmem:[%s4] sm:$0xff]
    %v1420 = vld [vmem:[%s4 + $0x8] sm:$0xff]
    %v1421 = vld [vmem:[%s4 + $0x10] sm:$0xff]
    %v1422 = vld [vmem:[%s4 + $0x18] sm:$0xff]
    %v1423 = vld [vmem:[%s4 + $0x20] sm:$0xff]
    %v1424 = vld [vmem:[%s4 + $0x28] sm:$0xff]
    %v1425 = vld [vmem:[%s4 + $0x30] sm:$0xff]
    %v1426 = vld [vmem:[%s4 + $0x38] sm:$0xff]
    %v1427 = vld [vmem:[%s4 + $0x40] sm:$0xff]
    %v1428 = vld [vmem:[%s4 + $0x48] sm:$0xff]
    %v1429 = vld [vmem:[%s4 + $0x50] sm:$0xff]
    %v1430 = vld [vmem:[%s4 + $0x58] sm:$0xff]
    %v1431 = vld [vmem:[%s4 + $0x60] sm:$0xff]
    %v1432 = vld [vmem:[%s4 + $0x68] sm:$0xff]
    %v1433 = vld [vmem:[%s4 + $0x70] sm:$0xff]
    %v1434 = vld [vmem:[%s4 + $0x78] sm:$0xff]
    %1436 = vset.pattern.permute.xlu0 0
    %1437 = vperm.xlu0 %1436, %v1419
    %v1438 = vpop.permute.xlu0 %1437
    %1441 = vset.pattern.permute.xlu0 0
    %1442 = vperm.xlu0 %1441, %v1420
    %v1443 = vpop.permute.xlu0 %1442
    %1446 = vset.pattern.permute.xlu0 0
    %1447 = vperm.xlu0 %1446, %v1421
    %v1448 = vpop.permute.xlu0 %1447
    %1451 = vset.pattern.permute.xlu0 0
    %1452 = vperm.xlu0 %1451, %v1422
    %v1453 = vpop.permute.xlu0 %1452
    %1456 = vset.pattern.permute.xlu0 0
    %1457 = vperm.xlu0 %1456, %v1423
    %v1458 = vpop.permute.xlu0 %1457
    %1461 = vset.pattern.permute.xlu0 0
    %1462 = vperm.xlu0 %1461, %v1424
    %v1463 = vpop.permute.xlu0 %1462
    %1466 = vset.pattern.permute.xlu0 0
    %1467 = vperm.xlu0 %1466, %v1425
    %v1468 = vpop.permute.xlu0 %1467
    %1471 = vset.pattern.permute.xlu0 0
    %1472 = vperm.xlu0 %1471, %v1426
    %v1473 = vpop.permute.xlu0 %1472
    %1476 = vset.pattern.permute.xlu0 0
    %1477 = vperm.xlu0 %1476, %v1427
    %v1478 = vpop.permute.xlu0 %1477
    %1481 = vset.pattern.permute.xlu0 0
    %1482 = vperm.xlu0 %1481, %v1428
    %v1483 = vpop.permute.xlu0 %1482
    %1486 = vset.pattern.permute.xlu0 0
    %1487 = vperm.xlu0 %1486, %v1429
    %v1488 = vpop.permute.xlu0 %1487
    %1491 = vset.pattern.permute.xlu0 0
    %1492 = vperm.xlu0 %1491, %v1430
    %v1493 = vpop.permute.xlu0 %1492
    %1496 = vset.pattern.permute.xlu0 0
    %1497 = vperm.xlu0 %1496, %v1431
    %v1498 = vpop.permute.xlu0 %1497
    %1501 = vset.pattern.permute.xlu0 0
    %1502 = vperm.xlu0 %1501, %v1432
    %v1503 = vpop.permute.xlu0 %1502
    %1506 = vset.pattern.permute.xlu0 0
    %1507 = vperm.xlu0 %1506, %v1433
    %v1508 = vpop.permute.xlu0 %1507
    %1511 = vset.pattern.permute.xlu0 0
    %1512 = vperm.xlu0 %1511, %v1434
    %v1513 = vpop.permute.xlu0 %1512
    %v1531 = vunpack.c.l.b16 %v1323
    %v1532 = vunpack.c.h.b16 %v1323
    %v1533 = vunpack.c.l.b16 %v1324
    %v1534 = vunpack.c.h.b16 %v1324
    %v1535 = vunpack.c.l.b16 %v1325
    %v1536 = vunpack.c.h.b16 %v1325
    %v1537 = vunpack.c.l.b16 %v1326
    %v1538 = vunpack.c.h.b16 %v1326
    %v1539 = vunpack.c.l.b16 %v1327
    %v1540 = vunpack.c.h.b16 %v1327
    %v1541 = vunpack.c.l.b16 %v1328
    %v1542 = vunpack.c.h.b16 %v1328
    %v1543 = vunpack.c.l.b16 %v1329
    %v1544 = vunpack.c.h.b16 %v1329
    %v1545 = vunpack.c.l.b16 %v1330
    %v1546 = vunpack.c.h.b16 %v1330
    %v1547 = vunpack.c.l.b16 %v1331
    %v1548 = vunpack.c.h.b16 %v1331
    %v1549 = vunpack.c.l.b16 %v1332
    %v1550 = vunpack.c.h.b16 %v1332
    %v1551 = vunpack.c.l.b16 %v1333
    %v1552 = vunpack.c.h.b16 %v1333
    %v1553 = vunpack.c.l.b16 %v1334
    %v1554 = vunpack.c.h.b16 %v1334
    %v1555 = vunpack.c.l.b16 %v1335
    %v1556 = vunpack.c.h.b16 %v1335
    %v1557 = vunpack.c.l.b16 %v1336
    %v1558 = vunpack.c.h.b16 %v1336
    %v1559 = vunpack.c.l.b16 %v1337
    %v1560 = vunpack.c.h.b16 %v1337
    %v1561 = vunpack.c.l.b16 %v1338
    %v1562 = vunpack.c.h.b16 %v1338
    %v1563 = vpack.c.b16 %v1533, %v1531
    %v1564 = vpack.c.b16 %v1534, %v1532
    %v1565 = vpack.c.b16 %v1537, %v1535
    %v1566 = vpack.c.b16 %v1538, %v1536
    %v1567 = vpack.c.b16 %v1541, %v1539
    %v1568 = vpack.c.b16 %v1542, %v1540
    %v1569 = vpack.c.b16 %v1545, %v1543
    %v1570 = vpack.c.b16 %v1546, %v1544
    %v1571 = vpack.c.b16 %v1549, %v1547
    %v1572 = vpack.c.b16 %v1550, %v1548
    %v1573 = vpack.c.b16 %v1553, %v1551
    %v1574 = vpack.c.b16 %v1554, %v1552
    %v1575 = vpack.c.b16 %v1557, %v1555
    %v1576 = vpack.c.b16 %v1558, %v1556
    %v1577 = vpack.c.b16 %v1561, %v1559
    %v1578 = vpack.c.b16 %v1562, %v1560
    %1595 = vmatprep.subr.bf16.mxu0 %v1340
    %1596 = vmatpush1.bf16.msra.mxu0 %v1339
    %1597 = vmatprep.subr.bf16.mxu0 %v1345
    %1598 = vmatpush1.bf16.msra.mxu0 %v1344
    %1599 = vmatprep.subr.bf16.mxu0 %v1350
    %1600 = vmatpush1.bf16.msra.mxu0 %v1349
    %1601 = vmatprep.subr.bf16.mxu0 %v1355
    %1602 = vmatpush1.bf16.msra.mxu0 %v1354
    %1603 = vmatprep.subr.bf16.mxu0 %v1360
    %1604 = vmatpush1.bf16.msra.mxu0 %v1359
    %1605 = vmatprep.subr.bf16.mxu0 %v1365
    %1606 = vmatpush1.bf16.msra.mxu0 %v1364
    %1607 = vmatprep.subr.bf16.mxu0 %v1370
    %1608 = vmatpush1.bf16.msra.mxu0 %v1369
    %1609 = vmatprep.subr.bf16.mxu0 %v1375
    %1610 = vmatpush1.bf16.msra.mxu0 %v1374
    %1611 = vmatprep.subr.bf16.mxu0 %v1380
    %1612 = vmatpush1.bf16.msra.mxu0 %v1379
    %1613 = vmatprep.subr.bf16.mxu0 %v1385
    %1614 = vmatpush1.bf16.msra.mxu0 %v1384
    %1615 = vmatprep.subr.bf16.mxu0 %v1390
    %1616 = vmatpush1.bf16.msra.mxu0 %v1389
    %1617 = vmatprep.subr.bf16.mxu0 %v1395
    %1618 = vmatpush1.bf16.msra.mxu0 %v1394
    %1619 = vmatprep.subr.bf16.mxu0 %v1400
    %1620 = vmatpush1.bf16.msra.mxu0 %v1399
    %1621 = vmatprep.subr.bf16.mxu0 %v1405
    %1622 = vmatpush1.bf16.msra.mxu0 %v1404
    %1623 = vmatprep.subr.bf16.mxu0 %v1410
    %1624 = vmatpush1.bf16.msra.mxu0 %v1409
    %1625 = vmatprep.subr.bf16.mxu0 %v1415
    %1626 = vmatpush1.bf16.msra.mxu0 %v1414
    %1627 = vmatprep.mubr.bf16.mxu0 %v1564
    %1628 = vmatmul.mubr.bf16.gmra.mrb[0].mxu0 %v1563
    %v1629 = vpop.f32.mrb[0].mxu0
    %v1630 = vadd.f32 %v1438, %v1629
    %v1631 = vpop.f32.mrb[0].mxu0
    %v1632 = vadd.f32 %v1438, %v1631
    %v1633 = vpop.f32.mrb[0].mxu0
    %v1634 = vadd.f32 %v1443, %v1633
    %v1635 = vpop.f32.mrb[0].mxu0
    %v1636 = vadd.f32 %v1443, %v1635
    %1637 = vmatprep.mubr.bf16.mxu0 %v1566
    %1638 = vmatmul.mubr.bf16.gmra.mrb[0].mxu0 %v1565
    %v1639 = vpop.f32.mrb[0].mxu0
    %v1640 = vadd.f32 %v1448, %v1639
    %v1641 = vpop.f32.mrb[0].mxu0
    %v1642 = vadd.f32 %v1448, %v1641
    %v1643 = vpop.f32.mrb[0].mxu0
    %v1644 = vadd.f32 %v1453, %v1643
    %v1645 = vpop.f32.mrb[0].mxu0
    %v1646 = vadd.f32 %v1453, %v1645
    %1647 = vmatprep.mubr.bf16.mxu0 %v1568
    %1648 = vmatmul.mubr.bf16.gmra.mrb[0].mxu0 %v1567
    %v1649 = vpop.f32.mrb[0].mxu0
    %v1650 = vadd.f32 %v1458, %v1649
    %v1651 = vpop.f32.mrb[0].mxu0
    %v1652 = vadd.f32 %v1458, %v1651
    %v1653 = vpop.f32.mrb[0].mxu0
    %v1654 = vadd.f32 %v1463, %v1653
    %v1655 = vpop.f32.mrb[0].mxu0
    %v1656 = vadd.f32 %v1463, %v1655
    %1657 = vmatprep.mubr.bf16.mxu0 %v1570
    %1658 = vmatmul.mubr.bf16.gmra.mrb[0].mxu0 %v1569
    %v1659 = vpop.f32.mrb[0].mxu0
    %v1660 = vadd.f32 %v1468, %v1659
    %v1661 = vpop.f32.mrb[0].mxu0
    %v1662 = vadd.f32 %v1468, %v1661
    %v1663 = vpop.f32.mrb[0].mxu0
    %v1664 = vadd.f32 %v1473, %v1663
    %v1665 = vpop.f32.mrb[0].mxu0
    %v1666 = vadd.f32 %v1473, %v1665
    %1667 = vmatprep.mubr.bf16.mxu0 %v1572
    %1668 = vmatmul.mubr.bf16.gmra.mrb[0].mxu0 %v1571
    %v1669 = vpop.f32.mrb[0].mxu0
    %v1670 = vadd.f32 %v1478, %v1669
    %v1671 = vpop.f32.mrb[0].mxu0
    %v1672 = vadd.f32 %v1478, %v1671
    %v1673 = vpop.f32.mrb[0].mxu0
    %v1674 = vadd.f32 %v1483, %v1673
    %v1675 = vpop.f32.mrb[0].mxu0
    %v1676 = vadd.f32 %v1483, %v1675
    %1677 = vmatprep.mubr.bf16.mxu0 %v1574
    %1678 = vmatmul.mubr.bf16.gmra.mrb[0].mxu0 %v1573
    %v1679 = vpop.f32.mrb[0].mxu0
    %v1680 = vadd.f32 %v1488, %v1679
    %v1681 = vpop.f32.mrb[0].mxu0
    %v1682 = vadd.f32 %v1488, %v1681
    %v1683 = vpop.f32.mrb[0].mxu0
    %v1684 = vadd.f32 %v1493, %v1683
    %v1685 = vpop.f32.mrb[0].mxu0
    %v1686 = vadd.f32 %v1493, %v1685
    %1687 = vmatprep.mubr.bf16.mxu0 %v1576
    %1688 = vmatmul.mubr.bf16.gmra.mrb[0].mxu0 %v1575
    %v1689 = vpop.f32.mrb[0].mxu0
    %v1690 = vadd.f32 %v1498, %v1689
    %v1691 = vpop.f32.mrb[0].mxu0
    %v1692 = vadd.f32 %v1498, %v1691
    %v1693 = vpop.f32.mrb[0].mxu0
    %v1694 = vadd.f32 %v1503, %v1693
    %v1695 = vpop.f32.mrb[0].mxu0
    %v1696 = vadd.f32 %v1503, %v1695
    %1697 = vmatprep.mubr.bf16.mxu0 %v1578
    %1698 = vmatmul.mubr.bf16.gmra.mrb[0].mxu0 %v1577
    %v1699 = vpop.f32.mrb[0].mxu0
    %v1700 = vadd.f32 %v1508, %v1699
    %v1701 = vpop.f32.mrb[0].mxu0
    %v1702 = vadd.f32 %v1508, %v1701
    %v1703 = vpop.f32.mrb[0].mxu0
    %v1704 = vadd.f32 %v1513, %v1703
    %v1705 = vpop.f32.mrb[0].mxu0
    %v1706 = vadd.f32 %v1513, %v1705
    %1707 = vdwg.mxu0
    %1708 = vmatprep.subr.bf16.mxu0 %v1342
    %1709 = vmatpush1.bf16.msra.mxu0 %v1341
    %1710 = vmatprep.subr.bf16.mxu0 %v1347
    %1711 = vmatpush1.bf16.msra.mxu0 %v1346
    %1712 = vmatprep.subr.bf16.mxu0 %v1352
    %1713 = vmatpush1.bf16.msra.mxu0 %v1351
    %1714 = vmatprep.subr.bf16.mxu0 %v1357
    %1715 = vmatpush1.bf16.msra.mxu0 %v1356
    %1716 = vmatprep.subr.bf16.mxu0 %v1362
    %1717 = vmatpush1.bf16.msra.mxu0 %v1361
    %1718 = vmatprep.subr.bf16.mxu0 %v1367
    %1719 = vmatpush1.bf16.msra.mxu0 %v1366
    %1720 = vmatprep.subr.bf16.mxu0 %v1372
    %1721 = vmatpush1.bf16.msra.mxu0 %v1371
    %1722 = vmatprep.subr.bf16.mxu0 %v1377
    %1723 = vmatpush1.bf16.msra.mxu0 %v1376
    %1724 = vmatprep.subr.bf16.mxu0 %v1382
    %1725 = vmatpush1.bf16.msra.mxu0 %v1381
    %1726 = vmatprep.subr.bf16.mxu0 %v1387
    %1727 = vmatpush1.bf16.msra.mxu0 %v1386
    %1728 = vmatprep.subr.bf16.mxu0 %v1392
    %1729 = vmatpush1.bf16.msra.mxu0 %v1391
    %1730 = vmatprep.subr.bf16.mxu0 %v1397
    %1731 = vmatpush1.bf16.msra.mxu0 %v1396
    %1732 = vmatprep.subr.bf16.mxu0 %v1402
    %1733 = vmatpush1.bf16.msra.mxu0 %v1401
    %1734 = vmatprep.subr.bf16.mxu0 %v1407
    %1735 = vmatpush1.bf16.msra.mxu0 %v1406
    %1736 = vmatprep.subr.bf16.mxu0 %v1412
    %1737 = vmatpush1.bf16.msra.mxu0 %v1411
    %1738 = vmatprep.subr.bf16.mxu0 %v1417
    %1739 = vmatpush1.bf16.msra.mxu0 %v1416
    %1740 = vmatprep.mubr.bf16.mxu0 %v1564
    %1741 = vmatmul.mubr.bf16.gmra.mrb[0].mxu0 %v1563
    %v1742 = vpop.f32.mrb[0].mxu0
    %v1743 = vadd.f32 %v1438, %v1742
    %v1744 = vpop.f32.mrb[0].mxu0
    %v1745 = vadd.f32 %v1438, %v1744
    %v1746 = vpop.f32.mrb[0].mxu0
    %v1747 = vadd.f32 %v1443, %v1746
    %v1748 = vpop.f32.mrb[0].mxu0
    %v1749 = vadd.f32 %v1443, %v1748
    %1750 = vmatprep.mubr.bf16.mxu0 %v1566
    %1751 = vmatmul.mubr.bf16.gmra.mrb[0].mxu0 %v1565
    %v1752 = vpop.f32.mrb[0].mxu0
    %v1753 = vadd.f32 %v1448, %v1752
    %v1754 = vpop.f32.mrb[0].mxu0
    %v1755 = vadd.f32 %v1448, %v1754
    %v1756 = vpop.f32.mrb[0].mxu0
    %v1757 = vadd.f32 %v1453, %v1756
    %v1758 = vpop.f32.mrb[0].mxu0
    %v1759 = vadd.f32 %v1453, %v1758
    %1760 = vmatprep.mubr.bf16.mxu0 %v1568
    %1761 = vmatmul.mubr.bf16.gmra.mrb[0].mxu0 %v1567
    %v1762 = vpop.f32.mrb[0].mxu0
    %v1763 = vadd.f32 %v1458, %v1762
    %v1764 = vpop.f32.mrb[0].mxu0
    %v1765 = vadd.f32 %v1458, %v1764
    %v1766 = vpop.f32.mrb[0].mxu0
    %v1767 = vadd.f32 %v1463, %v1766
    %v1768 = vpop.f32.mrb[0].mxu0
    %v1769 = vadd.f32 %v1463, %v1768
    %1770 = vmatprep.mubr.bf16.mxu0 %v1570
    %1771 = vmatmul.mubr.bf16.gmra.mrb[0].mxu0 %v1569
    %v1772 = vpop.f32.mrb[0].mxu0
    %v1773 = vadd.f32 %v1468, %v1772
    %v1774 = vpop.f32.mrb[0].mxu0
    %v1775 = vadd.f32 %v1468, %v1774
    %v1776 = vpop.f32.mrb[0].mxu0
    %v1777 = vadd.f32 %v1473, %v1776
    %v1778 = vpop.f32.mrb[0].mxu0
    %v1779 = vadd.f32 %v1473, %v1778
    %1780 = vmatprep.mubr.bf16.mxu0 %v1572
    %1781 = vmatmul.mubr.bf16.gmra.mrb[0].mxu0 %v1571
    %v1782 = vpop.f32.mrb[0].mxu0
    %v1783 = vadd.f32 %v1478, %v1782
    %v1784 = vpop.f32.mrb[0].mxu0
    %v1785 = vadd.f32 %v1478, %v1784
    %v1786 = vpop.f32.mrb[0].mxu0
    %v1787 = vadd.f32 %v1483, %v1786
    %v1788 = vpop.f32.mrb[0].mxu0
    %v1789 = vadd.f32 %v1483, %v1788
    %1790 = vmatprep.mubr.bf16.mxu0 %v1574
    %1791 = vmatmul.mubr.bf16.gmra.mrb[0].mxu0 %v1573
    %v1792 = vpop.f32.mrb[0].mxu0
    %v1793 = vadd.f32 %v1488, %v1792
    %v1794 = vpop.f32.mrb[0].mxu0
    %v1795 = vadd.f32 %v1488, %v1794
    %v1796 = vpop.f32.mrb[0].mxu0
    %v1797 = vadd.f32 %v1493, %v1796
    %v1798 = vpop.f32.mrb[0].mxu0
    %v1799 = vadd.f32 %v1493, %v1798
    %1800 = vmatprep.mubr.bf16.mxu0 %v1576
    %1801 = vmatmul.mubr.bf16.gmra.mrb[0].mxu0 %v1575
    %v1802 = vpop.f32.mrb[0].mxu0
    %v1803 = vadd.f32 %v1498, %v1802
    %v1804 = vpop.f32.mrb[0].mxu0
    %v1805 = vadd.f32 %v1498, %v1804
    %v1806 = vpop.f32.mrb[0].mxu0
    %v1807 = vadd.f32 %v1503, %v1806
    %v1808 = vpop.f32.mrb[0].mxu0
    %v1809 = vadd.f32 %v1503, %v1808
    %1810 = vmatprep.mubr.bf16.mxu0 %v1578
    %1811 = vmatmul.mubr.bf16.gmra.mrb[0].mxu0 %v1577
    %v1812 = vpop.f32.mrb[0].mxu0
    %v1813 = vadd.f32 %v1508, %v1812
    %v1814 = vpop.f32.mrb[0].mxu0
    %v1815 = vadd.f32 %v1508, %v1814
    %v1816 = vpop.f32.mrb[0].mxu0
    %v1817 = vadd.f32 %v1513, %v1816
    %v1818 = vpop.f32.mrb[0].mxu0
    %v1819 = vadd.f32 %v1513, %v1818
    %1820 = vdwg.mxu0
    %1821 = vmatprep.subr.bf16.mxu0 0
    %1822 = vmatpush1.bf16.msra.mxu0 %v1343
    %1823 = vmatprep.subr.bf16.mxu0 0
    %1824 = vmatpush1.bf16.msra.mxu0 %v1348
    %1825 = vmatprep.subr.bf16.mxu0 0
    %1826 = vmatpush1.bf16.msra.mxu0 %v1353
    %1827 = vmatprep.subr.bf16.mxu0 0
    %1828 = vmatpush1.bf16.msra.mxu0 %v1358
    %1829 = vmatprep.subr.bf16.mxu0 0
    %1830 = vmatpush1.bf16.msra.mxu0 %v1363
    %1831 = vmatprep.subr.bf16.mxu0 0
    %1832 = vmatpush1.bf16.msra.mxu0 %v1368
    %1833 = vmatprep.subr.bf16.mxu0 0
    %1834 = vmatpush1.bf16.msra.mxu0 %v1373
    %1835 = vmatprep.subr.bf16.mxu0 0
    %1836 = vmatpush1.bf16.msra.mxu0 %v1378
    %1837 = vmatprep.subr.bf16.mxu0 0
    %1838 = vmatpush1.bf16.msra.mxu0 %v1383
    %1839 = vmatprep.subr.bf16.mxu0 0
    %1840 = vmatpush1.bf16.msra.mxu0 %v1388
    %1841 = vmatprep.subr.bf16.mxu0 0
    %1842 = vmatpush1.bf16.msra.mxu0 %v1393
    %1843 = vmatprep.subr.bf16.mxu0 0
    %1844 = vmatpush1.bf16.msra.mxu0 %v1398
    %1845 = vmatprep.subr.bf16.mxu0 0
    %1846 = vmatpush1.bf16.msra.mxu0 %v1403
    %1847 = vmatprep.subr.bf16.mxu0 0
    %1848 = vmatpush1.bf16.msra.mxu0 %v1408
    %1849 = vmatprep.subr.bf16.mxu0 0
    %1850 = vmatpush1.bf16.msra.mxu0 %v1413
    %1851 = vmatprep.subr.bf16.mxu0 0
    %1852 = vmatpush1.bf16.msra.mxu0 %v1418
    %1853 = vmatprep.mubr.bf16.mxu0 %v1564
    %1854 = vmatmul.mubr.bf16.gmra.mrb[0].mxu0 %v1563
    %v1855 = vpop.f32.mrb[0].mxu0
    %v1856 = vadd.f32 %v1438, %v1855
    %v1857 = vpop.f32.mrb[0].mxu0
    %v1858 = vpop.f32.mrb[0].mxu0
    %v1859 = vadd.f32 %v1443, %v1858
    %v1860 = vpop.f32.mrb[0].mxu0
    %1861 = vmatprep.mubr.bf16.mxu0 %v1566
    %1862 = vmatmul.mubr.bf16.gmra.mrb[0].mxu0 %v1565
    %v1863 = vpop.f32.mrb[0].mxu0
    %v1864 = vadd.f32 %v1448, %v1863
    %v1865 = vpop.f32.mrb[0].mxu0
    %v1866 = vpop.f32.mrb[0].mxu0
    %v1867 = vadd.f32 %v1453, %v1866
    %v1868 = vpop.f32.mrb[0].mxu0
    %1869 = vmatprep.mubr.bf16.mxu0 %v1568
    %1870 = vmatmul.mubr.bf16.gmra.mrb[0].mxu0 %v1567
    %v1871 = vpop.f32.mrb[0].mxu0
    %v1872 = vadd.f32 %v1458, %v1871
    %v1873 = vpop.f32.mrb[0].mxu0
    %v1874 = vpop.f32.mrb[0].mxu0
    %v1875 = vadd.f32 %v1463, %v1874
    %v1876 = vpop.f32.mrb[0].mxu0
    %1877 = vmatprep.mubr.bf16.mxu0 %v1570
    %1878 = vmatmul.mubr.bf16.gmra.mrb[0].mxu0 %v1569
    %v1879 = vpop.f32.mrb[0].mxu0
    %v1880 = vadd.f32 %v1468, %v1879
    %v1881 = vpop.f32.mrb[0].mxu0
    %v1882 = vpop.f32.mrb[0].mxu0
    %v1883 = vadd.f32 %v1473, %v1882
    %v1884 = vpop.f32.mrb[0].mxu0
    %1885 = vmatprep.mubr.bf16.mxu0 %v1572
    %1886 = vmatmul.mubr.bf16.gmra.mrb[0].mxu0 %v1571
    %v1887 = vpop.f32.mrb[0].mxu0
    %v1888 = vadd.f32 %v1478, %v1887
    %v1889 = vpop.f32.mrb[0].mxu0
    %v1890 = vpop.f32.mrb[0].mxu0
    %v1891 = vadd.f32 %v1483, %v1890
    %v1892 = vpop.f32.mrb[0].mxu0
    %1893 = vmatprep.mubr.bf16.mxu0 %v1574
    %1894 = vmatmul.mubr.bf16.gmra.mrb[0].mxu0 %v1573
    %v1895 = vpop.f32.mrb[0].mxu0
    %v1896 = vadd.f32 %v1488, %v1895
    %v1897 = vpop.f32.mrb[0].mxu0
    %v1898 = vpop.f32.mrb[0].mxu0
    %v1899 = vadd.f32 %v1493, %v1898
    %v1900 = vpop.f32.mrb[0].mxu0
    %1901 = vmatprep.mubr.bf16.mxu0 %v1576
    %1902 = vmatmul.mubr.bf16.gmra.mrb[0].mxu0 %v1575
    %v1903 = vpop.f32.mrb[0].mxu0
    %v1904 = vadd.f32 %v1498, %v1903
    %v1905 = vpop.f32.mrb[0].mxu0
    %v1906 = vpop.f32.mrb[0].mxu0
    %v1907 = vadd.f32 %v1503, %v1906
    %v1908 = vpop.f32.mrb[0].mxu0
    %1909 = vmatprep.mubr.bf16.mxu0 %v1578
    %1910 = vmatmul.mubr.bf16.gmra.mrb[0].mxu0 %v1577
    %v1911 = vpop.f32.mrb[0].mxu0
    %v1912 = vadd.f32 %v1508, %v1911
    %v1913 = vpop.f32.mrb[0].mxu0
    %v1914 = vpop.f32.mrb[0].mxu0
    %v1915 = vadd.f32 %v1513, %v1914
    %v1916 = vpop.f32.mrb[0].mxu0
    %1917 = vdwg.mxu0
    %v1918 = vmax.f32 %v1630, 0.0
    %v1919 = vmax.f32 %v1632, 0.0
    %v1920 = vmax.f32 %v1743, 0.0
    %v1921 = vmax.f32 %v1745, 0.0
    %v1922 = vmax.f32 %v1856, 0.0
    %v1923 = vmax.f32 %v1634, 0.0
    %v1924 = vmax.f32 %v1636, 0.0
    %v1925 = vmax.f32 %v1747, 0.0
    %v1926 = vmax.f32 %v1749, 0.0
    %v1927 = vmax.f32 %v1859, 0.0
    %v1928 = vmax.f32 %v1640, 0.0
    %v1929 = vmax.f32 %v1642, 0.0
    %v1930 = vmax.f32 %v1753, 0.0
    %v1931 = vmax.f32 %v1755, 0.0
    %v1932 = vmax.f32 %v1864, 0.0
    %v1933 = vmax.f32 %v1644, 0.0
    %v1934 = vmax.f32 %v1646, 0.0
    %v1935 = vmax.f32 %v1757, 0.0
    %v1936 = vmax.f32 %v1759, 0.0
    %v1937 = vmax.f32 %v1867, 0.0
    %v1938 = vmax.f32 %v1650, 0.0
    %v1939 = vmax.f32 %v1652, 0.0
    %v1940 = vmax.f32 %v1763, 0.0
    %v1941 = vmax.f32 %v1765, 0.0
    %v1942 = vmax.f32 %v1872, 0.0
    %v1943 = vmax.f32 %v1654, 0.0
    %v1944 = vmax.f32 %v1656, 0.0
    %v1945 = vmax.f32 %v1767, 0.0
    %v1946 = vmax.f32 %v1769, 0.0
    %v1947 = vmax.f32 %v1875, 0.0
    %v1948 = vmax.f32 %v1660, 0.0
    %v1949 = vmax.f32 %v1662, 0.0
    %v1950 = vmax.f32 %v1773, 0.0
    %v1951 = vmax.f32 %v1775, 0.0
    %v1952 = vmax.f32 %v1880, 0.0
    %v1953 = vmax.f32 %v1664, 0.0
    %v1954 = vmax.f32 %v1666, 0.0
    %v1955 = vmax.f32 %v1777, 0.0
    %v1956 = vmax.f32 %v1779, 0.0
    %v1957 = vmax.f32 %v1883, 0.0
    %v1958 = vmax.f32 %v1670, 0.0
    %v1959 = vmax.f32 %v1672, 0.0
    %v1960 = vmax.f32 %v1783, 0.0
    %v1961 = vmax.f32 %v1785, 0.0
    %v1962 = vmax.f32 %v1888, 0.0
    %v1963 = vmax.f32 %v1674, 0.0
    %v1964 = vmax.f32 %v1676, 0.0
    %v1965 = vmax.f32 %v1787, 0.0
    %v1966 = vmax.f32 %v1789, 0.0
    %v1967 = vmax.f32 %v1891, 0.0
    %v1968 = vmax.f32 %v1680, 0.0
    %v1969 = vmax.f32 %v1682, 0.0
    %v1970 = vmax.f32 %v1793, 0.0
    %v1971 = vmax.f32 %v1795, 0.0
    %v1972 = vmax.f32 %v1896, 0.0
    %v1973 = vmax.f32 %v1684, 0.0
    %v1974 = vmax.f32 %v1686, 0.0
    %v1975 = vmax.f32 %v1797, 0.0
    %v1976 = vmax.f32 %v1799, 0.0
    %v1977 = vmax.f32 %v1899, 0.0
    %v1978 = vmax.f32 %v1690, 0.0
    %v1979 = vmax.f32 %v1692, 0.0
    %v1980 = vmax.f32 %v1803, 0.0
    %v1981 = vmax.f32 %v1805, 0.0
    %v1982 = vmax.f32 %v1904, 0.0
    %v1983 = vmax.f32 %v1694, 0.0
    %v1984 = vmax.f32 %v1696, 0.0
    %v1985 = vmax.f32 %v1807, 0.0
    %v1986 = vmax.f32 %v1809, 0.0
    %v1987 = vmax.f32 %v1907, 0.0
    %v1988 = vmax.f32 %v1700, 0.0
    %v1989 = vmax.f32 %v1702, 0.0
    %v1990 = vmax.f32 %v1813, 0.0
    %v1991 = vmax.f32 %v1815, 0.0
    %v1992 = vmax.f32 %v1912, 0.0
    %v1993 = vmax.f32 %v1704, 0.0
    %v1994 = vmax.f32 %v1706, 0.0
    %v1995 = vmax.f32 %v1817, 0.0
    %v1996 = vmax.f32 %v1819, 0.0
    %v1997 = vmax.f32 %v1915, 0.0
    %v1998 = vld [vmem:[%s5] sm:$0xf]
    %v1999 = vld [vmem:[%s5 + $0x4] sm:$0xf]
    %v2000 = vld [vmem:[%s5 + $0x8] sm:$0xf]
    %v2001 = vld [vmem:[%s5 + $0xc] sm:$0xf]
    %v2002 = vld [vmem:[%s5 + $0x10] sm:$0xf]
    %v2003 = vld [vmem:[%s5 + $0x14] sm:$0xf]
    %v2004 = vld [vmem:[%s5 + $0x18] sm:$0xf]
    %v2005 = vld [vmem:[%s5 + $0x1c] sm:$0xf]
    %v2006 = vpack.c.bf16 %v1923, %v1918
    %v2007 = vpack.c.bf16 %v1924, %v1919
    %v2008 = vpack.c.bf16 %v1925, %v1920
    %v2009 = vpack.c.bf16 %v1926, %v1921
    %v2010 = vpack.c.bf16 %v1927, %v1922
    %v2011 = vpack.c.bf16 %v1933, %v1928
    %v2012 = vpack.c.bf16 %v1934, %v1929
    %v2013 = vpack.c.bf16 %v1935, %v1930
    %v2014 = vpack.c.bf16 %v1936, %v1931
    %v2015 = vpack.c.bf16 %v1937, %v1932
    %v2016 = vpack.c.bf16 %v1943, %v1938
    %v2017 = vpack.c.bf16 %v1944, %v1939
    %v2018 = vpack.c.bf16 %v1945, %v1940
    %v2019 = vpack.c.bf16 %v1946, %v1941
    %v2020 = vpack.c.bf16 %v1947, %v1942
    %v2021 = vpack.c.bf16 %v1953, %v1948
    %v2022 = vpack.c.bf16 %v1954, %v1949
    %v2023 = vpack.c.bf16 %v1955, %v1950
    %v2024 = vpack.c.bf16 %v1956, %v1951
    %v2025 = vpack.c.bf16 %v1957, %v1952
    %v2026 = vpack.c.bf16 %v1963, %v1958
    %v2027 = vpack.c.bf16 %v1964, %v1959
    %v2028 = vpack.c.bf16 %v1965, %v1960
    %v2029 = vpack.c.bf16 %v1966, %v1961
    %v2030 = vpack.c.bf16 %v1967, %v1962
    %v2031 = vpack.c.bf16 %v1973, %v1968
    %v2032 = vpack.c.bf16 %v1974, %v1969
    %v2033 = vpack.c.bf16 %v1975, %v1970
    %v2034 = vpack.c.bf16 %v1976, %v1971
    %v2035 = vpack.c.bf16 %v1977, %v1972
    %v2036 = vpack.c.bf16 %v1983, %v1978
    %v2037 = vpack.c.bf16 %v1984, %v1979
    %v2038 = vpack.c.bf16 %v1985, %v1980
    %v2039 = vpack.c.bf16 %v1986, %v1981
    %v2040 = vpack.c.bf16 %v1987, %v1982
    %v2041 = vpack.c.bf16 %v1993, %v1988
    %v2042 = vpack.c.bf16 %v1994, %v1989
    %v2043 = vpack.c.bf16 %v1995, %v1990
    %v2044 = vpack.c.bf16 %v1996, %v1991
    %v2045 = vpack.c.bf16 %v1997, %v1992
    %v2046 = vld [vmem:[%s6] sm:$0xff]
    %v2047 = vld [vmem:[%s6 + $0x8] sm:$0xff]
    %v2048 = vld [vmem:[%s6 + $0x10] sm:$0xff]
    %v2049 = vld [vmem:[%s6 + $0x18] sm:$0xff]
    %v2050 = vld [vmem:[%s6 + $0x20] sm:$0xff]
    %v2051 = vld [vmem:[%s6 + $0x28] sm:$0xff]
    %v2052 = vld [vmem:[%s6 + $0x30] sm:$0xff]
    %v2053 = vld [vmem:[%s6 + $0x38] sm:$0xff]
    %2055 = vset.pattern.permute.xlu0 0
    %2056 = vperm.xlu0 %2055, %v2046
    %v2057 = vpop.permute.xlu0 %2056
    %2060 = vset.pattern.permute.xlu0 0
    %2061 = vperm.xlu0 %2060, %v2047
    %v2062 = vpop.permute.xlu0 %2061
    %2065 = vset.pattern.permute.xlu0 0
    %2066 = vperm.xlu0 %2065, %v2048
    %v2067 = vpop.permute.xlu0 %2066
    %2070 = vset.pattern.permute.xlu0 0
    %2071 = vperm.xlu0 %2070, %v2049
    %v2072 = vpop.permute.xlu0 %2071
    %2075 = vset.pattern.permute.xlu0 0
    %2076 = vperm.xlu0 %2075, %v2050
    %v2077 = vpop.permute.xlu0 %2076
    %2080 = vset.pattern.permute.xlu0 0
    %2081 = vperm.xlu0 %2080, %v2051
    %v2082 = vpop.permute.xlu0 %2081
    %2085 = vset.pattern.permute.xlu0 0
    %2086 = vperm.xlu0 %2085, %v2052
    %v2087 = vpop.permute.xlu0 %2086
    %2090 = vset.pattern.permute.xlu0 0
    %2091 = vperm.xlu0 %2090, %v2053
    %v2092 = vpop.permute.xlu0 %2091
    %v2102 = vunpack.c.l.b16 %v1998
    %v2103 = vunpack.c.l.b16 %v1999
    %v2104 = vunpack.c.l.b16 %v2000
    %v2105 = vunpack.c.l.b16 %v2001
    %v2106 = vunpack.c.l.b16 %v2002
    %v2107 = vunpack.c.l.b16 %v2003
    %v2108 = vunpack.c.l.b16 %v2004
    %v2109 = vunpack.c.l.b16 %v2005
    %v2110 = vpack.c.b16 %v2103, %v2102
    %v2111 = vpack.c.b16 %v2105, %v2104
    %v2112 = vpack.c.b16 %v2107, %v2106
    %v2113 = vpack.c.b16 %v2109, %v2108
    %2118 = vmatprep.subr.bf16.mxu0 %v2007
    %2119 = vmatpush1.bf16.msra.mxu0 %v2006
    %2120 = vmatprep.subr.bf16.mxu0 %v2012
    %2121 = vmatpush1.bf16.msra.mxu0 %v2011
    %2122 = vmatprep.subr.bf16.mxu0 %v2017
    %2123 = vmatpush1.bf16.msra.mxu0 %v2016
    %2124 = vmatprep.subr.bf16.mxu0 %v2022
    %2125 = vmatpush1.bf16.msra.mxu0 %v2021
    %2126 = vmatprep.subr.bf16.mxu0 %v2027
    %2127 = vmatpush1.bf16.msra.mxu0 %v2026
    %2128 = vmatprep.subr.bf16.mxu0 %v2032
    %2129 = vmatpush1.bf16.msra.mxu0 %v2031
    %2130 = vmatprep.subr.bf16.mxu0 %v2037
    %2131 = vmatpush1.bf16.msra.mxu0 %v2036
    %2132 = vmatprep.subr.bf16.mxu0 %v2042
    %2133 = vmatpush1.bf16.msra.mxu0 %v2041
    %2134 = vmatprep.subr.bf16.mxu0 0
    %2135 = vmatpush1.bf16.msra.mxu0 0
    %2136 = vmatprep.subr.bf16.mxu0 0
    %2137 = vmatpush1.bf16.msra.mxu0 0
    %2138 = vmatprep.subr.bf16.mxu0 0
    %2139 = vmatpush1.bf16.msra.mxu0 0
    %2140 = vmatprep.subr.bf16.mxu0 0
    %2141 = vmatpush1.bf16.msra.mxu0 0
    %2142 = vmatprep.subr.bf16.mxu0 0
    %2143 = vmatpush1.bf16.msra.mxu0 0
    %2144 = vmatprep.subr.bf16.mxu0 0
    %2145 = vmatpush1.bf16.msra.mxu0 0
    %2146 = vmatprep.subr.bf16.mxu0 0
    %2147 = vmatpush1.bf16.msra.mxu0 0
    %2148 = vmatprep.subr.bf16.mxu0 0
    %2149 = vmatpush1.bf16.msra.mxu0 0
    %2150 = vmatprep.mubr.bf16.mxu0 0
    %2151 = vmatmul.mubr.bf16.gmra.mrb[0].mxu0 %v2110
    %v2152 = vpop.f32.mrb[0].mxu0
    %v2153 = vadd.f32 %v2057, %v2152
    %v2154 = vpop.f32.mrb[0].mxu0
    %v2155 = vadd.f32 %v2057, %v2154
    %v2156 = vpop.f32.mrb[0].mxu0
    %v2157 = vadd.f32 %v2062, %v2156
    %v2158 = vpop.f32.mrb[0].mxu0
    %v2159 = vadd.f32 %v2062, %v2158
    %2160 = vmatprep.mubr.bf16.mxu0 0
    %2161 = vmatmul.mubr.bf16.gmra.mrb[0].mxu0 %v2111
    %v2162 = vpop.f32.mrb[0].mxu0
    %v2163 = vadd.f32 %v2067, %v2162
    %v2164 = vpop.f32.mrb[0].mxu0
    %v2165 = vadd.f32 %v2067, %v2164
    %v2166 = vpop.f32.mrb[0].mxu0
    %v2167 = vadd.f32 %v2072, %v2166
    %v2168 = vpop.f32.mrb[0].mxu0
    %v2169 = vadd.f32 %v2072, %v2168
    %2170 = vmatprep.mubr.bf16.mxu0 0
    %2171 = vmatmul.mubr.bf16.gmra.mrb[0].mxu0 %v2112
    %v2172 = vpop.f32.mrb[0].mxu0
    %v2173 = vadd.f32 %v2077, %v2172
    %v2174 = vpop.f32.mrb[0].mxu0
    %v2175 = vadd.f32 %v2077, %v2174
    %v2176 = vpop.f32.mrb[0].mxu0
    %v2177 = vadd.f32 %v2082, %v2176
    %v2178 = vpop.f32.mrb[0].mxu0
    %v2179 = vadd.f32 %v2082, %v2178
    %2180 = vmatprep.mubr.bf16.mxu0 0
    %2181 = vmatmul.mubr.bf16.gmra.mrb[0].mxu0 %v2113
    %v2182 = vpop.f32.mrb[0].mxu0
    %v2183 = vadd.f32 %v2087, %v2182
    %v2184 = vpop.f32.mrb[0].mxu0
    %v2185 = vadd.f32 %v2087, %v2184
    %v2186 = vpop.f32.mrb[0].mxu0
    %v2187 = vadd.f32 %v2092, %v2186
    %v2188 = vpop.f32.mrb[0].mxu0
    %v2189 = vadd.f32 %v2092, %v2188
    %2190 = vdwg.mxu0
    %2191 = vmatprep.subr.bf16.mxu0 %v2009
    %2192 = vmatpush1.bf16.msra.mxu0 %v2008
    %2193 = vmatprep.subr.bf16.mxu0 %v2014
    %2194 = vmatpush1.bf16.msra.mxu0 %v2013
    %2195 = vmatprep.subr.bf16.mxu0 %v2019
    %2196 = vmatpush1.bf16.msra.mxu0 %v2018
    %2197 = vmatprep.subr.bf16.mxu0 %v2024
    %2198 = vmatpush1.bf16.msra.mxu0 %v2023
    %2199 = vmatprep.subr.bf16.mxu0 %v2029
    %2200 = vmatpush1.bf16.msra.mxu0 %v2028
    %2201 = vmatprep.subr.bf16.mxu0 %v2034
    %2202 = vmatpush1.bf16.msra.mxu0 %v2033
    %2203 = vmatprep.subr.bf16.mxu0 %v2039
    %2204 = vmatpush1.bf16.msra.mxu0 %v2038
    %2205 = vmatprep.subr.bf16.mxu0 %v2044
    %2206 = vmatpush1.bf16.msra.mxu0 %v2043
    %2207 = vmatprep.subr.bf16.mxu0 0
    %2208 = vmatpush1.bf16.msra.mxu0 0
    %2209 = vmatprep.subr.bf16.mxu0 0
    %2210 = vmatpush1.bf16.msra.mxu0 0
    %2211 = vmatprep.subr.bf16.mxu0 0
    %2212 = vmatpush1.bf16.msra.mxu0 0
    %2213 = vmatprep.subr.bf16.mxu0 0
    %2214 = vmatpush1.bf16.msra.mxu0 0
    %2215 = vmatprep.subr.bf16.mxu0 0
    %2216 = vmatpush1.bf16.msra.mxu0 0
    %2217 = vmatprep.subr.bf16.mxu0 0
    %2218 = vmatpush1.bf16.msra.mxu0 0
    %2219 = vmatprep.subr.bf16.mxu0 0
    %2220 = vmatpush1.bf16.msra.mxu0 0
    %2221 = vmatprep.subr.bf16.mxu0 0
    %2222 = vmatpush1.bf16.msra.mxu0 0
    %2223 = vmatprep.mubr.bf16.mxu0 0
    %2224 = vmatmul.mubr.bf16.gmra.mrb[0].mxu0 %v2110
    %v2225 = vpop.f32.mrb[0].mxu0
    %v2226 = vadd.f32 %v2057, %v2225
    %v2227 = vpop.f32.mrb[0].mxu0
    %v2228 = vadd.f32 %v2057, %v2227
    %v2229 = vpop.f32.mrb[0].mxu0
    %v2230 = vadd.f32 %v2062, %v2229
    %v2231 = vpop.f32.mrb[0].mxu0
    %v2232 = vadd.f32 %v2062, %v2231
    %2233 = vmatprep.mubr.bf16.mxu0 0
    %2234 = vmatmul.mubr.bf16.gmra.mrb[0].mxu0 %v2111
    %v2235 = vpop.f32.mrb[0].mxu0
    %v2236 = vadd.f32 %v2067, %v2235
    %v2237 = vpop.f32.mrb[0].mxu0
    %v2238 = vadd.f32 %v2067, %v2237
    %v2239 = vpop.f32.mrb[0].mxu0
    %v2240 = vadd.f32 %v2072, %v2239
    %v2241 = vpop.f32.mrb[0].mxu0
    %v2242 = vadd.f32 %v2072, %v2241
    %2243 = vmatprep.mubr.bf16.mxu0 0
    %2244 = vmatmul.mubr.bf16.gmra.mrb[0].mxu0 %v2112
    %v2245 = vpop.f32.mrb[0].mxu0
    %v2246 = vadd.f32 %v2077, %v2245
    %v2247 = vpop.f32.mrb[0].mxu0
    %v2248 = vadd.f32 %v2077, %v2247
    %v2249 = vpop.f32.mrb[0].mxu0
    %v2250 = vadd.f32 %v2082, %v2249
    %v2251 = vpop.f32.mrb[0].mxu0
    %v2252 = vadd.f32 %v2082, %v2251
    %2253 = vmatprep.mubr.bf16.mxu0 0
    %2254 = vmatmul.mubr.bf16.gmra.mrb[0].mxu0 %v2113
    %v2255 = vpop.f32.mrb[0].mxu0
    %v2256 = vadd.f32 %v2087, %v2255
    %v2257 = vpop.f32.mrb[0].mxu0
    %v2258 = vadd.f32 %v2087, %v2257
    %v2259 = vpop.f32.mrb[0].mxu0
    %v2260 = vadd.f32 %v2092, %v2259
    %v2261 = vpop.f32.mrb[0].mxu0
    %v2262 = vadd.f32 %v2092, %v2261
    %2263 = vdwg.mxu0
    %2264 = vmatprep.subr.bf16.mxu0 0
    %2265 = vmatpush1.bf16.msra.mxu0 %v2010
    %2266 = vmatprep.subr.bf16.mxu0 0
    %2267 = vmatpush1.bf16.msra.mxu0 %v2015
    %2268 = vmatprep.subr.bf16.mxu0 0
    %2269 = vmatpush1.bf16.msra.mxu0 %v2020
    %2270 = vmatprep.subr.bf16.mxu0 0
    %2271 = vmatpush1.bf16.msra.mxu0 %v2025
    %2272 = vmatprep.subr.bf16.mxu0 0
    %2273 = vmatpush1.bf16.msra.mxu0 %v2030
    %2274 = vmatprep.subr.bf16.mxu0 0
    %2275 = vmatpush1.bf16.msra.mxu0 %v2035
    %2276 = vmatprep.subr.bf16.mxu0 0
    %2277 = vmatpush1.bf16.msra.mxu0 %v2040
    %2278 = vmatprep.subr.bf16.mxu0 0
    %2279 = vmatpush1.bf16.msra.mxu0 %v2045
    %2280 = vmatprep.subr.bf16.mxu0 0
    %2281 = vmatpush1.bf16.msra.mxu0 0
    %2282 = vmatprep.subr.bf16.mxu0 0
    %2283 = vmatpush1.bf16.msra.mxu0 0
    %2284 = vmatprep.subr.bf16.mxu0 0
    %2285 = vmatpush1.bf16.msra.mxu0 0
    %2286 = vmatprep.subr.bf16.mxu0 0
    %2287 = vmatpush1.bf16.msra.mxu0 0
    %2288 = vmatprep.subr.bf16.mxu0 0
    %2289 = vmatpush1.bf16.msra.mxu0 0
    %2290 = vmatprep.subr.bf16.mxu0 0
    %2291 = vmatpush1.bf16.msra.mxu0 0
    %2292 = vmatprep.subr.bf16.mxu0 0
    %2293 = vmatpush1.bf16.msra.mxu0 0
    %2294 = vmatprep.subr.bf16.mxu0 0
    %2295 = vmatpush1.bf16.msra.mxu0 0
    %2296 = vmatprep.mubr.bf16.mxu0 0
    %2297 = vmatmul.mubr.bf16.gmra.mrb[0].mxu0 %v2110
    %v2298 = vpop.f32.mrb[0].mxu0
    %v2299 = vadd.f32 %v2057, %v2298
    %v2300 = vpop.f32.mrb[0].mxu0
    %v2301 = vpop.f32.mrb[0].mxu0
    %v2302 = vadd.f32 %v2062, %v2301
    %v2303 = vpop.f32.mrb[0].mxu0
    %2304 = vmatprep.mubr.bf16.mxu0 0
    %2305 = vmatmul.mubr.bf16.gmra.mrb[0].mxu0 %v2111
    %v2306 = vpop.f32.mrb[0].mxu0
    %v2307 = vadd.f32 %v2067, %v2306
    %v2308 = vpop.f32.mrb[0].mxu0
    %v2309 = vpop.f32.mrb[0].mxu0
    %v2310 = vadd.f32 %v2072, %v2309
    %v2311 = vpop.f32.mrb[0].mxu0
    %2312 = vmatprep.mubr.bf16.mxu0 0
    %2313 = vmatmul.mubr.bf16.gmra.mrb[0].mxu0 %v2112
    %v2314 = vpop.f32.mrb[0].mxu0
    %v2315 = vadd.f32 %v2077, %v2314
    %v2316 = vpop.f32.mrb[0].mxu0
    %v2317 = vpop.f32.mrb[0].mxu0
    %v2318 = vadd.f32 %v2082, %v2317
    %v2319 = vpop.f32.mrb[0].mxu0
    %2320 = vmatprep.mubr.bf16.mxu0 0
    %2321 = vmatmul.mubr.bf16.gmra.mrb[0].mxu0 %v2113
    %v2322 = vpop.f32.mrb[0].mxu0
    %v2323 = vadd.f32 %v2087, %v2322
    %v2324 = vpop.f32.mrb[0].mxu0
    %v2325 = vpop.f32.mrb[0].mxu0
    %v2326 = vadd.f32 %v2092, %v2325
    %v2327 = vpop.f32.mrb[0].mxu0
    %2328 = vdwg.mxu0
    %v2329 = vmax.f32 %v2153, 0.0
    %v2330 = vmax.f32 %v2155, 0.0
    %v2331 = vmax.f32 %v2226, 0.0
    %v2332 = vmax.f32 %v2228, 0.0
    %v2333 = vmax.f32 %v2299, 0.0
    %v2334 = vmax.f32 %v2157, 0.0
    %v2335 = vmax.f32 %v2159, 0.0
    %v2336 = vmax.f32 %v2230, 0.0
    %v2337 = vmax.f32 %v2232, 0.0
    %v2338 = vmax.f32 %v2302, 0.0
    %v2339 = vmax.f32 %v2163, 0.0
    %v2340 = vmax.f32 %v2165, 0.0
    %v2341 = vmax.f32 %v2236, 0.0
    %v2342 = vmax.f32 %v2238, 0.0
    %v2343 = vmax.f32 %v2307, 0.0
    %v2344 = vmax.f32 %v2167, 0.0
    %v2345 = vmax.f32 %v2169, 0.0
    %v2346 = vmax.f32 %v2240, 0.0
    %v2347 = vmax.f32 %v2242, 0.0
    %v2348 = vmax.f32 %v2310, 0.0
    %v2349 = vmax.f32 %v2173, 0.0
    %v2350 = vmax.f32 %v2175, 0.0
    %v2351 = vmax.f32 %v2246, 0.0
    %v2352 = vmax.f32 %v2248, 0.0
    %v2353 = vmax.f32 %v2315, 0.0
    %v2354 = vmax.f32 %v2177, 0.0
    %v2355 = vmax.f32 %v2179, 0.0
    %v2356 = vmax.f32 %v2250, 0.0
    %v2357 = vmax.f32 %v2252, 0.0
    %v2358 = vmax.f32 %v2318, 0.0
    %v2359 = vmax.f32 %v2183, 0.0
    %v2360 = vmax.f32 %v2185, 0.0
    %v2361 = vmax.f32 %v2256, 0.0
    %v2362 = vmax.f32 %v2258, 0.0
    %v2363 = vmax.f32 %v2323, 0.0
    %v2364 = vmax.f32 %v2187, 0.0
    %v2365 = vmax.f32 %v2189, 0.0
    %v2366 = vmax.f32 %v2260, 0.0
    %v2367 = vmax.f32 %v2262, 0.0
    %v2368 = vmax.f32 %v2326, 0.0
    %v2369 = vld [vmem:[%s7] sm:$0xff]
    %v2370 = vld [vmem:[%s7 + $0x8] sm:$0xff]
    %v2371 = vld [vmem:[%s7 + $0x10] sm:$0xff]
    %v2372 = vld [vmem:[%s7 + $0x18] sm:$0xff]
    %v2373 = vld [vmem:[%s7 + $0x20] sm:$0xff]
    %v2374 = vld [vmem:[%s7 + $0x28] sm:$0xff]
    %v2375 = vld [vmem:[%s7 + $0x30] sm:$0xff]
    %v2376 = vld [vmem:[%s7 + $0x38] sm:$0xff]
    %2378 = vset.pattern.permute.xlu0 0
    %2379 = vperm.xlu0 %2378, %v2369
    %v2380 = vpop.permute.xlu0 %2379
    %2383 = vset.pattern.permute.xlu0 0
    %2384 = vperm.xlu0 %2383, %v2370
    %v2385 = vpop.permute.xlu0 %2384
    %2388 = vset.pattern.permute.xlu0 0
    %2389 = vperm.xlu0 %2388, %v2371
    %v2390 = vpop.permute.xlu0 %2389
    %2393 = vset.pattern.permute.xlu0 0
    %2394 = vperm.xlu0 %2393, %v2372
    %v2395 = vpop.permute.xlu0 %2394
    %2398 = vset.pattern.permute.xlu0 0
    %2399 = vperm.xlu0 %2398, %v2373
    %v2400 = vpop.permute.xlu0 %2399
    %2403 = vset.pattern.permute.xlu0 0
    %2404 = vperm.xlu0 %2403, %v2374
    %v2405 = vpop.permute.xlu0 %2404
    %2408 = vset.pattern.permute.xlu0 0
    %2409 = vperm.xlu0 %2408, %v2375
    %v2410 = vpop.permute.xlu0 %2409
    %2413 = vset.pattern.permute.xlu0 0
    %2414 = vperm.xlu0 %2413, %v2376
    %v2415 = vpop.permute.xlu0 %2414
    %v2417 = vmul.f32 %v2329, %v2380
    %v2418 = vmul.f32 %v2330, %v2380
    %v2419 = vmul.f32 %v2331, %v2380
    %v2420 = vmul.f32 %v2332, %v2380
    %v2421 = vmul.f32 %v2333, %v2380
    %v2422 = vmul.f32 %v2334, %v2385
    %v2423 = vmul.f32 %v2335, %v2385
    %v2424 = vmul.f32 %v2336, %v2385
    %v2425 = vmul.f32 %v2337, %v2385
    %v2426 = vmul.f32 %v2338, %v2385
    %v2427 = vmul.f32 %v2339, %v2390
    %v2428 = vmul.f32 %v2340, %v2390
    %v2429 = vmul.f32 %v2341, %v2390
    %v2430 = vmul.f32 %v2342, %v2390
    %v2431 = vmul.f32 %v2343, %v2390
    %v2432 = vmul.f32 %v2344, %v2395
    %v2433 = vmul.f32 %v2345, %v2395
    %v2434 = vmul.f32 %v2346, %v2395
    %v2435 = vmul.f32 %v2347, %v2395
    %v2436 = vmul.f32 %v2348, %v2395
    %v2437 = vmul.f32 %v2349, %v2400
    %v2438 = vmul.f32 %v2350, %v2400
    %v2439 = vmul.f32 %v2351, %v2400
    %v2440 = vmul.f32 %v2352, %v2400
    %v2441 = vmul.f32 %v2353, %v2400
    %v2442 = vmul.f32 %v2354, %v2405
    %v2443 = vmul.f32 %v2355, %v2405
    %v2444 = vmul.f32 %v2356, %v2405
    %v2445 = vmul.f32 %v2357, %v2405
    %v2446 = vmul.f32 %v2358, %v2405
    %v2447 = vmul.f32 %v2359, %v2410
    %v2448 = vmul.f32 %v2360, %v2410
    %v2449 = vmul.f32 %v2361, %v2410
    %v2450 = vmul.f32 %v2362, %v2410
    %v2451 = vmul.f32 %v2363, %v2410
    %v2452 = vmul.f32 %v2364, %v2415
    %v2453 = vmul.f32 %v2365, %v2415
    %v2454 = vmul.f32 %v2366, %v2415
    %v2455 = vmul.f32 %v2367, %v2415
    %v2456 = vmul.f32 %v2368, %v2415
    %v2457 = vadd.f32 %v2417, %v2422
    %v2458 = vadd.f32 %v2457, %v2427
    %v2459 = vadd.f32 %v2458, %v2432
    %v2460 = vadd.f32 %v2459, %v2437
    %v2461 = vadd.f32 %v2460, %v2442
    %v2462 = vadd.f32 %v2461, %v2447
    %v2463 = vadd.f32 %v2462, %v2452
    %v2464 = vrot.slane %v2463, 4
    %v2465 = vadd.f32 %v2463, %v2464
    %v2466 = vrot.slane %v2465, 2
    %v2467 = vadd.f32 %v2465, %v2466
    %v2468 = vrot.slane %v2467, 1
    %v2469 = vadd.f32 %v2467, %v2468
    %v2470 = vadd.f32 %v2418, %v2423
    %v2471 = vadd.f32 %v2470, %v2428
    %v2472 = vadd.f32 %v2471, %v2433
    %v2473 = vadd.f32 %v2472, %v2438
    %v2474 = vadd.f32 %v2473, %v2443
    %v2475 = vadd.f32 %v2474, %v2448
    %v2476 = vadd.f32 %v2475, %v2453
    %v2477 = vrot.slane %v2476, 4
    %v2478 = vadd.f32 %v2476, %v2477
    %v2479 = vrot.slane %v2478, 2
    %v2480 = vadd.f32 %v2478, %v2479
    %v2481 = vrot.slane %v2480, 1
    %v2482 = vadd.f32 %v2480, %v2481
    %v2483 = vadd.f32 %v2419, %v2424
    %v2484 = vadd.f32 %v2483, %v2429
    %v2485 = vadd.f32 %v2484, %v2434
    %v2486 = vadd.f32 %v2485, %v2439
    %v2487 = vadd.f32 %v2486, %v2444
    %v2488 = vadd.f32 %v2487, %v2449
    %v2489 = vadd.f32 %v2488, %v2454
    %v2490 = vrot.slane %v2489, 4
    %v2491 = vadd.f32 %v2489, %v2490
    %v2492 = vrot.slane %v2491, 2
    %v2493 = vadd.f32 %v2491, %v2492
    %v2494 = vrot.slane %v2493, 1
    %v2495 = vadd.f32 %v2493, %v2494
    %v2496 = vadd.f32 %v2420, %v2425
    %v2497 = vadd.f32 %v2496, %v2430
    %v2498 = vadd.f32 %v2497, %v2435
    %v2499 = vadd.f32 %v2498, %v2440
    %v2500 = vadd.f32 %v2499, %v2445
    %v2501 = vadd.f32 %v2500, %v2450
    %v2502 = vadd.f32 %v2501, %v2455
    %v2503 = vrot.slane %v2502, 4
    %v2504 = vadd.f32 %v2502, %v2503
    %v2505 = vrot.slane %v2504, 2
    %v2506 = vadd.f32 %v2504, %v2505
    %v2507 = vrot.slane %v2506, 1
    %v2508 = vadd.f32 %v2506, %v2507
    %vm2509 = vcmask 719872
    %v2510 = vsel %vm2509, %v2421, 0.0
    %v2511 = vsel %vm2509, %v2426, 0.0
    %v2512 = vadd.f32 %v2510, %v2511
    %v2513 = vsel %vm2509, %v2431, 0.0
    %v2514 = vadd.f32 %v2512, %v2513
    %v2515 = vsel %vm2509, %v2436, 0.0
    %v2516 = vadd.f32 %v2514, %v2515
    %v2517 = vsel %vm2509, %v2441, 0.0
    %v2518 = vadd.f32 %v2516, %v2517
    %v2519 = vsel %vm2509, %v2446, 0.0
    %v2520 = vadd.f32 %v2518, %v2519
    %v2521 = vsel %vm2509, %v2451, 0.0
    %v2522 = vadd.f32 %v2520, %v2521
    %v2523 = vsel %vm2509, %v2456, 0.0
    %v2524 = vadd.f32 %v2522, %v2523
    %v2525 = vrot.slane %v2524, 4
    %v2526 = vadd.f32 %v2524, %v2525
    %v2527 = vrot.slane %v2526, 2
    %v2528 = vadd.f32 %v2526, %v2527
    %v2529 = vrot.slane %v2528, 1
    %v2530 = vadd.f32 %v2528, %v2529
    %v2531 = vld [vmem:[#allocation2] sm:$0x1]
    %2533 = vset.pattern.permute.xlu0 0
    %2534 = vperm.xlu0 %2533, %v2531
    %v2535 = vpop.permute.xlu0 %2534
    %v2537 = vlaneseq
    %v2538 = vshrl.u32 %v2537, 7
    %v2539 = vsub.s32 0, %v2538
    %v2540 = vrot.slane %v2535, %v2539
    %v2541 = vadd.f32 %v2469, %v2540
    %v2542 = vadd.f32 %v2482, %v2540
    %v2543 = vadd.f32 %v2495, %v2540
    %v2544 = vadd.f32 %v2508, %v2540
    %v2545 = vadd.f32 %v2530, %v2540
    %v2551 = vcombine.low %v2541, %v2542
    %v2552 = vcombine.low %v2543, %v2544
    %v2554 = vunpack.c.l.s4 1966171168
    %v2555 = vunpack.c.0.s8 %v2554
    %v2556 = vlaneseq
    %v2557 = vshrl.u32 %v2556, 7
    %v2558 = vsub.s32 %v2555, %v2557
    %v2559 = vrot.slane %v2551, %v2558
    %v2561 = vunpack.c.l.s4 1966171168
    %v2562 = vunpack.c.0.s8 %v2561
    %v2563 = vlaneseq
    %v2564 = vshrl.u32 %v2563, 7
    %v2565 = vsub.s32 %v2562, %v2564
    %v2566 = vrot.slane %v2552, %v2565
    %v2568 = vunpack.c.l.s4 1966171168
    %v2569 = vunpack.c.0.s8 %v2568
    %v2570 = vlaneseq
    %v2571 = vshrl.u32 %v2570, 7
    %v2572 = vsub.s32 %v2569, %v2571
    %v2573 = vrot.slane %v2545, %v2572
    %v2574 = vcombine.low %v2559, %v2566
    %v2576 = vunpack.c.l.s4 1966171168
    %v2577 = vunpack.c.0.s8 %v2576
    %v2578 = vlaneseq
    %v2579 = vshrl.u32 %v2578, 7
    %v2580 = vsub.s32 %v2577, %v2579
    %v2581 = vrot.slane %v2574, %v2580
    %v2583 = vunpack.c.l.s4 1966171168
    %v2584 = vunpack.c.0.s8 %v2583
    %v2585 = vlaneseq
    %v2586 = vshrl.u32 %v2585, 7
    %v2587 = vsub.s32 %v2584, %v2586
    %v2588 = vrot.slane %v2573, %v2587
    %v2589 = vcombine.low %v2581, %v2588
    %v2591 = vlaneseq
    %vm2592 = vcmp.ge.s32.totalorder %v2591, 0
    %vm2593 = vcmp.lt.s32.totalorder %v2591, 600
    %vm2594 = vmand %vm2592, %vm2593
    %2595 = vst.msk [vmem:[#allocation3] sm:$0x1f] %vm2594, %v2589
    // Predicated region
    $region38: #{_mlp_forward_impl.1} parent=1 // pred_check
      _
    $region39: #{_mlp_forward_impl.1} parent=1 // pred_check_branch
      %2597 = sbr.rel (0) target = $region41
    $region40: #{_mlp_forward_impl.1} parent=1 // pred_region
      %s2599 = ssub.s32 80, 80
      %2600 = vsyncadd [#allocation4], %s2599
      %s2602 = sshll.u32 [#allocation3], 4
      %s2603 = int_to_ptr.vmem [resolvable:$true] %s2602
      %2605 = dma.vmem_to_hbm [thread:$0]  %s2603, 80, %s9, [#allocation4]
    $region41: #{_mlp_forward_impl.1} parent=1 // pred_fallthru
      _
    // Predicated region
    $region42: #{_mlp_forward_impl.1} parent=1 // pred_check
      _
    $region43: #{_mlp_forward_impl.1} parent=1 // pred_check_branch
      %2607 = sbr.rel (0) target = $region45
    $region44: #{_mlp_forward_impl.1} parent=1 // pred_region
      %2608 = dma.done [#allocation4], 80
    $region45: #{_mlp_forward_impl.1} parent=1 // pred_fallthru
      _
    %2609 = vsyncpa [#allocation4], 1

// kernel: _mlp_forward_impl.1
$region0: #{_mlp_forward_impl.1}
  #allocation0 [shape = 'u32[]', space=smem, size = 0x4, offset = 0x4, fixed_abs, tag = 'smem constant byte address 0x4 - core index']
  #allocation1 [shape = 'u32[144,128]{1,0:T(1,128)}', space=vmem, size = 0x12000, scoped, tag = 'internal scratch']
  #allocation2 [shape = 'f32[1,1]{1,0:T(1,128)S(1)}', space=vmem, size = 0x200, scoped, tag = 'scoped memory for _mlp_forward_impl.1']
  %s0 = inlined_call_operand.vmem [shape: f32[600,32], index: 0, kind: input, shape index: {}]
  %s1 = inlined_call_operand.vmem [shape: bf16[256,32], index: 1, kind: input, shape index: {}]
  %s2 = inlined_call_operand.vmem [shape: f32[256,1], index: 2, kind: input, shape index: {}]
  %s3 = inlined_call_operand.vmem [shape: bf16[128,256], index: 3, kind: input, shape index: {}]
  %s4 = inlined_call_operand.vmem [shape: f32[128,1], index: 4, kind: input, shape index: {}]
  %s5 = inlined_call_operand.vmem [shape: bf16[64,128], index: 5, kind: input, shape index: {}]
  %s6 = inlined_call_operand.vmem [shape: f32[64,1], index: 6, kind: input, shape index: {}]
  %s7 = inlined_call_operand.vmem [shape: f32[64,1], index: 7, kind: input, shape index: {}]
  %s8 = inlined_call_operand.<no memory space> [shape: f32[1,1], index: 8, kind: input, shape index: {}]
  %s9 = inlined_call_operand.hbm [shape: f32[1,600], index: 9, kind: output, shape index: {}]
  %s10 = sld [smem:[#allocation0]]
  $region46: #{_mlp_forward_impl.1} parent=0
    _
  %s12 = ssub.s32 1, %s10
  %s13 = scalar_select 0, %s12, %s10
  %v14 = vstv %s8
  %15 = vst [vmem:[#allocation2] sm:$0x1] %v14
  $region1: #{_mlp_forward_impl.1} parent=0
    #allocation3 [shape = 'u8[2560]{0}', space=vmem, size = 0xc00, scoped, tag = 'output window, operand 0, single buffered']
    #allocation4 [shape = 's32[1]{0}', space=sflag, size = 0x4, scoped, tag = 'scoped memory for _mlp_forward_impl.1']
    %16 = vsyncpa [#allocation4], 0
    // Predicated region
    $region2: #{_mlp_forward_impl.1} parent=1 // pred_check
      _
    $region3: #{_mlp_forward_impl.1} parent=1 // pred_check_branch
      %18 = sbr.rel (0) target = $region5
    $region4: #{_mlp_forward_impl.1} parent=1 // pred_region
      _
    $region5: #{_mlp_forward_impl.1} parent=1 // pred_fallthru
      _
    // Predicated region
    $region6: #{_mlp_forward_impl.1} parent=1 // pred_check
      _
    $region7: #{_mlp_forward_impl.1} parent=1 // pred_check_branch
      %20 = sbr.rel (0) target = $region9
    $region8: #{_mlp_forward_impl.1} parent=1 // pred_region
      _
    $region9: #{_mlp_forward_impl.1} parent=1 // pred_fallthru
      _
    // Predicated region
    $region10: #{_mlp_forward_impl.1} parent=1 // pred_check
      _
    $region11: #{_mlp_forward_impl.1} parent=1 // pred_check_branch
      %22 = sbr.rel (0) target = $region13
    $region12: #{_mlp_forward_impl.1} parent=1 // pred_region
      _
    $region13: #{_mlp_forward_impl.1} parent=1 // pred_fallthru
      _
    // Predicated region
    $region14: #{_mlp_forward_impl.1} parent=1 // pred_check
      _
    $region15: #{_mlp_forward_impl.1} parent=1 // pred_check_branch
      %24 = sbr.rel (0) target = $region17
    $region16: #{_mlp_forward_impl.1} parent=1 // pred_region
      _
    $region17: #{_mlp_forward_impl.1} parent=1 // pred_fallthru
      _
    // Predicated region
    $region18: #{_mlp_forward_impl.1} parent=1 // pred_check
      _
    $region19: #{_mlp_forward_impl.1} parent=1 // pred_check_branch
      %26 = sbr.rel (0) target = $region21
    $region20: #{_mlp_forward_impl.1} parent=1 // pred_region
      _
    $region21: #{_mlp_forward_impl.1} parent=1 // pred_fallthru
      _
    // Predicated region
    $region22: #{_mlp_forward_impl.1} parent=1 // pred_check
      _
    $region23: #{_mlp_forward_impl.1} parent=1 // pred_check_branch
      %28 = sbr.rel (0) target = $region25
    $region24: #{_mlp_forward_impl.1} parent=1 // pred_region
      _
    $region25: #{_mlp_forward_impl.1} parent=1 // pred_fallthru
      _
    // Predicated region
    $region26: #{_mlp_forward_impl.1} parent=1 // pred_check
      _
    $region27: #{_mlp_forward_impl.1} parent=1 // pred_check_branch
      %30 = sbr.rel (0) target = $region29
    $region28: #{_mlp_forward_impl.1} parent=1 // pred_region
      _
    $region29: #{_mlp_forward_impl.1} parent=1 // pred_fallthru
      _
    // Predicated region
    $region30: #{_mlp_forward_impl.1} parent=1 // pred_check
      _
    $region31: #{_mlp_forward_impl.1} parent=1 // pred_check_branch
      %32 = sbr.rel (0) target = $region33
    $region32: #{_mlp_forward_impl.1} parent=1 // pred_region
      _
    $region33: #{_mlp_forward_impl.1} parent=1 // pred_fallthru
      _
    // Predicated region
    $region34: #{_mlp_forward_impl.1} parent=1 // pred_check
      _
    $region35: #{_mlp_forward_impl.1} parent=1 // pred_check_branch
      %34 = sbr.rel (0) target = $region37
    $region36: #{_mlp_forward_impl.1} parent=1 // pred_region
      _
    $region37: #{_mlp_forward_impl.1} parent=1 // pred_fallthru
      _
    %v36 = vld [vmem:[%s0] sm:$0xff]
    %v37 = vld [vmem:[%s0 + $0x8] sm:$0xff]
    %v38 = vld [vmem:[%s0 + $0x10] sm:$0xff]
    %v39 = vld [vmem:[%s0 + $0x18] sm:$0xff]
    %v40 = vld [vmem:[%s0 + $0x20] sm:$0xff]
    %v41 = vld [vmem:[%s0 + $0x28] sm:$0xff]
    %v42 = vld [vmem:[%s0 + $0x30] sm:$0xff]
    %v43 = vld [vmem:[%s0 + $0x38] sm:$0xff]
    %v44 = vld [vmem:[%s0 + $0x40] sm:$0xff]
    %v45 = vld [vmem:[%s0 + $0x48] sm:$0xff]
    %v46 = vld [vmem:[%s0 + $0x50] sm:$0xff]
    %v47 = vld [vmem:[%s0 + $0x58] sm:$0xff]
    %v48 = vld [vmem:[%s0 + $0x60] sm:$0xff]
    %v49 = vld [vmem:[%s0 + $0x68] sm:$0xff]
    %v50 = vld [vmem:[%s0 + $0x70] sm:$0xff]
    %v51 = vld [vmem:[%s0 + $0x78] sm:$0xff]
    %v52 = vld [vmem:[%s0 + $0x80] sm:$0xff]
    %v53 = vld [vmem:[%s0 + $0x88] sm:$0xff]
    %v54 = vld [vmem:[%s0 + $0x90] sm:$0xff]
    %v55 = vld [vmem:[%s0 + $0x98] sm:$0xff]
    %v56 = vld [vmem:[%s0 + $0xa0] sm:$0xff]
    %v57 = vld [vmem:[%s0 + $0xa8] sm:$0xff]
    %v58 = vld [vmem:[%s0 + $0xb0] sm:$0xff]
    %v59 = vld [vmem:[%s0 + $0xb8] sm:$0xff]
    %v60 = vld [vmem:[%s0 + $0xc0] sm:$0xff]
    %v61 = vld [vmem:[%s0 + $0xc8] sm:$0xff]
    %v62 = vld [vmem:[%s0 + $0xd0] sm:$0xff]
    %v63 = vld [vmem:[%s0 + $0xd8] sm:$0xff]
    %v64 = vld [vmem:[%s0 + $0xe0] sm:$0xff]
    %v65 = vld [vmem:[%s0 + $0xe8] sm:$0xff]
    %v66 = vld [vmem:[%s0 + $0xf0] sm:$0xff]
    %v67 = vld [vmem:[%s0 + $0xf8] sm:$0xff]
    %v68 = vld [vmem:[%s0 + $0x100] sm:$0xff]
    %v69 = vld [vmem:[%s0 + $0x108] sm:$0xff]
    %v70 = vld [vmem:[%s0 + $0x110] sm:$0xff]
    %v71 = vld [vmem:[%s0 + $0x118] sm:$0xff]
    %v72 = vld [vmem:[%s0 + $0x120] sm:$0xff]
    %v73 = vld [vmem:[%s0 + $0x128] sm:$0xff]
    %v74 = vld [vmem:[%s0 + $0x130] sm:$0xff]
    %v75 = vld [vmem:[%s0 + $0x138] sm:$0xff]
    %v76 = vld [vmem:[%s0 + $0x140] sm:$0xff]
    %v77 = vld [vmem:[%s0 + $0x148] sm:$0xff]
    %v78 = vld [vmem:[%s0 + $0x150] sm:$0xff]
    %v79 = vld [vmem:[%s0 + $0x158] sm:$0xff]
    %v80 = vld [vmem:[%s0 + $0x160] sm:$0xff]
    %v81 = vld [vmem:[%s0 + $0x168] sm:$0xff]
    %v82 = vld [vmem:[%s0 + $0x170] sm:$0xff]
    %v83 = vld [vmem:[%s0 + $0x178] sm:$0xff]
    %v84 = vld [vmem:[%s0 + $0x180] sm:$0xff]
    %v85 = vld [vmem:[%s0 + $0x188] sm:$0xff]
    %v86 = vld [vmem:[%s0 + $0x190] sm:$0xff]
    %v87 = vld [vmem:[%s0 + $0x198] sm:$0xff]
    %v88 = vld [vmem:[%s0 + $0x1a0] sm:$0xff]
    %v89 = vld [vmem:[%s0 + $0x1a8] sm:$0xff]
    %v90 = vld [vmem:[%s0 + $0x1b0] sm:$0xff]
    %v91 = vld [vmem:[%s0 + $0x1b8] sm:$0xff]
    %v92 = vld [vmem:[%s0 + $0x1c0] sm:$0xff]
    %v93 = vld [vmem:[%s0 + $0x1c8] sm:$0xff]
    %v94 = vld [vmem:[%s0 + $0x1d0] sm:$0xff]
    %v95 = vld [vmem:[%s0 + $0x1d8] sm:$0xff]
    %v96 = vld [vmem:[%s0 + $0x1e0] sm:$0xff]
    %v97 = vld [vmem:[%s0 + $0x1e8] sm:$0xff]
    %v98 = vld [vmem:[%s0 + $0x1f0] sm:$0xff]
    %v99 = vld [vmem:[%s0 + $0x1f8] sm:$0xff]
    %v100 = vld [vmem:[%s0 + $0x200] sm:$0xff]
    %v101 = vld [vmem:[%s0 + $0x208] sm:$0xff]
    %v102 = vld [vmem:[%s0 + $0x210] sm:$0xff]
    %v103 = vld [vmem:[%s0 + $0x218] sm:$0xff]
    %v104 = vld [vmem:[%s0 + $0x220] sm:$0xff]
    %v105 = vld [vmem:[%s0 + $0x228] sm:$0xff]
    %v106 = vld [vmem:[%s0 + $0x230] sm:$0xff]
    %v107 = vld [vmem:[%s0 + $0x238] sm:$0xff]
    %v108 = vld [vmem:[%s0 + $0x240] sm:$0xff]
    %v109 = vld [vmem:[%s0 + $0x248] sm:$0xff]
    %v110 = vld [vmem:[%s0 + $0x250] sm:$0xff]
    %v111 = vpack.c.bf16 %v37, %v36
    %v112 = vpack.c.bf16 %v39, %v38
    %v113 = vpack.c.bf16 %v41, %v40
    %v114 = vpack.c.bf16 %v43, %v42
    %v115 = vpack.c.bf16 %v45, %v44
    %v116 = vpack.c.bf16 %v47, %v46
    %v117 = vpack.c.bf16 %v49, %v48
    %v118 = vpack.c.bf16 %v51, %v50
    %v119 = vpack.c.bf16 %v53, %v52
    %v120 = vpack.c.bf16 %v55, %v54
    %v121 = vpack.c.bf16 %v57, %v56
    %v122 = vpack.c.bf16 %v59, %v58
    %v123 = vpack.c.bf16 %v61, %v60
    %v124 = vpack.c.bf16 %v63, %v62
    %v125 = vpack.c.bf16 %v65, %v64
    %v126 = vpack.c.bf16 %v67, %v66
    %v127 = vpack.c.bf16 %v69, %v68
    %v128 = vpack.c.bf16 %v71, %v70
    %v129 = vpack.c.bf16 %v73, %v72
    %v130 = vpack.c.bf16 %v75, %v74
    %v131 = vpack.c.bf16 %v77, %v76
    %v132 = vpack.c.bf16 %v79, %v78
    %v133 = vpack.c.bf16 %v81, %v80
    %v134 = vpack.c.bf16 %v83, %v82
    %v135 = vpack.c.bf16 %v85, %v84
    %v136 = vpack.c.bf16 %v87, %v86
    %v137 = vpack.c.bf16 %v89, %v88
    %v138 = vpack.c.bf16 %v91, %v90
    %v139 = vpack.c.bf16 %v93, %v92
    %v140 = vpack.c.bf16 %v95, %v94
    %v141 = vpack.c.bf16 %v97, %v96
    %v142 = vpack.c.bf16 %v99, %v98
    %v143 = vpack.c.bf16 %v101, %v100
    %v144 = vpack.c.bf16 %v103, %v102
    %v145 = vpack.c.bf16 %v105, %v104
    %v146 = vpack.c.bf16 %v107, %v106
    %v147 = vpack.c.bf16 %v109, %v108
    %v148 = vpack.c.bf16 %v110, %v110
    %v149 = vld [vmem:[%s1] sm:$0xf]
    %v150 = vld [vmem:[%s1 + $0x4] sm:$0xf]
    %v151 = vld [vmem:[%s1 + $0x8] sm:$0xf]
    %v152 = vld [vmem:[%s1 + $0xc] sm:$0xf]
    %v153 = vld [vmem:[%s1 + $0x10] sm:$0xf]
    %v154 = vld [vmem:[%s1 + $0x14] sm:$0xf]
    %v155 = vld [vmem:[%s1 + $0x18] sm:$0xf]
    %v156 = vld [vmem:[%s1 + $0x1c] sm:$0xf]
    %v157 = vld [vmem:[%s1 + $0x20] sm:$0xf]
    %v158 = vld [vmem:[%s1 + $0x24] sm:$0xf]
    %v159 = vld [vmem:[%s1 + $0x28] sm:$0xf]
    %v160 = vld [vmem:[%s1 + $0x2c] sm:$0xf]
    %v161 = vld [vmem:[%s1 + $0x30] sm:$0xf]
    %v162 = vld [vmem:[%s1 + $0x34] sm:$0xf]
    %v163 = vld [vmem:[%s1 + $0x38] sm:$0xf]
    %v164 = vld [vmem:[%s1 + $0x3c] sm:$0xf]
    %v165 = vld [vmem:[%s1 + $0x40] sm:$0xf]
    %v166 = vld [vmem:[%s1 + $0x44] sm:$0xf]
    %v167 = vld [vmem:[%s1 + $0x48] sm:$0xf]
    %v168 = vld [vmem:[%s1 + $0x4c] sm:$0xf]
    %v169 = vld [vmem:[%s1 + $0x50] sm:$0xf]
    %v170 = vld [vmem:[%s1 + $0x54] sm:$0xf]
    %v171 = vld [vmem:[%s1 + $0x58] sm:$0xf]
    %v172 = vld [vmem:[%s1 + $0x5c] sm:$0xf]
    %v173 = vld [vmem:[%s1 + $0x60] sm:$0xf]
    %v174 = vld [vmem:[%s1 + $0x64] sm:$0xf]
    %v175 = vld [vmem:[%s1 + $0x68] sm:$0xf]
    %v176 = vld [vmem:[%s1 + $0x6c] sm:$0xf]
    %v177 = vld [vmem:[%s1 + $0x70] sm:$0xf]
    %v178 = vld [vmem:[%s1 + $0x74] sm:$0xf]
    %v179 = vld [vmem:[%s1 + $0x78] sm:$0xf]
    %v180 = vld [vmem:[%s1 + $0x7c] sm:$0xf]
    %v181 = vld [vmem:[%s2] sm:$0xff]
    %v182 = vld [vmem:[%s2 + $0x8] sm:$0xff]
    %v183 = vld [vmem:[%s2 + $0x10] sm:$0xff]
    %v184 = vld [vmem:[%s2 + $0x18] sm:$0xff]
    %v185 = vld [vmem:[%s2 + $0x20] sm:$0xff]
    %v186 = vld [vmem:[%s2 + $0x28] sm:$0xff]
    %v187 = vld [vmem:[%s2 + $0x30] sm:$0xff]
    %v188 = vld [vmem:[%s2 + $0x38] sm:$0xff]
    %v189 = vld [vmem:[%s2 + $0x40] sm:$0xff]
    %v190 = vld [vmem:[%s2 + $0x48] sm:$0xff]
    %v191 = vld [vmem:[%s2 + $0x50] sm:$0xff]
    %v192 = vld [vmem:[%s2 + $0x58] sm:$0xff]
    %v193 = vld [vmem:[%s2 + $0x60] sm:$0xff]
    %v194 = vld [vmem:[%s2 + $0x68] sm:$0xff]
    %v195 = vld [vmem:[%s2 + $0x70] sm:$0xff]
    %v196 = vld [vmem:[%s2 + $0x78] sm:$0xff]
    %v197 = vld [vmem:[%s2 + $0x80] sm:$0xff]
    %v198 = vld [vmem:[%s2 + $0x88] sm:$0xff]
    %v199 = vld [vmem:[%s2 + $0x90] sm:$0xff]
    %v200 = vld [vmem:[%s2 + $0x98] sm:$0xff]
    %v201 = vld [vmem:[%s2 + $0xa0] sm:$0xff]
    %v202 = vld [vmem:[%s2 + $0xa8] sm:$0xff]
    %v203 = vld [vmem:[%s2 + $0xb0] sm:$0xff]
    %v204 = vld [vmem:[%s2 + $0xb8] sm:$0xff]
    %v205 = vld [vmem:[%s2 + $0xc0] sm:$0xff]
    %v206 = vld [vmem:[%s2 + $0xc8] sm:$0xff]
    %v207 = vld [vmem:[%s2 + $0xd0] sm:$0xff]
    %v208 = vld [vmem:[%s2 + $0xd8] sm:$0xff]
    %v209 = vld [vmem:[%s2 + $0xe0] sm:$0xff]
    %v210 = vld [vmem:[%s2 + $0xe8] sm:$0xff]
    %v211 = vld [vmem:[%s2 + $0xf0] sm:$0xff]
    %v212 = vld [vmem:[%s2 + $0xf8] sm:$0xff]
    %214 = vset.pattern.permute.xlu0 0
    %215 = vperm.xlu0 %214, %v181
    %v216 = vpop.permute.xlu0 %215
    %219 = vset.pattern.permute.xlu0 0
    %220 = vperm.xlu0 %219, %v182
    %v221 = vpop.permute.xlu0 %220
    %224 = vset.pattern.permute.xlu0 0
    %225 = vperm.xlu0 %224, %v183
    %v226 = vpop.permute.xlu0 %225
    %229 = vset.pattern.permute.xlu0 0
    %230 = vperm.xlu0 %229, %v184
    %v231 = vpop.permute.xlu0 %230
    %234 = vset.pattern.permute.xlu0 0
    %235 = vperm.xlu0 %234, %v185
    %v236 = vpop.permute.xlu0 %235
    %239 = vset.pattern.permute.xlu0 0
    %240 = vperm.xlu0 %239, %v186
    %v241 = vpop.permute.xlu0 %240
    %244 = vset.pattern.permute.xlu0 0
    %245 = vperm.xlu0 %244, %v187
    %v246 = vpop.permute.xlu0 %245
    %249 = vset.pattern.permute.xlu0 0
    %250 = vperm.xlu0 %249, %v188
    %v251 = vpop.permute.xlu0 %250
    %254 = vset.pattern.permute.xlu0 0
    %255 = vperm.xlu0 %254, %v189
    %v256 = vpop.permute.xlu0 %255
    %259 = vset.pattern.permute.xlu0 0
    %260 = vperm.xlu0 %259, %v190
    %v261 = vpop.permute.xlu0 %260
    %264 = vset.pattern.permute.xlu0 0
    %265 = vperm.xlu0 %264, %v191
    %v266 = vpop.permute.xlu0 %265
    %269 = vset.pattern.permute.xlu0 0
    %270 = vperm.xlu0 %269, %v192
    %v271 = vpop.permute.xlu0 %270
    %274 = vset.pattern.permute.xlu0 0
    %275 = vperm.xlu0 %274, %v193
    %v276 = vpop.permute.xlu0 %275
    %279 = vset.pattern.permute.xlu0 0
    %280 = vperm.xlu0 %279, %v194
    %v281 = vpop.permute.xlu0 %280
    %284 = vset.pattern.permute.xlu0 0
    %285 = vperm.xlu0 %284, %v195
    %v286 = vpop.permute.xlu0 %285
    %289 = vset.pattern.permute.xlu0 0
    %290 = vperm.xlu0 %289, %v196
    %v291 = vpop.permute.xlu0 %290
    %294 = vset.pattern.permute.xlu0 0
    %295 = vperm.xlu0 %294, %v197
    %v296 = vpop.permute.xlu0 %295
    %299 = vset.pattern.permute.xlu0 0
    %300 = vperm.xlu0 %299, %v198
    %v301 = vpop.permute.xlu0 %300
    %304 = vset.pattern.permute.xlu0 0
    %305 = vperm.xlu0 %304, %v199
    %v306 = vpop.permute.xlu0 %305
    %309 = vset.pattern.permute.xlu0 0
    %310 = vperm.xlu0 %309, %v200
    %v311 = vpop.permute.xlu0 %310
    %314 = vset.pattern.permute.xlu0 0
    %315 = vperm.xlu0 %314, %v201
    %v316 = vpop.permute.xlu0 %315
    %319 = vset.pattern.permute.xlu0 0
    %320 = vperm.xlu0 %319, %v202
    %v321 = vpop.permute.xlu0 %320
    %324 = vset.pattern.permute.xlu0 0
    %325 = vperm.xlu0 %324, %v203
    %v326 = vpop.permute.xlu0 %325
    %329 = vset.pattern.permute.xlu0 0
    %330 = vperm.xlu0 %329, %v204
    %v331 = vpop.permute.xlu0 %330
    %334 = vset.pattern.permute.xlu0 0
    %335 = vperm.xlu0 %334, %v205
    %v336 = vpop.permute.xlu0 %335
    %339 = vset.pattern.permute.xlu0 0
    %340 = vperm.xlu0 %339, %v206
    %v341 = vpop.permute.xlu0 %340
    %344 = vset.pattern.permute.xlu0 0
    %345 = vperm.xlu0 %344, %v207
    %v346 = vpop.permute.xlu0 %345
    %349 = vset.pattern.permute.xlu0 0
    %350 = vperm.xlu0 %349, %v208
    %v351 = vpop.permute.xlu0 %350
    %354 = vset.pattern.permute.xlu0 0
    %355 = vperm.xlu0 %354, %v209
    %v356 = vpop.permute.xlu0 %355
    %359 = vset.pattern.permute.xlu0 0
    %360 = vperm.xlu0 %359, %v210
    %v361 = vpop.permute.xlu0 %360
    %364 = vset.pattern.permute.xlu0 0
    %365 = vperm.xlu0 %364, %v211
    %v366 = vpop.permute.xlu0 %365
    %369 = vset.pattern.permute.xlu0 0
    %370 = vperm.xlu0 %369, %v212
    %v371 = vpop.permute.xlu0 %370
    %v405 = vunpack.c.l.b16 %v149
    %v406 = vunpack.c.l.b16 %v150
    %v407 = vunpack.c.l.b16 %v151
    %v408 = vunpack.c.l.b16 %v152
    %v409 = vunpack.c.l.b16 %v153
    %v410 = vunpack.c.l.b16 %v154
    %v411 = vunpack.c.l.b16 %v155
    %v412 = vunpack.c.l.b16 %v156
    %v413 = vunpack.c.l.b16 %v157
    %v414 = vunpack.c.l.b16 %v158
    %v415 = vunpack.c.l.b16 %v159
    %v416 = vunpack.c.l.b16 %v160
    %v417 = vunpack.c.l.b16 %v161
    %v418 = vunpack.c.l.b16 %v162
    %v419 = vunpack.c.l.b16 %v163
    %v420 = vunpack.c.l.b16 %v164
    %v421 = vunpack.c.l.b16 %v165
    %v422 = vunpack.c.l.b16 %v166
    %v423 = vunpack.c.l.b16 %v167
    %v424 = vunpack.c.l.b16 %v168
    %v425 = vunpack.c.l.b16 %v169
    %v426 = vunpack.c.l.b16 %v170
    %v427 = vunpack.c.l.b16 %v171
    %v428 = vunpack.c.l.b16 %v172
    %v429 = vunpack.c.l.b16 %v173
    %v430 = vunpack.c.l.b16 %v174
    %v431 = vunpack.c.l.b16 %v175
    %v432 = vunpack.c.l.b16 %v176
    %v433 = vunpack.c.l.b16 %v177
    %v434 = vunpack.c.l.b16 %v178
    %v435 = vunpack.c.l.b16 %v179
    %v436 = vunpack.c.l.b16 %v180
    %v437 = vpack.c.b16 %v406, %v405
    %v438 = vpack.c.b16 %v408, %v407
    %v439 = vpack.c.b16 %v410, %v409
    %v440 = vpack.c.b16 %v412, %v411
    %v441 = vpack.c.b16 %v414, %v413
    %v442 = vpack.c.b16 %v416, %v415
    %v443 = vpack.c.b16 %v418, %v417
    %v444 = vpack.c.b16 %v420, %v419
    %v445 = vpack.c.b16 %v422, %v421
    %v446 = vpack.c.b16 %v424, %v423
    %v447 = vpack.c.b16 %v426, %v425
    %v448 = vpack.c.b16 %v428, %v427
    %v449 = vpack.c.b16 %v430, %v429
    %v450 = vpack.c.b16 %v432, %v431
    %v451 = vpack.c.b16 %v434, %v433
    %v452 = vpack.c.b16 %v436, %v435
    %vm453 = vcmask 261120
    %v455 = vsel %vm453, %v437, 0
    %v458 = vsel %vm453, %v438, 0
    %v461 = vsel %vm453, %v439, 0
    %v464 = vsel %vm453, %v440, 0
    %v467 = vsel %vm453, %v441, 0
    %v470 = vsel %vm453, %v442, 0
    %v473 = vsel %vm453, %v443, 0
    %v476 = vsel %vm453, %v444, 0
    %v479 = vsel %vm453, %v445, 0
    %v482 = vsel %vm453, %v446, 0
    %v485 = vsel %vm453, %v447, 0
    %v488 = vsel %vm453, %v448, 0
    %v491 = vsel %vm453, %v449, 0
    %v494 = vsel %vm453, %v450, 0
    %v497 = vsel %vm453, %v451, 0
    %v500 = vsel %vm453, %v452, 0
    %v503 = vsel %vm453, %v111, 0
    %v506 = vsel %vm453, %v112, 0
    %v509 = vsel %vm453, %v113, 0
    %v512 = vsel %vm453, %v114, 0
    %v515 = vsel %vm453, %v115, 0
    %v518 = vsel %vm453, %v116, 0
    %v521 = vsel %vm453, %v117, 0
    %v524 = vsel %vm453, %v118, 0
    %v527 = vsel %vm453, %v119, 0
    %v530 = vsel %vm453, %v120, 0
    %v533 = vsel %vm453, %v121, 0
    %v536 = vsel %vm453, %v122, 0
    %v539 = vsel %vm453, %v123, 0
    %v542 = vsel %vm453, %v124, 0
    %v545 = vsel %vm453, %v125, 0
    %v548 = vsel %vm453, %v126, 0
    %v551 = vsel %vm453, %v127, 0
    %v554 = vsel %vm453, %v128, 0
    %v557 = vsel %vm453, %v129, 0
    %v560 = vsel %vm453, %v130, 0
    %v563 = vsel %vm453, %v131, 0
    %v566 = vsel %vm453, %v132, 0
    %v569 = vsel %vm453, %v133, 0
    %v572 = vsel %vm453, %v134, 0
    %v575 = vsel %vm453, %v135, 0
    %v578 = vsel %vm453, %v136, 0
    %v581 = vsel %vm453, %v137, 0
    %v584 = vsel %vm453, %v138, 0
    %v587 = vsel %vm453, %v139, 0
    %v590 = vsel %vm453, %v140, 0
    %v593 = vsel %vm453, %v141, 0
    %v596 = vsel %vm453, %v142, 0
    %v599 = vsel %vm453, %v143, 0
    %v602 = vsel %vm453, %v144, 0
    %v605 = vsel %vm453, %v145, 0
    %v608 = vsel %vm453, %v146, 0
    %v611 = vsel %vm453, %v147, 0
    %v614 = vsel %vm453, %v148, 0
    %616 = vmatprep.subr.bf16.mxu0 0
    %617 = vmatpush1.bf16.xpose.msra.mxu0 %v503
    %618 = vmatprep.subr.bf16.mxu0 0
    %619 = vmatpush1.bf16.xpose.msra.mxu0 %v506
    %620 = vmatprep.subr.bf16.mxu0 0
    %621 = vmatpush1.bf16.xpose.msra.mxu0 %v509
    %622 = vmatprep.subr.bf16.mxu0 0
    %623 = vmatpush1.bf16.xpose.msra.mxu0 %v512
    %624 = vmatprep.subr.bf16.mxu0 0
    %625 = vmatpush1.bf16.xpose.msra.mxu0 %v515
    %626 = vmatprep.subr.bf16.mxu0 0
    %627 = vmatpush1.bf16.xpose.msra.mxu0 %v518
    %628 = vmatprep.subr.bf16.mxu0 0
    %629 = vmatpush1.bf16.xpose.msra.mxu0 %v521
    %630 = vmatprep.subr.bf16.mxu0 0
    %631 = vmatpush1.bf16.xpose.msra.mxu0 %v524
    %632 = vmatprep.subr.bf16.mxu0 0
    %633 = vmatpush1.bf16.xpose.msra.mxu0 %v527
    %634 = vmatprep.subr.bf16.mxu0 0
    %635 = vmatpush1.bf16.xpose.msra.mxu0 %v530
    %636 = vmatprep.subr.bf16.mxu0 0
    %637 = vmatpush1.bf16.xpose.msra.mxu0 %v533
    %638 = vmatprep.subr.bf16.mxu0 0
    %639 = vmatpush1.bf16.xpose.msra.mxu0 %v536
    %640 = vmatprep.subr.bf16.mxu0 0
    %641 = vmatpush1.bf16.xpose.msra.mxu0 %v539
    %642 = vmatprep.subr.bf16.mxu0 0
    %643 = vmatpush1.bf16.xpose.msra.mxu0 %v542
    %644 = vmatprep.subr.bf16.mxu0 0
    %645 = vmatpush1.bf16.xpose.msra.mxu0 %v545
    %646 = vmatprep.subr.bf16.mxu0 0
    %647 = vmatpush1.bf16.xpose.msra.mxu0 %v548
    %648 = vmatprep.mubr.bf16.mxu0 0
    %649 = vmatmul.mubr.bf16.gmra.mrb[0].mxu0 %v455
    %v650 = vpop.f32.mrb[0].mxu0
    %v651 = vadd.f32 %v216, %v650
    %v652 = vpop.f32.mrb[0].mxu0
    %v653 = vadd.f32 %v216, %v652
    %v654 = vpop.f32.mrb[0].mxu0
    %v655 = vadd.f32 %v221, %v654
    %v656 = vpop.f32.mrb[0].mxu0
    %v657 = vadd.f32 %v221, %v656
    %658 = vmatprep.mubr.bf16.mxu0 0
    %659 = vmatmul.mubr.bf16.gmra.mrb[0].mxu0 %v458
    %v660 = vpop.f32.mrb[0].mxu0
    %v661 = vadd.f32 %v226, %v660
    %v662 = vpop.f32.mrb[0].mxu0
    %v663 = vadd.f32 %v226, %v662
    %v664 = vpop.f32.mrb[0].mxu0
    %v665 = vadd.f32 %v231, %v664
    %v666 = vpop.f32.mrb[0].mxu0
    %v667 = vadd.f32 %v231, %v666
    %668 = vmatprep.mubr.bf16.mxu0 0
    %669 = vmatmul.mubr.bf16.gmra.mrb[0].mxu0 %v461
    %v670 = vpop.f32.mrb[0].mxu0
    %v671 = vadd.f32 %v236, %v670
    %v672 = vpop.f32.mrb[0].mxu0
    %v673 = vadd.f32 %v236, %v672
    %v674 = vpop.f32.mrb[0].mxu0
    %v675 = vadd.f32 %v241, %v674
    %v676 = vpop.f32.mrb[0].mxu0
    %v677 = vadd.f32 %v241, %v676
    %678 = vmatprep.mubr.bf16.mxu0 0
    %679 = vmatmul.mubr.bf16.gmra.mrb[0].mxu0 %v464
    %v680 = vpop.f32.mrb[0].mxu0
    %v681 = vadd.f32 %v246, %v680
    %v682 = vpop.f32.mrb[0].mxu0
    %v683 = vadd.f32 %v246, %v682
    %v684 = vpop.f32.mrb[0].mxu0
    %v685 = vadd.f32 %v251, %v684
    %v686 = vpop.f32.mrb[0].mxu0
    %v687 = vadd.f32 %v251, %v686
    %688 = vmatprep.mubr.bf16.mxu0 0
    %689 = vmatmul.mubr.bf16.gmra.mrb[0].mxu0 %v467
    %v690 = vpop.f32.mrb[0].mxu0
    %v691 = vadd.f32 %v256, %v690
    %v692 = vpop.f32.mrb[0].mxu0
    %v693 = vadd.f32 %v256, %v692
    %v694 = vpop.f32.mrb[0].mxu0
    %v695 = vadd.f32 %v261, %v694
    %v696 = vpop.f32.mrb[0].mxu0
    %v697 = vadd.f32 %v261, %v696
    %698 = vmatprep.mubr.bf16.mxu0 0
    %699 = vmatmul.mubr.bf16.gmra.mrb[0].mxu0 %v470
    %v700 = vpop.f32.mrb[0].mxu0
    %v701 = vadd.f32 %v266, %v700
    %v702 = vpop.f32.mrb[0].mxu0
    %v703 = vadd.f32 %v266, %v702
    %v704 = vpop.f32.mrb[0].mxu0
    %v705 = vadd.f32 %v271, %v704
    %v706 = vpop.f32.mrb[0].mxu0
    %v707 = vadd.f32 %v271, %v706
    %708 = vmatprep.mubr.bf16.mxu0 0
    %709 = vmatmul.mubr.bf16.gmra.mrb[0].mxu0 %v473
    %v710 = vpop.f32.mrb[0].mxu0
    %v711 = vadd.f32 %v276, %v710
    %v712 = vpop.f32.mrb[0].mxu0
    %v713 = vadd.f32 %v276, %v712
    %v714 = vpop.f32.mrb[0].mxu0
    %v715 = vadd.f32 %v281, %v714
    %v716 = vpop.f32.mrb[0].mxu0
    %v717 = vadd.f32 %v281, %v716
    %718 = vmatprep.mubr.bf16.mxu0 0
    %719 = vmatmul.mubr.bf16.gmra.mrb[0].mxu0 %v476
    %v720 = vpop.f32.mrb[0].mxu0
    %v721 = vadd.f32 %v286, %v720
    %v722 = vpop.f32.mrb[0].mxu0
    %v723 = vadd.f32 %v286, %v722
    %v724 = vpop.f32.mrb[0].mxu0
    %v725 = vadd.f32 %v291, %v724
    %v726 = vpop.f32.mrb[0].mxu0
    %v727 = vadd.f32 %v291, %v726
    %728 = vmatprep.mubr.bf16.mxu0 0
    %729 = vmatmul.mubr.bf16.gmra.mrb[0].mxu0 %v479
    %v730 = vpop.f32.mrb[0].mxu0
    %v731 = vadd.f32 %v296, %v730
    %v732 = vpop.f32.mrb[0].mxu0
    %v733 = vadd.f32 %v296, %v732
    %v734 = vpop.f32.mrb[0].mxu0
    %v735 = vadd.f32 %v301, %v734
    %v736 = vpop.f32.mrb[0].mxu0
    %v737 = vadd.f32 %v301, %v736
    %738 = vmatprep.mubr.bf16.mxu0 0
    %739 = vmatmul.mubr.bf16.gmra.mrb[0].mxu0 %v482
    %v740 = vpop.f32.mrb[0].mxu0
    %v741 = vadd.f32 %v306, %v740
    %v742 = vpop.f32.mrb[0].mxu0
    %v743 = vadd.f32 %v306, %v742
    %v744 = vpop.f32.mrb[0].mxu0
    %v745 = vadd.f32 %v311, %v744
    %v746 = vpop.f32.mrb[0].mxu0
    %v747 = vadd.f32 %v311, %v746
    %748 = vmatprep.mubr.bf16.mxu0 0
    %749 = vmatmul.mubr.bf16.gmra.mrb[0].mxu0 %v485
    %v750 = vpop.f32.mrb[0].mxu0
    %v751 = vadd.f32 %v316, %v750
    %v752 = vpop.f32.mrb[0].mxu0
    %v753 = vadd.f32 %v316, %v752
    %v754 = vpop.f32.mrb[0].mxu0
    %v755 = vadd.f32 %v321, %v754
    %v756 = vpop.f32.mrb[0].mxu0
    %v757 = vadd.f32 %v321, %v756
    %758 = vmatprep.mubr.bf16.mxu0 0
    %759 = vmatmul.mubr.bf16.gmra.mrb[0].mxu0 %v488
    %v760 = vpop.f32.mrb[0].mxu0
    %v761 = vadd.f32 %v326, %v760
    %v762 = vpop.f32.mrb[0].mxu0
    %v763 = vadd.f32 %v326, %v762
    %v764 = vpop.f32.mrb[0].mxu0
    %v765 = vadd.f32 %v331, %v764
    %v766 = vpop.f32.mrb[0].mxu0
    %v767 = vadd.f32 %v331, %v766
    %768 = vmatprep.mubr.bf16.mxu0 0
    %769 = vmatmul.mubr.bf16.gmra.mrb[0].mxu0 %v491
    %v770 = vpop.f32.mrb[0].mxu0
    %v771 = vadd.f32 %v336, %v770
    %v772 = vpop.f32.mrb[0].mxu0
    %v773 = vadd.f32 %v336, %v772
    %v774 = vpop.f32.mrb[0].mxu0
    %v775 = vadd.f32 %v341, %v774
    %v776 = vpop.f32.mrb[0].mxu0
    %v777 = vadd.f32 %v341, %v776
    %778 = vmatprep.mubr.bf16.mxu0 0
    %779 = vmatmul.mubr.bf16.gmra.mrb[0].mxu0 %v494
    %v780 = vpop.f32.mrb[0].mxu0
    %v781 = vadd.f32 %v346, %v780
    %v782 = vpop.f32.mrb[0].mxu0
    %v783 = vadd.f32 %v346, %v782
    %v784 = vpop.f32.mrb[0].mxu0
    %v785 = vadd.f32 %v351, %v784
    %v786 = vpop.f32.mrb[0].mxu0
    %v787 = vadd.f32 %v351, %v786
    %788 = vmatprep.mubr.bf16.mxu0 0
    %789 = vmatmul.mubr.bf16.gmra.mrb[0].mxu0 %v497
    %v790 = vpop.f32.mrb[0].mxu0
    %v791 = vadd.f32 %v356, %v790
    %v792 = vpop.f32.mrb[0].mxu0
    %v793 = vadd.f32 %v356, %v792
    %v794 = vpop.f32.mrb[0].mxu0
    %v795 = vadd.f32 %v361, %v794
    %v796 = vpop.f32.mrb[0].mxu0
    %v797 = vadd.f32 %v361, %v796
    %798 = vmatprep.mubr.bf16.mxu0 0
    %799 = vmatmul.mubr.bf16.gmra.mrb[0].mxu0 %v500
    %v800 = vpop.f32.mrb[0].mxu0
    %v801 = vadd.f32 %v366, %v800
    %v802 = vpop.f32.mrb[0].mxu0
    %v803 = vadd.f32 %v366, %v802
    %v804 = vpop.f32.mrb[0].mxu0
    %v805 = vadd.f32 %v371, %v804
    %v806 = vpop.f32.mrb[0].mxu0
    %v807 = vadd.f32 %v371, %v806
    %808 = vdwg.mxu0
    %809 = vmatprep.subr.bf16.mxu0 0
    %810 = vmatpush1.bf16.xpose.msra.mxu0 %v551
    %811 = vmatprep.subr.bf16.mxu0 0
    %812 = vmatpush1.bf16.xpose.msra.mxu0 %v554
    %813 = vmatprep.subr.bf16.mxu0 0
    %814 = vmatpush1.bf16.xpose.msra.mxu0 %v557
    %815 = vmatprep.subr.bf16.mxu0 0
    %816 = vmatpush1.bf16.xpose.msra.mxu0 %v560
    %817 = vmatprep.subr.bf16.mxu0 0
    %818 = vmatpush1.bf16.xpose.msra.mxu0 %v563
    %819 = vmatprep.subr.bf16.mxu0 0
    %820 = vmatpush1.bf16.xpose.msra.mxu0 %v566
    %821 = vmatprep.subr.bf16.mxu0 0
    %822 = vmatpush1.bf16.xpose.msra.mxu0 %v569
    %823 = vmatprep.subr.bf16.mxu0 0
    %824 = vmatpush1.bf16.xpose.msra.mxu0 %v572
    %825 = vmatprep.subr.bf16.mxu0 0
    %826 = vmatpush1.bf16.xpose.msra.mxu0 %v575
    %827 = vmatprep.subr.bf16.mxu0 0
    %828 = vmatpush1.bf16.xpose.msra.mxu0 %v578
    %829 = vmatprep.subr.bf16.mxu0 0
    %830 = vmatpush1.bf16.xpose.msra.mxu0 %v581
    %831 = vmatprep.subr.bf16.mxu0 0
    %832 = vmatpush1.bf16.xpose.msra.mxu0 %v584
    %833 = vmatprep.subr.bf16.mxu0 0
    %834 = vmatpush1.bf16.xpose.msra.mxu0 %v587
    %835 = vmatprep.subr.bf16.mxu0 0
    %836 = vmatpush1.bf16.xpose.msra.mxu0 %v590
    %837 = vmatprep.subr.bf16.mxu0 0
    %838 = vmatpush1.bf16.xpose.msra.mxu0 %v593
    %839 = vmatprep.subr.bf16.mxu0 0
    %840 = vmatpush1.bf16.xpose.msra.mxu0 %v596
    %841 = vmatprep.mubr.bf16.mxu0 0
    %842 = vmatmul.mubr.bf16.gmra.mrb[0].mxu0 %v455
    %v843 = vpop.f32.mrb[0].mxu0
    %v844 = vadd.f32 %v216, %v843
    %v845 = vpop.f32.mrb[0].mxu0
    %v846 = vadd.f32 %v216, %v845
    %v847 = vpop.f32.mrb[0].mxu0
    %v848 = vadd.f32 %v221, %v847
    %v849 = vpop.f32.mrb[0].mxu0
    %v850 = vadd.f32 %v221, %v849
    %851 = vmatprep.mubr.bf16.mxu0 0
    %852 = vmatmul.mubr.bf16.gmra.mrb[0].mxu0 %v458
    %v853 = vpop.f32.mrb[0].mxu0
    %v854 = vadd.f32 %v226, %v853
    %v855 = vpop.f32.mrb[0].mxu0
    %v856 = vadd.f32 %v226, %v855
    %v857 = vpop.f32.mrb[0].mxu0
    %v858 = vadd.f32 %v231, %v857
    %v859 = vpop.f32.mrb[0].mxu0
    %v860 = vadd.f32 %v231, %v859
    %861 = vmatprep.mubr.bf16.mxu0 0
    %862 = vmatmul.mubr.bf16.gmra.mrb[0].mxu0 %v461
    %v863 = vpop.f32.mrb[0].mxu0
    %v864 = vadd.f32 %v236, %v863
    %v865 = vpop.f32.mrb[0].mxu0
    %v866 = vadd.f32 %v236, %v865
    %v867 = vpop.f32.mrb[0].mxu0
    %v868 = vadd.f32 %v241, %v867
    %v869 = vpop.f32.mrb[0].mxu0
    %v870 = vadd.f32 %v241, %v869
    %871 = vmatprep.mubr.bf16.mxu0 0
    %872 = vmatmul.mubr.bf16.gmra.mrb[0].mxu0 %v464
    %v873 = vpop.f32.mrb[0].mxu0
    %v874 = vadd.f32 %v246, %v873
    %v875 = vpop.f32.mrb[0].mxu0
    %v876 = vadd.f32 %v246, %v875
    %v877 = vpop.f32.mrb[0].mxu0
    %v878 = vadd.f32 %v251, %v877
    %v879 = vpop.f32.mrb[0].mxu0
    %v880 = vadd.f32 %v251, %v879
    %881 = vmatprep.mubr.bf16.mxu0 0
    %882 = vmatmul.mubr.bf16.gmra.mrb[0].mxu0 %v467
    %v883 = vpop.f32.mrb[0].mxu0
    %v884 = vadd.f32 %v256, %v883
    %v885 = vpop.f32.mrb[0].mxu0
    %v886 = vadd.f32 %v256, %v885
    %v887 = vpop.f32.mrb[0].mxu0
    %v888 = vadd.f32 %v261, %v887
    %v889 = vpop.f32.mrb[0].mxu0
    %v890 = vadd.f32 %v261, %v889
    %891 = vmatprep.mubr.bf16.mxu0 0
    %892 = vmatmul.mubr.bf16.gmra.mrb[0].mxu0 %v470
    %v893 = vpop.f32.mrb[0].mxu0
    %v894 = vadd.f32 %v266, %v893
    %v895 = vpop.f32.mrb[0].mxu0
    %v896 = vadd.f32 %v266, %v895
    %v897 = vpop.f32.mrb[0].mxu0
    %v898 = vadd.f32 %v271, %v897
    %v899 = vpop.f32.mrb[0].mxu0
    %v900 = vadd.f32 %v271, %v899
    %901 = vmatprep.mubr.bf16.mxu0 0
    %902 = vmatmul.mubr.bf16.gmra.mrb[0].mxu0 %v473
    %v903 = vpop.f32.mrb[0].mxu0
    %v904 = vadd.f32 %v276, %v903
    %v905 = vpop.f32.mrb[0].mxu0
    %v906 = vadd.f32 %v276, %v905
    %v907 = vpop.f32.mrb[0].mxu0
    %v908 = vadd.f32 %v281, %v907
    %v909 = vpop.f32.mrb[0].mxu0
    %v910 = vadd.f32 %v281, %v909
    %911 = vmatprep.mubr.bf16.mxu0 0
    %912 = vmatmul.mubr.bf16.gmra.mrb[0].mxu0 %v476
    %v913 = vpop.f32.mrb[0].mxu0
    %v914 = vadd.f32 %v286, %v913
    %v915 = vpop.f32.mrb[0].mxu0
    %v916 = vadd.f32 %v286, %v915
    %v917 = vpop.f32.mrb[0].mxu0
    %v918 = vadd.f32 %v291, %v917
    %v919 = vpop.f32.mrb[0].mxu0
    %v920 = vadd.f32 %v291, %v919
    %921 = vmatprep.mubr.bf16.mxu0 0
    %922 = vmatmul.mubr.bf16.gmra.mrb[0].mxu0 %v479
    %v923 = vpop.f32.mrb[0].mxu0
    %v924 = vadd.f32 %v296, %v923
    %v925 = vpop.f32.mrb[0].mxu0
    %v926 = vadd.f32 %v296, %v925
    %v927 = vpop.f32.mrb[0].mxu0
    %v928 = vadd.f32 %v301, %v927
    %v929 = vpop.f32.mrb[0].mxu0
    %v930 = vadd.f32 %v301, %v929
    %931 = vmatprep.mubr.bf16.mxu0 0
    %932 = vmatmul.mubr.bf16.gmra.mrb[0].mxu0 %v482
    %v933 = vpop.f32.mrb[0].mxu0
    %v934 = vadd.f32 %v306, %v933
    %v935 = vpop.f32.mrb[0].mxu0
    %v936 = vadd.f32 %v306, %v935
    %v937 = vpop.f32.mrb[0].mxu0
    %v938 = vadd.f32 %v311, %v937
    %v939 = vpop.f32.mrb[0].mxu0
    %v940 = vadd.f32 %v311, %v939
    %941 = vmatprep.mubr.bf16.mxu0 0
    %942 = vmatmul.mubr.bf16.gmra.mrb[0].mxu0 %v485
    %v943 = vpop.f32.mrb[0].mxu0
    %v944 = vadd.f32 %v316, %v943
    %v945 = vpop.f32.mrb[0].mxu0
    %v946 = vadd.f32 %v316, %v945
    %v947 = vpop.f32.mrb[0].mxu0
    %v948 = vadd.f32 %v321, %v947
    %v949 = vpop.f32.mrb[0].mxu0
    %v950 = vadd.f32 %v321, %v949
    %951 = vmatprep.mubr.bf16.mxu0 0
    %952 = vmatmul.mubr.bf16.gmra.mrb[0].mxu0 %v488
    %v953 = vpop.f32.mrb[0].mxu0
    %v954 = vadd.f32 %v326, %v953
    %v955 = vpop.f32.mrb[0].mxu0
    %v956 = vadd.f32 %v326, %v955
    %v957 = vpop.f32.mrb[0].mxu0
    %v958 = vadd.f32 %v331, %v957
    %v959 = vpop.f32.mrb[0].mxu0
    %v960 = vadd.f32 %v331, %v959
    %961 = vmatprep.mubr.bf16.mxu0 0
    %962 = vmatmul.mubr.bf16.gmra.mrb[0].mxu0 %v491
    %v963 = vpop.f32.mrb[0].mxu0
    %v964 = vadd.f32 %v336, %v963
    %v965 = vpop.f32.mrb[0].mxu0
    %v966 = vadd.f32 %v336, %v965
    %v967 = vpop.f32.mrb[0].mxu0
    %v968 = vadd.f32 %v341, %v967
    %v969 = vpop.f32.mrb[0].mxu0
    %v970 = vadd.f32 %v341, %v969
    %971 = vmatprep.mubr.bf16.mxu0 0
    %972 = vmatmul.mubr.bf16.gmra.mrb[0].mxu0 %v494
    %v973 = vpop.f32.mrb[0].mxu0
    %v974 = vadd.f32 %v346, %v973
    %v975 = vpop.f32.mrb[0].mxu0
    %v976 = vadd.f32 %v346, %v975
    %v977 = vpop.f32.mrb[0].mxu0
    %v978 = vadd.f32 %v351, %v977
    %v979 = vpop.f32.mrb[0].mxu0
    %v980 = vadd.f32 %v351, %v979
    %981 = vmatprep.mubr.bf16.mxu0 0
    %982 = vmatmul.mubr.bf16.gmra.mrb[0].mxu0 %v497
    %v983 = vpop.f32.mrb[0].mxu0
    %v984 = vadd.f32 %v356, %v983
    %v985 = vpop.f32.mrb[0].mxu0
    %v986 = vadd.f32 %v356, %v985
    %v987 = vpop.f32.mrb[0].mxu0
    %v988 = vadd.f32 %v361, %v987
    %v989 = vpop.f32.mrb[0].mxu0
    %v990 = vadd.f32 %v361, %v989
    %991 = vmatprep.mubr.bf16.mxu0 0
    %992 = vmatmul.mubr.bf16.gmra.mrb[0].mxu0 %v500
    %v993 = vpop.f32.mrb[0].mxu0
    %v994 = vadd.f32 %v366, %v993
    %v995 = vpop.f32.mrb[0].mxu0
    %v996 = vadd.f32 %v366, %v995
    %v997 = vpop.f32.mrb[0].mxu0
    %v998 = vadd.f32 %v371, %v997
    %v999 = vpop.f32.mrb[0].mxu0
    %v1000 = vadd.f32 %v371, %v999
    %1001 = vdwg.mxu0
    %1002 = vmatprep.subr.bf16.mxu0 0
    %1003 = vmatpush1.bf16.xpose.msra.mxu0 %v599
    %1004 = vmatprep.subr.bf16.mxu0 0
    %1005 = vmatpush1.bf16.xpose.msra.mxu0 %v602
    %1006 = vmatprep.subr.bf16.mxu0 0
    %1007 = vmatpush1.bf16.xpose.msra.mxu0 %v605
    %1008 = vmatprep.subr.bf16.mxu0 0
    %1009 = vmatpush1.bf16.xpose.msra.mxu0 %v608
    %1010 = vmatprep.subr.bf16.mxu0 0
    %1011 = vmatpush1.bf16.xpose.msra.mxu0 %v611
    %1012 = vmatprep.subr.bf16.mxu0 0
    %1013 = vmatpush1.bf16.xpose.msra.mxu0 %v614
    %1014 = vmatprep.subr.bf16.mxu0 0
    %1015 = vmatpush1.bf16.xpose.msra.mxu0 0
    %1016 = vmatprep.subr.bf16.mxu0 0
    %1017 = vmatpush1.bf16.xpose.msra.mxu0 0
    %1018 = vmatprep.subr.bf16.mxu0 0
    %1019 = vmatpush1.bf16.xpose.msra.mxu0 0
    %1020 = vmatprep.subr.bf16.mxu0 0
    %1021 = vmatpush1.bf16.xpose.msra.mxu0 0
    %1022 = vmatprep.subr.bf16.mxu0 0
    %1023 = vmatpush1.bf16.xpose.msra.mxu0 0
    %1024 = vmatprep.subr.bf16.mxu0 0
    %1025 = vmatpush1.bf16.xpose.msra.mxu0 0
    %1026 = vmatprep.subr.bf16.mxu0 0
    %1027 = vmatpush1.bf16.xpose.msra.mxu0 0
    %1028 = vmatprep.subr.bf16.mxu0 0
    %1029 = vmatpush1.bf16.xpose.msra.mxu0 0
    %1030 = vmatprep.subr.bf16.mxu0 0
    %1031 = vmatpush1.bf16.xpose.msra.mxu0 0
    %1032 = vmatprep.subr.bf16.mxu0 0
    %1033 = vmatpush1.bf16.xpose.msra.mxu0 0
    %1034 = vmatprep.mubr.bf16.mxu0 0
    %1035 = vmatmul.mubr.bf16.gmra.mrb[0].mxu0 %v455
    %v1036 = vpop.f32.mrb[0].mxu0
    %v1037 = vadd.f32 %v216, %v1036
    %v1038 = vpop.f32.mrb[0].mxu0
    %v1039 = vpop.f32.mrb[0].mxu0
    %v1040 = vadd.f32 %v221, %v1039
    %v1041 = vpop.f32.mrb[0].mxu0
    %1042 = vmatprep.mubr.bf16.mxu0 0
    %1043 = vmatmul.mubr.bf16.gmra.mrb[0].mxu0 %v458
    %v1044 = vpop.f32.mrb[0].mxu0
    %v1045 = vadd.f32 %v226, %v1044
    %v1046 = vpop.f32.mrb[0].mxu0
    %v1047 = vpop.f32.mrb[0].mxu0
    %v1048 = vadd.f32 %v231, %v1047
    %v1049 = vpop.f32.mrb[0].mxu0
    %1050 = vmatprep.mubr.bf16.mxu0 0
    %1051 = vmatmul.mubr.bf16.gmra.mrb[0].mxu0 %v461
    %v1052 = vpop.f32.mrb[0].mxu0
    %v1053 = vadd.f32 %v236, %v1052
    %v1054 = vpop.f32.mrb[0].mxu0
    %v1055 = vpop.f32.mrb[0].mxu0
    %v1056 = vadd.f32 %v241, %v1055
    %v1057 = vpop.f32.mrb[0].mxu0
    %1058 = vmatprep.mubr.bf16.mxu0 0
    %1059 = vmatmul.mubr.bf16.gmra.mrb[0].mxu0 %v464
    %v1060 = vpop.f32.mrb[0].mxu0
    %v1061 = vadd.f32 %v246, %v1060
    %v1062 = vpop.f32.mrb[0].mxu0
    %v1063 = vpop.f32.mrb[0].mxu0
    %v1064 = vadd.f32 %v251, %v1063
    %v1065 = vpop.f32.mrb[0].mxu0
    %1066 = vmatprep.mubr.bf16.mxu0 0
    %1067 = vmatmul.mubr.bf16.gmra.mrb[0].mxu0 %v467
    %v1068 = vpop.f32.mrb[0].mxu0
    %v1069 = vadd.f32 %v256, %v1068
    %v1070 = vpop.f32.mrb[0].mxu0
    %v1071 = vpop.f32.mrb[0].mxu0
    %v1072 = vadd.f32 %v261, %v1071
    %v1073 = vpop.f32.mrb[0].mxu0
    %1074 = vmatprep.mubr.bf16.mxu0 0
    %1075 = vmatmul.mubr.bf16.gmra.mrb[0].mxu0 %v470
    %v1076 = vpop.f32.mrb[0].mxu0
    %v1077 = vadd.f32 %v266, %v1076
    %v1078 = vpop.f32.mrb[0].mxu0
    %v1079 = vpop.f32.mrb[0].mxu0
    %v1080 = vadd.f32 %v271, %v1079
    %v1081 = vpop.f32.mrb[0].mxu0
    %1082 = vmatprep.mubr.bf16.mxu0 0
    %1083 = vmatmul.mubr.bf16.gmra.mrb[0].mxu0 %v473
    %v1084 = vpop.f32.mrb[0].mxu0
    %v1085 = vadd.f32 %v276, %v1084
    %v1086 = vpop.f32.mrb[0].mxu0
    %v1087 = vpop.f32.mrb[0].mxu0
    %v1088 = vadd.f32 %v281, %v1087
    %v1089 = vpop.f32.mrb[0].mxu0
    %1090 = vmatprep.mubr.bf16.mxu0 0
    %1091 = vmatmul.mubr.bf16.gmra.mrb[0].mxu0 %v476
    %v1092 = vpop.f32.mrb[0].mxu0
    %v1093 = vadd.f32 %v286, %v1092
    %v1094 = vpop.f32.mrb[0].mxu0
    %v1095 = vpop.f32.mrb[0].mxu0
    %v1096 = vadd.f32 %v291, %v1095
    %v1097 = vpop.f32.mrb[0].mxu0
    %1098 = vmatprep.mubr.bf16.mxu0 0
    %1099 = vmatmul.mubr.bf16.gmra.mrb[0].mxu0 %v479
    %v1100 = vpop.f32.mrb[0].mxu0
    %v1101 = vadd.f32 %v296, %v1100
    %v1102 = vpop.f32.mrb[0].mxu0
    %v1103 = vpop.f32.mrb[0].mxu0
    %v1104 = vadd.f32 %v301, %v1103
    %v1105 = vpop.f32.mrb[0].mxu0
    %1106 = vmatprep.mubr.bf16.mxu0 0
    %1107 = vmatmul.mubr.bf16.gmra.mrb[0].mxu0 %v482
    %v1108 = vpop.f32.mrb[0].mxu0
    %v1109 = vadd.f32 %v306, %v1108
    %v1110 = vpop.f32.mrb[0].mxu0
    %v1111 = vpop.f32.mrb[0].mxu0
    %v1112 = vadd.f32 %v311, %v1111
    %v1113 = vpop.f32.mrb[0].mxu0
    %1114 = vmatprep.mubr.bf16.mxu0 0
    %1115 = vmatmul.mubr.bf16.gmra.mrb[0].mxu0 %v485
    %v1116 = vpop.f32.mrb[0].mxu0
    %v1117 = vadd.f32 %v316, %v1116
    %v1118 = vpop.f32.mrb[0].mxu0
    %v1119 = vpop.f32.mrb[0].mxu0
    %v1120 = vadd.f32 %v321, %v1119
    %v1121 = vpop.f32.mrb[0].mxu0
    %1122 = vmatprep.mubr.bf16.mxu0 0
    %1123 = vmatmul.mubr.bf16.gmra.mrb[0].mxu0 %v488
    %v1124 = vpop.f32.mrb[0].mxu0
    %v1125 = vadd.f32 %v326, %v1124
    %v1126 = vpop.f32.mrb[0].mxu0
    %v1127 = vpop.f32.mrb[0].mxu0
    %v1128 = vadd.f32 %v331, %v1127
    %v1129 = vpop.f32.mrb[0].mxu0
    %1130 = vmatprep.mubr.bf16.mxu0 0
    %1131 = vmatmul.mubr.bf16.gmra.mrb[0].mxu0 %v491
    %v1132 = vpop.f32.mrb[0].mxu0
    %v1133 = vadd.f32 %v336, %v1132
    %v1134 = vpop.f32.mrb[0].mxu0
    %v1135 = vpop.f32.mrb[0].mxu0
    %v1136 = vadd.f32 %v341, %v1135
    %v1137 = vpop.f32.mrb[0].mxu0
    %1138 = vmatprep.mubr.bf16.mxu0 0
    %1139 = vmatmul.mubr.bf16.gmra.mrb[0].mxu0 %v494
    %v1140 = vpop.f32.mrb[0].mxu0
    %v1141 = vadd.f32 %v346, %v1140
    %v1142 = vpop.f32.mrb[0].mxu0
    %v1143 = vpop.f32.mrb[0].mxu0
    %v1144 = vadd.f32 %v351, %v1143
    %v1145 = vpop.f32.mrb[0].mxu0
    %1146 = vmatprep.mubr.bf16.mxu0 0
    %1147 = vmatmul.mubr.bf16.gmra.mrb[0].mxu0 %v497
    %v1148 = vpop.f32.mrb[0].mxu0
    %v1149 = vadd.f32 %v356, %v1148
    %v1150 = vpop.f32.mrb[0].mxu0
    %v1151 = vpop.f32.mrb[0].mxu0
    %v1152 = vadd.f32 %v361, %v1151
    %v1153 = vpop.f32.mrb[0].mxu0
    %1154 = vmatprep.mubr.bf16.mxu0 0
    %1155 = vmatmul.mubr.bf16.gmra.mrb[0].mxu0 %v500
    %v1156 = vpop.f32.mrb[0].mxu0
    %v1157 = vadd.f32 %v366, %v1156
    %v1158 = vpop.f32.mrb[0].mxu0
    %v1159 = vpop.f32.mrb[0].mxu0
    %v1160 = vadd.f32 %v371, %v1159
    %v1161 = vpop.f32.mrb[0].mxu0
    %1162 = vdwg.mxu0
    %v1163 = vmax.f32 %v651, 0.0
    %v1164 = vmax.f32 %v653, 0.0
    %v1165 = vmax.f32 %v844, 0.0
    %v1166 = vmax.f32 %v846, 0.0
    %v1167 = vmax.f32 %v1037, 0.0
    %v1168 = vmax.f32 %v655, 0.0
    %v1169 = vmax.f32 %v657, 0.0
    %v1170 = vmax.f32 %v848, 0.0
    %v1171 = vmax.f32 %v850, 0.0
    %v1172 = vmax.f32 %v1040, 0.0
    %v1173 = vmax.f32 %v661, 0.0
    %v1174 = vmax.f32 %v663, 0.0
    %v1175 = vmax.f32 %v854, 0.0
    %v1176 = vmax.f32 %v856, 0.0
    %v1177 = vmax.f32 %v1045, 0.0
    %v1178 = vmax.f32 %v665, 0.0
    %v1179 = vmax.f32 %v667, 0.0
    %v1180 = vmax.f32 %v858, 0.0
    %v1181 = vmax.f32 %v860, 0.0
    %v1182 = vmax.f32 %v1048, 0.0
    %v1183 = vmax.f32 %v671, 0.0
    %v1184 = vmax.f32 %v673, 0.0
    %v1185 = vmax.f32 %v864, 0.0
    %v1186 = vmax.f32 %v866, 0.0
    %v1187 = vmax.f32 %v1053, 0.0
    %v1188 = vmax.f32 %v675, 0.0
    %v1189 = vmax.f32 %v677, 0.0
    %v1190 = vmax.f32 %v868, 0.0
    %v1191 = vmax.f32 %v870, 0.0
    %v1192 = vmax.f32 %v1056, 0.0
    %v1193 = vmax.f32 %v681, 0.0
    %v1194 = vmax.f32 %v683, 0.0
    %v1195 = vmax.f32 %v874, 0.0
    %v1196 = vmax.f32 %v876, 0.0
    %v1197 = vmax.f32 %v1061, 0.0
    %v1198 = vmax.f32 %v685, 0.0
    %v1199 = vmax.f32 %v687, 0.0
    %v1200 = vmax.f32 %v878, 0.0
    %v1201 = vmax.f32 %v880, 0.0
    %v1202 = vmax.f32 %v1064, 0.0
    %v1203 = vmax.f32 %v691, 0.0
    %v1204 = vmax.f32 %v693, 0.0
    %v1205 = vmax.f32 %v884, 0.0
    %v1206 = vmax.f32 %v886, 0.0
    %v1207 = vmax.f32 %v1069, 0.0
    %v1208 = vmax.f32 %v695, 0.0
    %v1209 = vmax.f32 %v697, 0.0
    %v1210 = vmax.f32 %v888, 0.0
    %v1211 = vmax.f32 %v890, 0.0
    %v1212 = vmax.f32 %v1072, 0.0
    %v1213 = vmax.f32 %v701, 0.0
    %v1214 = vmax.f32 %v703, 0.0
    %v1215 = vmax.f32 %v894, 0.0
    %v1216 = vmax.f32 %v896, 0.0
    %v1217 = vmax.f32 %v1077, 0.0
    %v1218 = vmax.f32 %v705, 0.0
    %v1219 = vmax.f32 %v707, 0.0
    %v1220 = vmax.f32 %v898, 0.0
    %v1221 = vmax.f32 %v900, 0.0
    %v1222 = vmax.f32 %v1080, 0.0
    %v1223 = vmax.f32 %v711, 0.0
    %v1224 = vmax.f32 %v713, 0.0
    %v1225 = vmax.f32 %v904, 0.0
    %v1226 = vmax.f32 %v906, 0.0
    %v1227 = vmax.f32 %v1085, 0.0
    %v1228 = vmax.f32 %v715, 0.0
    %v1229 = vmax.f32 %v717, 0.0
    %v1230 = vmax.f32 %v908, 0.0
    %v1231 = vmax.f32 %v910, 0.0
    %v1232 = vmax.f32 %v1088, 0.0
    %v1233 = vmax.f32 %v721, 0.0
    %v1234 = vmax.f32 %v723, 0.0
    %v1235 = vmax.f32 %v914, 0.0
    %v1236 = vmax.f32 %v916, 0.0
    %v1237 = vmax.f32 %v1093, 0.0
    %v1238 = vmax.f32 %v725, 0.0
    %v1239 = vmax.f32 %v727, 0.0
    %v1240 = vmax.f32 %v918, 0.0
    %v1241 = vmax.f32 %v920, 0.0
    %v1242 = vmax.f32 %v1096, 0.0
    %v1243 = vmax.f32 %v731, 0.0
    %v1244 = vmax.f32 %v733, 0.0
    %v1245 = vmax.f32 %v924, 0.0
    %v1246 = vmax.f32 %v926, 0.0
    %v1247 = vmax.f32 %v1101, 0.0
    %v1248 = vmax.f32 %v735, 0.0
    %v1249 = vmax.f32 %v737, 0.0
    %v1250 = vmax.f32 %v928, 0.0
    %v1251 = vmax.f32 %v930, 0.0
    %v1252 = vmax.f32 %v1104, 0.0
    %v1253 = vmax.f32 %v741, 0.0
    %v1254 = vmax.f32 %v743, 0.0
    %v1255 = vmax.f32 %v934, 0.0
    %v1256 = vmax.f32 %v936, 0.0
    %v1257 = vmax.f32 %v1109, 0.0
    %v1258 = vmax.f32 %v745, 0.0
    %v1259 = vmax.f32 %v747, 0.0
    %v1260 = vmax.f32 %v938, 0.0
    %v1261 = vmax.f32 %v940, 0.0
    %v1262 = vmax.f32 %v1112, 0.0
    %v1263 = vmax.f32 %v751, 0.0
    %v1264 = vmax.f32 %v753, 0.0
    %v1265 = vmax.f32 %v944, 0.0
    %v1266 = vmax.f32 %v946, 0.0
    %v1267 = vmax.f32 %v1117, 0.0
    %v1268 = vmax.f32 %v755, 0.0
    %v1269 = vmax.f32 %v757, 0.0
    %v1270 = vmax.f32 %v948, 0.0
    %v1271 = vmax.f32 %v950, 0.0
    %v1272 = vmax.f32 %v1120, 0.0
    %v1273 = vmax.f32 %v761, 0.0
    %v1274 = vmax.f32 %v763, 0.0
    %v1275 = vmax.f32 %v954, 0.0
    %v1276 = vmax.f32 %v956, 0.0
    %v1277 = vmax.f32 %v1125, 0.0
    %v1278 = vmax.f32 %v765, 0.0
    %v1279 = vmax.f32 %v767, 0.0
    %v1280 = vmax.f32 %v958, 0.0
    %v1281 = vmax.f32 %v960, 0.0
    %v1282 = vmax.f32 %v1128, 0.0
    %v1283 = vmax.f32 %v771, 0.0
    %v1284 = vmax.f32 %v773, 0.0
    %v1285 = vmax.f32 %v964, 0.0
    %v1286 = vmax.f32 %v966, 0.0
    %v1287 = vmax.f32 %v1133, 0.0
    %v1288 = vmax.f32 %v775, 0.0
    %v1289 = vmax.f32 %v777, 0.0
    %v1290 = vmax.f32 %v968, 0.0
    %v1291 = vmax.f32 %v970, 0.0
    %v1292 = vmax.f32 %v1136, 0.0
    %v1293 = vmax.f32 %v781, 0.0
    %v1294 = vmax.f32 %v783, 0.0
    %v1295 = vmax.f32 %v974, 0.0
    %v1296 = vmax.f32 %v976, 0.0
    %v1297 = vmax.f32 %v1141, 0.0
    %v1298 = vmax.f32 %v785, 0.0
    %v1299 = vmax.f32 %v787, 0.0
    %v1300 = vmax.f32 %v978, 0.0
    %v1301 = vmax.f32 %v980, 0.0
    %v1302 = vmax.f32 %v1144, 0.0
    %v1303 = vmax.f32 %v791, 0.0
    %v1304 = vmax.f32 %v793, 0.0
    %v1305 = vmax.f32 %v984, 0.0
    %v1306 = vmax.f32 %v986, 0.0
    %v1307 = vmax.f32 %v1149, 0.0
    %v1308 = vmax.f32 %v795, 0.0
    %v1309 = vmax.f32 %v797, 0.0
    %v1310 = vmax.f32 %v988, 0.0
    %v1311 = vmax.f32 %v990, 0.0
    %v1312 = vmax.f32 %v1152, 0.0
    %v1313 = vmax.f32 %v801, 0.0
    %v1314 = vmax.f32 %v803, 0.0
    %v1315 = vmax.f32 %v994, 0.0
    %v1316 = vmax.f32 %v996, 0.0
    %v1317 = vmax.f32 %v1157, 0.0
    %v1318 = vmax.f32 %v805, 0.0
    %v1319 = vmax.f32 %v807, 0.0
    %v1320 = vmax.f32 %v998, 0.0
    %v1321 = vmax.f32 %v1000, 0.0
    %v1322 = vmax.f32 %v1160, 0.0
    %v1323 = vld [vmem:[%s3] sm:$0xff]
    %v1324 = vld [vmem:[%s3 + $0x8] sm:$0xff]
    %v1325 = vld [vmem:[%s3 + $0x10] sm:$0xff]
    %v1326 = vld [vmem:[%s3 + $0x18] sm:$0xff]
    %v1327 = vld [vmem:[%s3 + $0x20] sm:$0xff]
    %v1328 = vld [vmem:[%s3 + $0x28] sm:$0xff]
    %v1329 = vld [vmem:[%s3 + $0x30] sm:$0xff]
    %v1330 = vld [vmem:[%s3 + $0x38] sm:$0xff]
    %v1331 = vld [vmem:[%s3 + $0x40] sm:$0xff]
    %v1332 = vld [vmem:[%s3 + $0x48] sm:$0xff]
    %v1333 = vld [vmem:[%s3 + $0x50] sm:$0xff]
    %v1334 = vld [vmem:[%s3 + $0x58] sm:$0xff]
    %v1335 = vld [vmem:[%s3 + $0x60] sm:$0xff]
    %v1336 = vld [vmem:[%s3 + $0x68] sm:$0xff]
    %v1337 = vld [vmem:[%s3 + $0x70] sm:$0xff]
    %v1338 = vld [vmem:[%s3 + $0x78] sm:$0xff]
    %v1339 = vpack.c.bf16 %v1168, %v1163
    %v1340 = vpack.c.bf16 %v1169, %v1164
    %v1341 = vpack.c.bf16 %v1170, %v1165
    %v1342 = vpack.c.bf16 %v1171, %v1166
    %v1343 = vpack.c.bf16 %v1172, %v1167
    %v1344 = vpack.c.bf16 %v1178, %v1173
    %v1345 = vpack.c.bf16 %v1179, %v1174
    %v1346 = vpack.c.bf16 %v1180, %v1175
    %v1347 = vpack.c.bf16 %v1181, %v1176
    %v1348 = vpack.c.bf16 %v1182, %v1177
    %v1349 = vpack.c.bf16 %v1188, %v1183
    %v1350 = vpack.c.bf16 %v1189, %v1184
    %v1351 = vpack.c.bf16 %v1190, %v1185
    %v1352 = vpack.c.bf16 %v1191, %v1186
    %v1353 = vpack.c.bf16 %v1192, %v1187
    %v1354 = vpack.c.bf16 %v1198, %v1193
    %v1355 = vpack.c.bf16 %v1199, %v1194
    %v1356 = vpack.c.bf16 %v1200, %v1195
    %v1357 = vpack.c.bf16 %v1201, %v1196
    %v1358 = vpack.c.bf16 %v1202, %v1197
    %v1359 = vpack.c.bf16 %v1208, %v1203
    %v1360 = vpack.c.bf16 %v1209, %v1204
    %v1361 = vpack.c.bf16 %v1210, %v1205
    %v1362 = vpack.c.bf16 %v1211, %v1206
    %v1363 = vpack.c.bf16 %v1212, %v1207
    %v1364 = vpack.c.bf16 %v1218, %v1213
    %v1365 = vpack.c.bf16 %v1219, %v1214
    %v1366 = vpack.c.bf16 %v1220, %v1215
    %v1367 = vpack.c.bf16 %v1221, %v1216
    %v1368 = vpack.c.bf16 %v1222, %v1217
    %v1369 = vpack.c.bf16 %v1228, %v1223
    %v1370 = vpack.c.bf16 %v1229, %v1224
    %v1371 = vpack.c.bf16 %v1230, %v1225
    %v1372 = vpack.c.bf16 %v1231, %v1226
    %v1373 = vpack.c.bf16 %v1232, %v1227
    %v1374 = vpack.c.bf16 %v1238, %v1233
    %v1375 = vpack.c.bf16 %v1239, %v1234
    %v1376 = vpack.c.bf16 %v1240, %v1235
    %v1377 = vpack.c.bf16 %v1241, %v1236
    %v1378 = vpack.c.bf16 %v1242, %v1237
    %v1379 = vpack.c.bf16 %v1248, %v1243
    %v1380 = vpack.c.bf16 %v1249, %v1244
    %v1381 = vpack.c.bf16 %v1250, %v1245
    %v1382 = vpack.c.bf16 %v1251, %v1246
    %v1383 = vpack.c.bf16 %v1252, %v1247
    %v1384 = vpack.c.bf16 %v1258, %v1253
    %v1385 = vpack.c.bf16 %v1259, %v1254
    %v1386 = vpack.c.bf16 %v1260, %v1255
    %v1387 = vpack.c.bf16 %v1261, %v1256
    %v1388 = vpack.c.bf16 %v1262, %v1257
    %v1389 = vpack.c.bf16 %v1268, %v1263
    %v1390 = vpack.c.bf16 %v1269, %v1264
    %v1391 = vpack.c.bf16 %v1270, %v1265
    %v1392 = vpack.c.bf16 %v1271, %v1266
    %v1393 = vpack.c.bf16 %v1272, %v1267
    %v1394 = vpack.c.bf16 %v1278, %v1273
    %v1395 = vpack.c.bf16 %v1279, %v1274
    %v1396 = vpack.c.bf16 %v1280, %v1275
    %v1397 = vpack.c.bf16 %v1281, %v1276
    %v1398 = vpack.c.bf16 %v1282, %v1277
    %v1399 = vpack.c.bf16 %v1288, %v1283
    %v1400 = vpack.c.bf16 %v1289, %v1284
    %v1401 = vpack.c.bf16 %v1290, %v1285
    %v1402 = vpack.c.bf16 %v1291, %v1286
    %v1403 = vpack.c.bf16 %v1292, %v1287
    %v1404 = vpack.c.bf16 %v1298, %v1293
    %v1405 = vpack.c.bf16 %v1299, %v1294
    %v1406 = vpack.c.bf16 %v1300, %v1295
    %v1407 = vpack.c.bf16 %v1301, %v1296
    %v1408 = vpack.c.bf16 %v1302, %v1297
    %v1409 = vpack.c.bf16 %v1308, %v1303
    %v1410 = vpack.c.bf16 %v1309, %v1304
    %v1411 = vpack.c.bf16 %v1310, %v1305
    %v1412 = vpack.c.bf16 %v1311, %v1306
    %v1413 = vpack.c.bf16 %v1312, %v1307
    %v1414 = vpack.c.bf16 %v1318, %v1313
    %v1415 = vpack.c.bf16 %v1319, %v1314
    %v1416 = vpack.c.bf16 %v1320, %v1315
    %v1417 = vpack.c.bf16 %v1321, %v1316
    %v1418 = vpack.c.bf16 %v1322, %v1317
    %v1419 = vld [vmem:[%s4] sm:$0xff]
    %v1420 = vld [vmem:[%s4 + $0x8] sm:$0xff]
    %v1421 = vld [vmem:[%s4 + $0x10] sm:$0xff]
    %v1422 = vld [vmem:[%s4 + $0x18] sm:$0xff]
    %v1423 = vld [vmem:[%s4 + $0x20] sm:$0xff]
    %v1424 = vld [vmem:[%s4 + $0x28] sm:$0xff]
    %v1425 = vld [vmem:[%s4 + $0x30] sm:$0xff]
    %v1426 = vld [vmem:[%s4 + $0x38] sm:$0xff]
    %v1427 = vld [vmem:[%s4 + $0x40] sm:$0xff]
    %v1428 = vld [vmem:[%s4 + $0x48] sm:$0xff]
    %v1429 = vld [vmem:[%s4 + $0x50] sm:$0xff]
    %v1430 = vld [vmem:[%s4 + $0x58] sm:$0xff]
    %v1431 = vld [vmem:[%s4 + $0x60] sm:$0xff]
    %v1432 = vld [vmem:[%s4 + $0x68] sm:$0xff]
    %v1433 = vld [vmem:[%s4 + $0x70] sm:$0xff]
    %v1434 = vld [vmem:[%s4 + $0x78] sm:$0xff]
    %1436 = vset.pattern.permute.xlu0 0
    %1437 = vperm.xlu0 %1436, %v1419
    %v1438 = vpop.permute.xlu0 %1437
    %1441 = vset.pattern.permute.xlu0 0
    %1442 = vperm.xlu0 %1441, %v1420
    %v1443 = vpop.permute.xlu0 %1442
    %1446 = vset.pattern.permute.xlu0 0
    %1447 = vperm.xlu0 %1446, %v1421
    %v1448 = vpop.permute.xlu0 %1447
    %1451 = vset.pattern.permute.xlu0 0
    %1452 = vperm.xlu0 %1451, %v1422
    %v1453 = vpop.permute.xlu0 %1452
    %1456 = vset.pattern.permute.xlu0 0
    %1457 = vperm.xlu0 %1456, %v1423
    %v1458 = vpop.permute.xlu0 %1457
    %1461 = vset.pattern.permute.xlu0 0
    %1462 = vperm.xlu0 %1461, %v1424
    %v1463 = vpop.permute.xlu0 %1462
    %1466 = vset.pattern.permute.xlu0 0
    %1467 = vperm.xlu0 %1466, %v1425
    %v1468 = vpop.permute.xlu0 %1467
    %1471 = vset.pattern.permute.xlu0 0
    %1472 = vperm.xlu0 %1471, %v1426
    %v1473 = vpop.permute.xlu0 %1472
    %1476 = vset.pattern.permute.xlu0 0
    %1477 = vperm.xlu0 %1476, %v1427
    %v1478 = vpop.permute.xlu0 %1477
    %1481 = vset.pattern.permute.xlu0 0
    %1482 = vperm.xlu0 %1481, %v1428
    %v1483 = vpop.permute.xlu0 %1482
    %1486 = vset.pattern.permute.xlu0 0
    %1487 = vperm.xlu0 %1486, %v1429
    %v1488 = vpop.permute.xlu0 %1487
    %1491 = vset.pattern.permute.xlu0 0
    %1492 = vperm.xlu0 %1491, %v1430
    %v1493 = vpop.permute.xlu0 %1492
    %1496 = vset.pattern.permute.xlu0 0
    %1497 = vperm.xlu0 %1496, %v1431
    %v1498 = vpop.permute.xlu0 %1497
    %1501 = vset.pattern.permute.xlu0 0
    %1502 = vperm.xlu0 %1501, %v1432
    %v1503 = vpop.permute.xlu0 %1502
    %1506 = vset.pattern.permute.xlu0 0
    %1507 = vperm.xlu0 %1506, %v1433
    %v1508 = vpop.permute.xlu0 %1507
    %1511 = vset.pattern.permute.xlu0 0
    %1512 = vperm.xlu0 %1511, %v1434
    %v1513 = vpop.permute.xlu0 %1512
    %v1531 = vunpack.c.l.b16 %v1323
    %v1532 = vunpack.c.h.b16 %v1323
    %v1533 = vunpack.c.l.b16 %v1324
    %v1534 = vunpack.c.h.b16 %v1324
    %v1535 = vunpack.c.l.b16 %v1325
    %v1536 = vunpack.c.h.b16 %v1325
    %v1537 = vunpack.c.l.b16 %v1326
    %v1538 = vunpack.c.h.b16 %v1326
    %v1539 = vunpack.c.l.b16 %v1327
    %v1540 = vunpack.c.h.b16 %v1327
    %v1541 = vunpack.c.l.b16 %v1328
    %v1542 = vunpack.c.h.b16 %v1328
    %v1543 = vunpack.c.l.b16 %v1329
    %v1544 = vunpack.c.h.b16 %v1329
    %v1545 = vunpack.c.l.b16 %v1330
    %v1546 = vunpack.c.h.b16 %v1330
    %v1547 = vunpack.c.l.b16 %v1331
    %v1548 = vunpack.c.h.b16 %v1331
    %v1549 = vunpack.c.l.b16 %v1332
    %v1550 = vunpack.c.h.b16 %v1332
    %v1551 = vunpack.c.l.b16 %v1333
    %v1552 = vunpack.c.h.b16 %v1333
    %v1553 = vunpack.c.l.b16 %v1334
    %v1554 = vunpack.c.h.b16 %v1334
    %v1555 = vunpack.c.l.b16 %v1335
    %v1556 = vunpack.c.h.b16 %v1335
    %v1557 = vunpack.c.l.b16 %v1336
    %v1558 = vunpack.c.h.b16 %v1336
    %v1559 = vunpack.c.l.b16 %v1337
    %v1560 = vunpack.c.h.b16 %v1337
    %v1561 = vunpack.c.l.b16 %v1338
    %v1562 = vunpack.c.h.b16 %v1338
    %v1563 = vpack.c.b16 %v1533, %v1531
    %v1564 = vpack.c.b16 %v1534, %v1532
    %v1565 = vpack.c.b16 %v1537, %v1535
    %v1566 = vpack.c.b16 %v1538, %v1536
    %v1567 = vpack.c.b16 %v1541, %v1539
    %v1568 = vpack.c.b16 %v1542, %v1540
    %v1569 = vpack.c.b16 %v1545, %v1543
    %v1570 = vpack.c.b16 %v1546, %v1544
    %v1571 = vpack.c.b16 %v1549, %v1547
    %v1572 = vpack.c.b16 %v1550, %v1548
    %v1573 = vpack.c.b16 %v1553, %v1551
    %v1574 = vpack.c.b16 %v1554, %v1552
    %v1575 = vpack.c.b16 %v1557, %v1555
    %v1576 = vpack.c.b16 %v1558, %v1556
    %v1577 = vpack.c.b16 %v1561, %v1559
    %v1578 = vpack.c.b16 %v1562, %v1560
    %1595 = vmatprep.subr.bf16.mxu0 %v1340
    %1596 = vmatpush1.bf16.msra.mxu0 %v1339
    %1597 = vmatprep.subr.bf16.mxu0 %v1345
    %1598 = vmatpush1.bf16.msra.mxu0 %v1344
    %1599 = vmatprep.subr.bf16.mxu0 %v1350
    %1600 = vmatpush1.bf16.msra.mxu0 %v1349
    %1601 = vmatprep.subr.bf16.mxu0 %v1355
    %1602 = vmatpush1.bf16.msra.mxu0 %v1354
    %1603 = vmatprep.subr.bf16.mxu0 %v1360
    %1604 = vmatpush1.bf16.msra.mxu0 %v1359
    %1605 = vmatprep.subr.bf16.mxu0 %v1365
    %1606 = vmatpush1.bf16.msra.mxu0 %v1364
    %1607 = vmatprep.subr.bf16.mxu0 %v1370
    %1608 = vmatpush1.bf16.msra.mxu0 %v1369
    %1609 = vmatprep.subr.bf16.mxu0 %v1375
    %1610 = vmatpush1.bf16.msra.mxu0 %v1374
    %1611 = vmatprep.subr.bf16.mxu0 %v1380
    %1612 = vmatpush1.bf16.msra.mxu0 %v1379
    %1613 = vmatprep.subr.bf16.mxu0 %v1385
    %1614 = vmatpush1.bf16.msra.mxu0 %v1384
    %1615 = vmatprep.subr.bf16.mxu0 %v1390
    %1616 = vmatpush1.bf16.msra.mxu0 %v1389
    %1617 = vmatprep.subr.bf16.mxu0 %v1395
    %1618 = vmatpush1.bf16.msra.mxu0 %v1394
    %1619 = vmatprep.subr.bf16.mxu0 %v1400
    %1620 = vmatpush1.bf16.msra.mxu0 %v1399
    %1621 = vmatprep.subr.bf16.mxu0 %v1405
    %1622 = vmatpush1.bf16.msra.mxu0 %v1404
    %1623 = vmatprep.subr.bf16.mxu0 %v1410
    %1624 = vmatpush1.bf16.msra.mxu0 %v1409
    %1625 = vmatprep.subr.bf16.mxu0 %v1415
    %1626 = vmatpush1.bf16.msra.mxu0 %v1414
    %1627 = vmatprep.mubr.bf16.mxu0 %v1564
    %1628 = vmatmul.mubr.bf16.gmra.mrb[0].mxu0 %v1563
    %v1629 = vpop.f32.mrb[0].mxu0
    %v1630 = vadd.f32 %v1438, %v1629
    %v1631 = vpop.f32.mrb[0].mxu0
    %v1632 = vadd.f32 %v1438, %v1631
    %v1633 = vpop.f32.mrb[0].mxu0
    %v1634 = vadd.f32 %v1443, %v1633
    %v1635 = vpop.f32.mrb[0].mxu0
    %v1636 = vadd.f32 %v1443, %v1635
    %1637 = vmatprep.mubr.bf16.mxu0 %v1566
    %1638 = vmatmul.mubr.bf16.gmra.mrb[0].mxu0 %v1565
    %v1639 = vpop.f32.mrb[0].mxu0
    %v1640 = vadd.f32 %v1448, %v1639
    %v1641 = vpop.f32.mrb[0].mxu0
    %v1642 = vadd.f32 %v1448, %v1641
    %v1643 = vpop.f32.mrb[0].mxu0
    %v1644 = vadd.f32 %v1453, %v1643
    %v1645 = vpop.f32.mrb[0].mxu0
    %v1646 = vadd.f32 %v1453, %v1645
    %1647 = vmatprep.mubr.bf16.mxu0 %v1568
    %1648 = vmatmul.mubr.bf16.gmra.mrb[0].mxu0 %v1567
    %v1649 = vpop.f32.mrb[0].mxu0
    %v1650 = vadd.f32 %v1458, %v1649
    %v1651 = vpop.f32.mrb[0].mxu0
    %v1652 = vadd.f32 %v1458, %v1651
    %v1653 = vpop.f32.mrb[0].mxu0
    %v1654 = vadd.f32 %v1463, %v1653
    %v1655 = vpop.f32.mrb[0].mxu0
    %v1656 = vadd.f32 %v1463, %v1655
    %1657 = vmatprep.mubr.bf16.mxu0 %v1570
    %1658 = vmatmul.mubr.bf16.gmra.mrb[0].mxu0 %v1569
    %v1659 = vpop.f32.mrb[0].mxu0
    %v1660 = vadd.f32 %v1468, %v1659
    %v1661 = vpop.f32.mrb[0].mxu0
    %v1662 = vadd.f32 %v1468, %v1661
    %v1663 = vpop.f32.mrb[0].mxu0
    %v1664 = vadd.f32 %v1473, %v1663
    %v1665 = vpop.f32.mrb[0].mxu0
    %v1666 = vadd.f32 %v1473, %v1665
    %1667 = vmatprep.mubr.bf16.mxu0 %v1572
    %1668 = vmatmul.mubr.bf16.gmra.mrb[0].mxu0 %v1571
    %v1669 = vpop.f32.mrb[0].mxu0
    %v1670 = vadd.f32 %v1478, %v1669
    %v1671 = vpop.f32.mrb[0].mxu0
    %v1672 = vadd.f32 %v1478, %v1671
    %v1673 = vpop.f32.mrb[0].mxu0
    %v1674 = vadd.f32 %v1483, %v1673
    %v1675 = vpop.f32.mrb[0].mxu0
    %v1676 = vadd.f32 %v1483, %v1675
    %1677 = vmatprep.mubr.bf16.mxu0 %v1574
    %1678 = vmatmul.mubr.bf16.gmra.mrb[0].mxu0 %v1573
    %v1679 = vpop.f32.mrb[0].mxu0
    %v1680 = vadd.f32 %v1488, %v1679
    %v1681 = vpop.f32.mrb[0].mxu0
    %v1682 = vadd.f32 %v1488, %v1681
    %v1683 = vpop.f32.mrb[0].mxu0
    %v1684 = vadd.f32 %v1493, %v1683
    %v1685 = vpop.f32.mrb[0].mxu0
    %v1686 = vadd.f32 %v1493, %v1685
    %1687 = vmatprep.mubr.bf16.mxu0 %v1576
    %1688 = vmatmul.mubr.bf16.gmra.mrb[0].mxu0 %v1575
    %v1689 = vpop.f32.mrb[0].mxu0
    %v1690 = vadd.f32 %v1498, %v1689
    %v1691 = vpop.f32.mrb[0].mxu0
    %v1692 = vadd.f32 %v1498, %v1691
    %v1693 = vpop.f32.mrb[0].mxu0
    %v1694 = vadd.f32 %v1503, %v1693
    %v1695 = vpop.f32.mrb[0].mxu0
    %v1696 = vadd.f32 %v1503, %v1695
    %1697 = vmatprep.mubr.bf16.mxu0 %v1578
    %1698 = vmatmul.mubr.bf16.gmra.mrb[0].mxu0 %v1577
    %v1699 = vpop.f32.mrb[0].mxu0
    %v1700 = vadd.f32 %v1508, %v1699
    %v1701 = vpop.f32.mrb[0].mxu0
    %v1702 = vadd.f32 %v1508, %v1701
    %v1703 = vpop.f32.mrb[0].mxu0
    %v1704 = vadd.f32 %v1513, %v1703
    %v1705 = vpop.f32.mrb[0].mxu0
    %v1706 = vadd.f32 %v1513, %v1705
    %1707 = vdwg.mxu0
    %1708 = vmatprep.subr.bf16.mxu0 %v1342
    %1709 = vmatpush1.bf16.msra.mxu0 %v1341
    %1710 = vmatprep.subr.bf16.mxu0 %v1347
    %1711 = vmatpush1.bf16.msra.mxu0 %v1346
    %1712 = vmatprep.subr.bf16.mxu0 %v1352
    %1713 = vmatpush1.bf16.msra.mxu0 %v1351
    %1714 = vmatprep.subr.bf16.mxu0 %v1357
    %1715 = vmatpush1.bf16.msra.mxu0 %v1356
    %1716 = vmatprep.subr.bf16.mxu0 %v1362
    %1717 = vmatpush1.bf16.msra.mxu0 %v1361
    %1718 = vmatprep.subr.bf16.mxu0 %v1367
    %1719 = vmatpush1.bf16.msra.mxu0 %v1366
    %1720 = vmatprep.subr.bf16.mxu0 %v1372
    %1721 = vmatpush1.bf16.msra.mxu0 %v1371
    %1722 = vmatprep.subr.bf16.mxu0 %v1377
    %1723 = vmatpush1.bf16.msra.mxu0 %v1376
    %1724 = vmatprep.subr.bf16.mxu0 %v1382
    %1725 = vmatpush1.bf16.msra.mxu0 %v1381
    %1726 = vmatprep.subr.bf16.mxu0 %v1387
    %1727 = vmatpush1.bf16.msra.mxu0 %v1386
    %1728 = vmatprep.subr.bf16.mxu0 %v1392
    %1729 = vmatpush1.bf16.msra.mxu0 %v1391
    %1730 = vmatprep.subr.bf16.mxu0 %v1397
    %1731 = vmatpush1.bf16.msra.mxu0 %v1396
    %1732 = vmatprep.subr.bf16.mxu0 %v1402
    %1733 = vmatpush1.bf16.msra.mxu0 %v1401
    %1734 = vmatprep.subr.bf16.mxu0 %v1407
    %1735 = vmatpush1.bf16.msra.mxu0 %v1406
    %1736 = vmatprep.subr.bf16.mxu0 %v1412
    %1737 = vmatpush1.bf16.msra.mxu0 %v1411
    %1738 = vmatprep.subr.bf16.mxu0 %v1417
    %1739 = vmatpush1.bf16.msra.mxu0 %v1416
    %1740 = vmatprep.mubr.bf16.mxu0 %v1564
    %1741 = vmatmul.mubr.bf16.gmra.mrb[0].mxu0 %v1563
    %v1742 = vpop.f32.mrb[0].mxu0
    %v1743 = vadd.f32 %v1438, %v1742
    %v1744 = vpop.f32.mrb[0].mxu0
    %v1745 = vadd.f32 %v1438, %v1744
    %v1746 = vpop.f32.mrb[0].mxu0
    %v1747 = vadd.f32 %v1443, %v1746
    %v1748 = vpop.f32.mrb[0].mxu0
    %v1749 = vadd.f32 %v1443, %v1748
    %1750 = vmatprep.mubr.bf16.mxu0 %v1566
    %1751 = vmatmul.mubr.bf16.gmra.mrb[0].mxu0 %v1565
    %v1752 = vpop.f32.mrb[0].mxu0
    %v1753 = vadd.f32 %v1448, %v1752
    %v1754 = vpop.f32.mrb[0].mxu0
    %v1755 = vadd.f32 %v1448, %v1754
    %v1756 = vpop.f32.mrb[0].mxu0
    %v1757 = vadd.f32 %v1453, %v1756
    %v1758 = vpop.f32.mrb[0].mxu0
    %v1759 = vadd.f32 %v1453, %v1758
    %1760 = vmatprep.mubr.bf16.mxu0 %v1568
    %1761 = vmatmul.mubr.bf16.gmra.mrb[0].mxu0 %v1567
    %v1762 = vpop.f32.mrb[0].mxu0
    %v1763 = vadd.f32 %v1458, %v1762
    %v1764 = vpop.f32.mrb[0].mxu0
    %v1765 = vadd.f32 %v1458, %v1764
    %v1766 = vpop.f32.mrb[0].mxu0
    %v1767 = vadd.f32 %v1463, %v1766
    %v1768 = vpop.f32.mrb[0].mxu0
    %v1769 = vadd.f32 %v1463, %v1768
    %1770 = vmatprep.mubr.bf16.mxu0 %v1570
    %1771 = vmatmul.mubr.bf16.gmra.mrb[0].mxu0 %v1569
    %v1772 = vpop.f32.mrb[0].mxu0
    %v1773 = vadd.f32 %v1468, %v1772
    %v1774 = vpop.f32.mrb[0].mxu0
    %v1775 = vadd.f32 %v1468, %v1774
    %v1776 = vpop.f32.mrb[0].mxu0
    %v1777 = vadd.f32 %v1473, %v1776
    %v1778 = vpop.f32.mrb[0].mxu0
    %v1779 = vadd.f32 %v1473, %v1778
    %1780 = vmatprep.mubr.bf16.mxu0 %v1572
    %1781 = vmatmul.mubr.bf16.gmra.mrb[0].mxu0 %v1571
    %v1782 = vpop.f32.mrb[0].mxu0
    %v1783 = vadd.f32 %v1478, %v1782
    %v1784 = vpop.f32.mrb[0].mxu0
    %v1785 = vadd.f32 %v1478, %v1784
    %v1786 = vpop.f32.mrb[0].mxu0
    %v1787 = vadd.f32 %v1483, %v1786
    %v1788 = vpop.f32.mrb[0].mxu0
    %v1789 = vadd.f32 %v1483, %v1788
    %1790 = vmatprep.mubr.bf16.mxu0 %v1574
    %1791 = vmatmul.mubr.bf16.gmra.mrb[0].mxu0 %v1573
    %v1792 = vpop.f32.mrb[0].mxu0
    %v1793 = vadd.f32 %v1488, %v1792
    %v1794 = vpop.f32.mrb[0].mxu0
    %v1795 = vadd.f32 %v1488, %v1794
    %v1796 = vpop.f32.mrb[0].mxu0
    %v1797 = vadd.f32 %v1493, %v1796
    %v1798 = vpop.f32.mrb[0].mxu0
    %v1799 = vadd.f32 %v1493, %v1798
    %1800 = vmatprep.mubr.bf16.mxu0 %v1576
    %1801 = vmatmul.mubr.bf16.gmra.mrb[0].mxu0 %v1575
    %v1802 = vpop.f32.mrb[0].mxu0
    %v1803 = vadd.f32 %v1498, %v1802
    %v1804 = vpop.f32.mrb[0].mxu0
    %v1805 = vadd.f32 %v1498, %v1804
    %v1806 = vpop.f32.mrb[0].mxu0
    %v1807 = vadd.f32 %v1503, %v1806
    %v1808 = vpop.f32.mrb[0].mxu0
    %v1809 = vadd.f32 %v1503, %v1808
    %1810 = vmatprep.mubr.bf16.mxu0 %v1578
    %1811 = vmatmul.mubr.bf16.gmra.mrb[0].mxu0 %v1577
    %v1812 = vpop.f32.mrb[0].mxu0
    %v1813 = vadd.f32 %v1508, %v1812
    %v1814 = vpop.f32.mrb[0].mxu0
    %v1815 = vadd.f32 %v1508, %v1814
    %v1816 = vpop.f32.mrb[0].mxu0
    %v1817 = vadd.f32 %v1513, %v1816
    %v1818 = vpop.f32.mrb[0].mxu0
    %v1819 = vadd.f32 %v1513, %v1818
    %1820 = vdwg.mxu0
    %1821 = vmatprep.subr.bf16.mxu0 0
    %1822 = vmatpush1.bf16.msra.mxu0 %v1343
    %1823 = vmatprep.subr.bf16.mxu0 0
    %1824 = vmatpush1.bf16.msra.mxu0 %v1348
    %1825 = vmatprep.subr.bf16.mxu0 0
    %1826 = vmatpush1.bf16.msra.mxu0 %v1353
    %1827 = vmatprep.subr.bf16.mxu0 0
    %1828 = vmatpush1.bf16.msra.mxu0 %v1358
    %1829 = vmatprep.subr.bf16.mxu0 0
    %1830 = vmatpush1.bf16.msra.mxu0 %v1363
    %1831 = vmatprep.subr.bf16.mxu0 0
    %1832 = vmatpush1.bf16.msra.mxu0 %v1368
    %1833 = vmatprep.subr.bf16.mxu0 0
    %1834 = vmatpush1.bf16.msra.mxu0 %v1373
    %1835 = vmatprep.subr.bf16.mxu0 0
    %1836 = vmatpush1.bf16.msra.mxu0 %v1378
    %1837 = vmatprep.subr.bf16.mxu0 0
    %1838 = vmatpush1.bf16.msra.mxu0 %v1383
    %1839 = vmatprep.subr.bf16.mxu0 0
    %1840 = vmatpush1.bf16.msra.mxu0 %v1388
    %1841 = vmatprep.subr.bf16.mxu0 0
    %1842 = vmatpush1.bf16.msra.mxu0 %v1393
    %1843 = vmatprep.subr.bf16.mxu0 0
    %1844 = vmatpush1.bf16.msra.mxu0 %v1398
    %1845 = vmatprep.subr.bf16.mxu0 0
    %1846 = vmatpush1.bf16.msra.mxu0 %v1403
    %1847 = vmatprep.subr.bf16.mxu0 0
    %1848 = vmatpush1.bf16.msra.mxu0 %v1408
    %1849 = vmatprep.subr.bf16.mxu0 0
    %1850 = vmatpush1.bf16.msra.mxu0 %v1413
    %1851 = vmatprep.subr.bf16.mxu0 0
    %1852 = vmatpush1.bf16.msra.mxu0 %v1418
    %1853 = vmatprep.mubr.bf16.mxu0 %v1564
    %1854 = vmatmul.mubr.bf16.gmra.mrb[0].mxu0 %v1563
    %v1855 = vpop.f32.mrb[0].mxu0
    %v1856 = vadd.f32 %v1438, %v1855
    %v1857 = vpop.f32.mrb[0].mxu0
    %v1858 = vpop.f32.mrb[0].mxu0
    %v1859 = vadd.f32 %v1443, %v1858
    %v1860 = vpop.f32.mrb[0].mxu0
    %1861 = vmatprep.mubr.bf16.mxu0 %v1566
    %1862 = vmatmul.mubr.bf16.gmra.mrb[0].mxu0 %v1565
    %v1863 = vpop.f32.mrb[0].mxu0
    %v1864 = vadd.f32 %v1448, %v1863
    %v1865 = vpop.f32.mrb[0].mxu0
    %v1866 = vpop.f32.mrb[0].mxu0
    %v1867 = vadd.f32 %v1453, %v1866
    %v1868 = vpop.f32.mrb[0].mxu0
    %1869 = vmatprep.mubr.bf16.mxu0 %v1568
    %1870 = vmatmul.mubr.bf16.gmra.mrb[0].mxu0 %v1567
    %v1871 = vpop.f32.mrb[0].mxu0
    %v1872 = vadd.f32 %v1458, %v1871
    %v1873 = vpop.f32.mrb[0].mxu0
    %v1874 = vpop.f32.mrb[0].mxu0
    %v1875 = vadd.f32 %v1463, %v1874
    %v1876 = vpop.f32.mrb[0].mxu0
    %1877 = vmatprep.mubr.bf16.mxu0 %v1570
    %1878 = vmatmul.mubr.bf16.gmra.mrb[0].mxu0 %v1569
    %v1879 = vpop.f32.mrb[0].mxu0
    %v1880 = vadd.f32 %v1468, %v1879
    %v1881 = vpop.f32.mrb[0].mxu0
    %v1882 = vpop.f32.mrb[0].mxu0
    %v1883 = vadd.f32 %v1473, %v1882
    %v1884 = vpop.f32.mrb[0].mxu0
    %1885 = vmatprep.mubr.bf16.mxu0 %v1572
    %1886 = vmatmul.mubr.bf16.gmra.mrb[0].mxu0 %v1571
    %v1887 = vpop.f32.mrb[0].mxu0
    %v1888 = vadd.f32 %v1478, %v1887
    %v1889 = vpop.f32.mrb[0].mxu0
    %v1890 = vpop.f32.mrb[0].mxu0
    %v1891 = vadd.f32 %v1483, %v1890
    %v1892 = vpop.f32.mrb[0].mxu0
    %1893 = vmatprep.mubr.bf16.mxu0 %v1574
    %1894 = vmatmul.mubr.bf16.gmra.mrb[0].mxu0 %v1573
    %v1895 = vpop.f32.mrb[0].mxu0
    %v1896 = vadd.f32 %v1488, %v1895
    %v1897 = vpop.f32.mrb[0].mxu0
    %v1898 = vpop.f32.mrb[0].mxu0
    %v1899 = vadd.f32 %v1493, %v1898
    %v1900 = vpop.f32.mrb[0].mxu0
    %1901 = vmatprep.mubr.bf16.mxu0 %v1576
    %1902 = vmatmul.mubr.bf16.gmra.mrb[0].mxu0 %v1575
    %v1903 = vpop.f32.mrb[0].mxu0
    %v1904 = vadd.f32 %v1498, %v1903
    %v1905 = vpop.f32.mrb[0].mxu0
    %v1906 = vpop.f32.mrb[0].mxu0
    %v1907 = vadd.f32 %v1503, %v1906
    %v1908 = vpop.f32.mrb[0].mxu0
    %1909 = vmatprep.mubr.bf16.mxu0 %v1578
    %1910 = vmatmul.mubr.bf16.gmra.mrb[0].mxu0 %v1577
    %v1911 = vpop.f32.mrb[0].mxu0
    %v1912 = vadd.f32 %v1508, %v1911
    %v1913 = vpop.f32.mrb[0].mxu0
    %v1914 = vpop.f32.mrb[0].mxu0
    %v1915 = vadd.f32 %v1513, %v1914
    %v1916 = vpop.f32.mrb[0].mxu0
    %1917 = vdwg.mxu0
    %v1918 = vmax.f32 %v1630, 0.0
    %v1919 = vmax.f32 %v1632, 0.0
    %v1920 = vmax.f32 %v1743, 0.0
    %v1921 = vmax.f32 %v1745, 0.0
    %v1922 = vmax.f32 %v1856, 0.0
    %v1923 = vmax.f32 %v1634, 0.0
    %v1924 = vmax.f32 %v1636, 0.0
    %v1925 = vmax.f32 %v1747, 0.0
    %v1926 = vmax.f32 %v1749, 0.0
    %v1927 = vmax.f32 %v1859, 0.0
    %v1928 = vmax.f32 %v1640, 0.0
    %v1929 = vmax.f32 %v1642, 0.0
    %v1930 = vmax.f32 %v1753, 0.0
    %v1931 = vmax.f32 %v1755, 0.0
    %v1932 = vmax.f32 %v1864, 0.0
    %v1933 = vmax.f32 %v1644, 0.0
    %v1934 = vmax.f32 %v1646, 0.0
    %v1935 = vmax.f32 %v1757, 0.0
    %v1936 = vmax.f32 %v1759, 0.0
    %v1937 = vmax.f32 %v1867, 0.0
    %v1938 = vmax.f32 %v1650, 0.0
    %v1939 = vmax.f32 %v1652, 0.0
    %v1940 = vmax.f32 %v1763, 0.0
    %v1941 = vmax.f32 %v1765, 0.0
    %v1942 = vmax.f32 %v1872, 0.0
    %v1943 = vmax.f32 %v1654, 0.0
    %v1944 = vmax.f32 %v1656, 0.0
    %v1945 = vmax.f32 %v1767, 0.0
    %v1946 = vmax.f32 %v1769, 0.0
    %v1947 = vmax.f32 %v1875, 0.0
    %v1948 = vmax.f32 %v1660, 0.0
    %v1949 = vmax.f32 %v1662, 0.0
    %v1950 = vmax.f32 %v1773, 0.0
    %v1951 = vmax.f32 %v1775, 0.0
    %v1952 = vmax.f32 %v1880, 0.0
    %v1953 = vmax.f32 %v1664, 0.0
    %v1954 = vmax.f32 %v1666, 0.0
    %v1955 = vmax.f32 %v1777, 0.0
    %v1956 = vmax.f32 %v1779, 0.0
    %v1957 = vmax.f32 %v1883, 0.0
    %v1958 = vmax.f32 %v1670, 0.0
    %v1959 = vmax.f32 %v1672, 0.0
    %v1960 = vmax.f32 %v1783, 0.0
    %v1961 = vmax.f32 %v1785, 0.0
    %v1962 = vmax.f32 %v1888, 0.0
    %v1963 = vmax.f32 %v1674, 0.0
    %v1964 = vmax.f32 %v1676, 0.0
    %v1965 = vmax.f32 %v1787, 0.0
    %v1966 = vmax.f32 %v1789, 0.0
    %v1967 = vmax.f32 %v1891, 0.0
    %v1968 = vmax.f32 %v1680, 0.0
    %v1969 = vmax.f32 %v1682, 0.0
    %v1970 = vmax.f32 %v1793, 0.0
    %v1971 = vmax.f32 %v1795, 0.0
    %v1972 = vmax.f32 %v1896, 0.0
    %v1973 = vmax.f32 %v1684, 0.0
    %v1974 = vmax.f32 %v1686, 0.0
    %v1975 = vmax.f32 %v1797, 0.0
    %v1976 = vmax.f32 %v1799, 0.0
    %v1977 = vmax.f32 %v1899, 0.0
    %v1978 = vmax.f32 %v1690, 0.0
    %v1979 = vmax.f32 %v1692, 0.0
    %v1980 = vmax.f32 %v1803, 0.0
    %v1981 = vmax.f32 %v1805, 0.0
    %v1982 = vmax.f32 %v1904, 0.0
    %v1983 = vmax.f32 %v1694, 0.0
    %v1984 = vmax.f32 %v1696, 0.0
    %v1985 = vmax.f32 %v1807, 0.0
    %v1986 = vmax.f32 %v1809, 0.0
    %v1987 = vmax.f32 %v1907, 0.0
    %v1988 = vmax.f32 %v1700, 0.0
    %v1989 = vmax.f32 %v1702, 0.0
    %v1990 = vmax.f32 %v1813, 0.0
    %v1991 = vmax.f32 %v1815, 0.0
    %v1992 = vmax.f32 %v1912, 0.0
    %v1993 = vmax.f32 %v1704, 0.0
    %v1994 = vmax.f32 %v1706, 0.0
    %v1995 = vmax.f32 %v1817, 0.0
    %v1996 = vmax.f32 %v1819, 0.0
    %v1997 = vmax.f32 %v1915, 0.0
    %v1998 = vld [vmem:[%s5] sm:$0xf]
    %v1999 = vld [vmem:[%s5 + $0x4] sm:$0xf]
    %v2000 = vld [vmem:[%s5 + $0x8] sm:$0xf]
    %v2001 = vld [vmem:[%s5 + $0xc] sm:$0xf]
    %v2002 = vld [vmem:[%s5 + $0x10] sm:$0xf]
    %v2003 = vld [vmem:[%s5 + $0x14] sm:$0xf]
    %v2004 = vld [vmem:[%s5 + $0x18] sm:$0xf]
    %v2005 = vld [vmem:[%s5 + $0x1c] sm:$0xf]
    %v2006 = vpack.c.bf16 %v1923, %v1918
    %v2007 = vpack.c.bf16 %v1924, %v1919
    %v2008 = vpack.c.bf16 %v1925, %v1920
    %v2009 = vpack.c.bf16 %v1926, %v1921
    %v2010 = vpack.c.bf16 %v1927, %v1922
    %v2011 = vpack.c.bf16 %v1933, %v1928
    %v2012 = vpack.c.bf16 %v1934, %v1929
    %v2013 = vpack.c.bf16 %v1935, %v1930
    %v2014 = vpack.c.bf16 %v1936, %v1931
    %v2015 = vpack.c.bf16 %v1937, %v1932
    %v2016 = vpack.c.bf16 %v1943, %v1938
    %v2017 = vpack.c.bf16 %v1944, %v1939
    %v2018 = vpack.c.bf16 %v1945, %v1940
    %v2019 = vpack.c.bf16 %v1946, %v1941
    %v2020 = vpack.c.bf16 %v1947, %v1942
    %v2021 = vpack.c.bf16 %v1953, %v1948
    %v2022 = vpack.c.bf16 %v1954, %v1949
    %v2023 = vpack.c.bf16 %v1955, %v1950
    %v2024 = vpack.c.bf16 %v1956, %v1951
    %v2025 = vpack.c.bf16 %v1957, %v1952
    %v2026 = vpack.c.bf16 %v1963, %v1958
    %v2027 = vpack.c.bf16 %v1964, %v1959
    %v2028 = vpack.c.bf16 %v1965, %v1960
    %v2029 = vpack.c.bf16 %v1966, %v1961
    %v2030 = vpack.c.bf16 %v1967, %v1962
    %v2031 = vpack.c.bf16 %v1973, %v1968
    %v2032 = vpack.c.bf16 %v1974, %v1969
    %v2033 = vpack.c.bf16 %v1975, %v1970
    %v2034 = vpack.c.bf16 %v1976, %v1971
    %v2035 = vpack.c.bf16 %v1977, %v1972
    %v2036 = vpack.c.bf16 %v1983, %v1978
    %v2037 = vpack.c.bf16 %v1984, %v1979
    %v2038 = vpack.c.bf16 %v1985, %v1980
    %v2039 = vpack.c.bf16 %v1986, %v1981
    %v2040 = vpack.c.bf16 %v1987, %v1982
    %v2041 = vpack.c.bf16 %v1993, %v1988
    %v2042 = vpack.c.bf16 %v1994, %v1989
    %v2043 = vpack.c.bf16 %v1995, %v1990
    %v2044 = vpack.c.bf16 %v1996, %v1991
    %v2045 = vpack.c.bf16 %v1997, %v1992
    %v2046 = vld [vmem:[%s6] sm:$0xff]
    %v2047 = vld [vmem:[%s6 + $0x8] sm:$0xff]
    %v2048 = vld [vmem:[%s6 + $0x10] sm:$0xff]
    %v2049 = vld [vmem:[%s6 + $0x18] sm:$0xff]
    %v2050 = vld [vmem:[%s6 + $0x20] sm:$0xff]
    %v2051 = vld [vmem:[%s6 + $0x28] sm:$0xff]
    %v2052 = vld [vmem:[%s6 + $0x30] sm:$0xff]
    %v2053 = vld [vmem:[%s6 + $0x38] sm:$0xff]
    %2055 = vset.pattern.permute.xlu0 0
    %2056 = vperm.xlu0 %2055, %v2046
    %v2057 = vpop.permute.xlu0 %2056
    %2060 = vset.pattern.permute.xlu0 0
    %2061 = vperm.xlu0 %2060, %v2047
    %v2062 = vpop.permute.xlu0 %2061
    %2065 = vset.pattern.permute.xlu0 0
    %2066 = vperm.xlu0 %2065, %v2048
    %v2067 = vpop.permute.xlu0 %2066
    %2070 = vset.pattern.permute.xlu0 0
    %2071 = vperm.xlu0 %2070, %v2049
    %v2072 = vpop.permute.xlu0 %2071
    %2075 = vset.pattern.permute.xlu0 0
    %2076 = vperm.xlu0 %2075, %v2050
    %v2077 = vpop.permute.xlu0 %2076
    %2080 = vset.pattern.permute.xlu0 0
    %2081 = vperm.xlu0 %2080, %v2051
    %v2082 = vpop.permute.xlu0 %2081
    %2085 = vset.pattern.permute.xlu0 0
    %2086 = vperm.xlu0 %2085, %v2052
    %v2087 = vpop.permute.xlu0 %2086
    %2090 = vset.pattern.permute.xlu0 0
    %2091 = vperm.xlu0 %2090, %v2053
    %v2092 = vpop.permute.xlu0 %2091
    %v2102 = vunpack.c.l.b16 %v1998
    %v2103 = vunpack.c.l.b16 %v1999
    %v2104 = vunpack.c.l.b16 %v2000
    %v2105 = vunpack.c.l.b16 %v2001
    %v2106 = vunpack.c.l.b16 %v2002
    %v2107 = vunpack.c.l.b16 %v2003
    %v2108 = vunpack.c.l.b16 %v2004
    %v2109 = vunpack.c.l.b16 %v2005
    %v2110 = vpack.c.b16 %v2103, %v2102
    %v2111 = vpack.c.b16 %v2105, %v2104
    %v2112 = vpack.c.b16 %v2107, %v2106
    %v2113 = vpack.c.b16 %v2109, %v2108
    %2118 = vmatprep.subr.bf16.mxu0 %v2007
    %2119 = vmatpush1.bf16.msra.mxu0 %v2006
    %2120 = vmatprep.subr.bf16.mxu0 %v2012
    %2121 = vmatpush1.bf16.msra.mxu0 %v2011
    %2122 = vmatprep.subr.bf16.mxu0 %v2017
    %2123 = vmatpush1.bf16.msra.mxu0 %v2016
    %2124 = vmatprep.subr.bf16.mxu0 %v2022
    %2125 = vmatpush1.bf16.msra.mxu0 %v2021
    %2126 = vmatprep.subr.bf16.mxu0 %v2027
    %2127 = vmatpush1.bf16.msra.mxu0 %v2026
    %2128 = vmatprep.subr.bf16.mxu0 %v2032
    %2129 = vmatpush1.bf16.msra.mxu0 %v2031
    %2130 = vmatprep.subr.bf16.mxu0 %v2037
    %2131 = vmatpush1.bf16.msra.mxu0 %v2036
    %2132 = vmatprep.subr.bf16.mxu0 %v2042
    %2133 = vmatpush1.bf16.msra.mxu0 %v2041
    %2134 = vmatprep.subr.bf16.mxu0 0
    %2135 = vmatpush1.bf16.msra.mxu0 0
    %2136 = vmatprep.subr.bf16.mxu0 0
    %2137 = vmatpush1.bf16.msra.mxu0 0
    %2138 = vmatprep.subr.bf16.mxu0 0
    %2139 = vmatpush1.bf16.msra.mxu0 0
    %2140 = vmatprep.subr.bf16.mxu0 0
    %2141 = vmatpush1.bf16.msra.mxu0 0
    %2142 = vmatprep.subr.bf16.mxu0 0
    %2143 = vmatpush1.bf16.msra.mxu0 0
    %2144 = vmatprep.subr.bf16.mxu0 0
    %2145 = vmatpush1.bf16.msra.mxu0 0
    %2146 = vmatprep.subr.bf16.mxu0 0
    %2147 = vmatpush1.bf16.msra.mxu0 0
    %2148 = vmatprep.subr.bf16.mxu0 0
    %2149 = vmatpush1.bf16.msra.mxu0 0
    %2150 = vmatprep.mubr.bf16.mxu0 0
    %2151 = vmatmul.mubr.bf16.gmra.mrb[0].mxu0 %v2110
    %v2152 = vpop.f32.mrb[0].mxu0
    %v2153 = vadd.f32 %v2057, %v2152
    %v2154 = vpop.f32.mrb[0].mxu0
    %v2155 = vadd.f32 %v2057, %v2154
    %v2156 = vpop.f32.mrb[0].mxu0
    %v2157 = vadd.f32 %v2062, %v2156
    %v2158 = vpop.f32.mrb[0].mxu0
    %v2159 = vadd.f32 %v2062, %v2158
    %2160 = vmatprep.mubr.bf16.mxu0 0
    %2161 = vmatmul.mubr.bf16.gmra.mrb[0].mxu0 %v2111
    %v2162 = vpop.f32.mrb[0].mxu0
    %v2163 = vadd.f32 %v2067, %v2162
    %v2164 = vpop.f32.mrb[0].mxu0
    %v2165 = vadd.f32 %v2067, %v2164
    %v2166 = vpop.f32.mrb[0].mxu0
    %v2167 = vadd.f32 %v2072, %v2166
    %v2168 = vpop.f32.mrb[0].mxu0
    %v2169 = vadd.f32 %v2072, %v2168
    %2170 = vmatprep.mubr.bf16.mxu0 0
    %2171 = vmatmul.mubr.bf16.gmra.mrb[0].mxu0 %v2112
    %v2172 = vpop.f32.mrb[0].mxu0
    %v2173 = vadd.f32 %v2077, %v2172
    %v2174 = vpop.f32.mrb[0].mxu0
    %v2175 = vadd.f32 %v2077, %v2174
    %v2176 = vpop.f32.mrb[0].mxu0
    %v2177 = vadd.f32 %v2082, %v2176
    %v2178 = vpop.f32.mrb[0].mxu0
    %v2179 = vadd.f32 %v2082, %v2178
    %2180 = vmatprep.mubr.bf16.mxu0 0
    %2181 = vmatmul.mubr.bf16.gmra.mrb[0].mxu0 %v2113
    %v2182 = vpop.f32.mrb[0].mxu0
    %v2183 = vadd.f32 %v2087, %v2182
    %v2184 = vpop.f32.mrb[0].mxu0
    %v2185 = vadd.f32 %v2087, %v2184
    %v2186 = vpop.f32.mrb[0].mxu0
    %v2187 = vadd.f32 %v2092, %v2186
    %v2188 = vpop.f32.mrb[0].mxu0
    %v2189 = vadd.f32 %v2092, %v2188
    %2190 = vdwg.mxu0
    %2191 = vmatprep.subr.bf16.mxu0 %v2009
    %2192 = vmatpush1.bf16.msra.mxu0 %v2008
    %2193 = vmatprep.subr.bf16.mxu0 %v2014
    %2194 = vmatpush1.bf16.msra.mxu0 %v2013
    %2195 = vmatprep.subr.bf16.mxu0 %v2019
    %2196 = vmatpush1.bf16.msra.mxu0 %v2018
    %2197 = vmatprep.subr.bf16.mxu0 %v2024
    %2198 = vmatpush1.bf16.msra.mxu0 %v2023
    %2199 = vmatprep.subr.bf16.mxu0 %v2029
    %2200 = vmatpush1.bf16.msra.mxu0 %v2028
    %2201 = vmatprep.subr.bf16.mxu0 %v2034
    %2202 = vmatpush1.bf16.msra.mxu0 %v2033
    %2203 = vmatprep.subr.bf16.mxu0 %v2039
    %2204 = vmatpush1.bf16.msra.mxu0 %v2038
    %2205 = vmatprep.subr.bf16.mxu0 %v2044
    %2206 = vmatpush1.bf16.msra.mxu0 %v2043
    %2207 = vmatprep.subr.bf16.mxu0 0
    %2208 = vmatpush1.bf16.msra.mxu0 0
    %2209 = vmatprep.subr.bf16.mxu0 0
    %2210 = vmatpush1.bf16.msra.mxu0 0
    %2211 = vmatprep.subr.bf16.mxu0 0
    %2212 = vmatpush1.bf16.msra.mxu0 0
    %2213 = vmatprep.subr.bf16.mxu0 0
    %2214 = vmatpush1.bf16.msra.mxu0 0
    %2215 = vmatprep.subr.bf16.mxu0 0
    %2216 = vmatpush1.bf16.msra.mxu0 0
    %2217 = vmatprep.subr.bf16.mxu0 0
    %2218 = vmatpush1.bf16.msra.mxu0 0
    %2219 = vmatprep.subr.bf16.mxu0 0
    %2220 = vmatpush1.bf16.msra.mxu0 0
    %2221 = vmatprep.subr.bf16.mxu0 0
    %2222 = vmatpush1.bf16.msra.mxu0 0
    %2223 = vmatprep.mubr.bf16.mxu0 0
    %2224 = vmatmul.mubr.bf16.gmra.mrb[0].mxu0 %v2110
    %v2225 = vpop.f32.mrb[0].mxu0
    %v2226 = vadd.f32 %v2057, %v2225
    %v2227 = vpop.f32.mrb[0].mxu0
    %v2228 = vadd.f32 %v2057, %v2227
    %v2229 = vpop.f32.mrb[0].mxu0
    %v2230 = vadd.f32 %v2062, %v2229
    %v2231 = vpop.f32.mrb[0].mxu0
    %v2232 = vadd.f32 %v2062, %v2231
    %2233 = vmatprep.mubr.bf16.mxu0 0
    %2234 = vmatmul.mubr.bf16.gmra.mrb[0].mxu0 %v2111
    %v2235 = vpop.f32.mrb[0].mxu0
    %v2236 = vadd.f32 %v2067, %v2235
    %v2237 = vpop.f32.mrb[0].mxu0
    %v2238 = vadd.f32 %v2067, %v2237
    %v2239 = vpop.f32.mrb[0].mxu0
    %v2240 = vadd.f32 %v2072, %v2239
    %v2241 = vpop.f32.mrb[0].mxu0
    %v2242 = vadd.f32 %v2072, %v2241
    %2243 = vmatprep.mubr.bf16.mxu0 0
    %2244 = vmatmul.mubr.bf16.gmra.mrb[0].mxu0 %v2112
    %v2245 = vpop.f32.mrb[0].mxu0
    %v2246 = vadd.f32 %v2077, %v2245
    %v2247 = vpop.f32.mrb[0].mxu0
    %v2248 = vadd.f32 %v2077, %v2247
    %v2249 = vpop.f32.mrb[0].mxu0
    %v2250 = vadd.f32 %v2082, %v2249
    %v2251 = vpop.f32.mrb[0].mxu0
    %v2252 = vadd.f32 %v2082, %v2251
    %2253 = vmatprep.mubr.bf16.mxu0 0
    %2254 = vmatmul.mubr.bf16.gmra.mrb[0].mxu0 %v2113
    %v2255 = vpop.f32.mrb[0].mxu0
    %v2256 = vadd.f32 %v2087, %v2255
    %v2257 = vpop.f32.mrb[0].mxu0
    %v2258 = vadd.f32 %v2087, %v2257
    %v2259 = vpop.f32.mrb[0].mxu0
    %v2260 = vadd.f32 %v2092, %v2259
    %v2261 = vpop.f32.mrb[0].mxu0
    %v2262 = vadd.f32 %v2092, %v2261
    %2263 = vdwg.mxu0
    %2264 = vmatprep.subr.bf16.mxu0 0
    %2265 = vmatpush1.bf16.msra.mxu0 %v2010
    %2266 = vmatprep.subr.bf16.mxu0 0
    %2267 = vmatpush1.bf16.msra.mxu0 %v2015
    %2268 = vmatprep.subr.bf16.mxu0 0
    %2269 = vmatpush1.bf16.msra.mxu0 %v2020
    %2270 = vmatprep.subr.bf16.mxu0 0
    %2271 = vmatpush1.bf16.msra.mxu0 %v2025
    %2272 = vmatprep.subr.bf16.mxu0 0
    %2273 = vmatpush1.bf16.msra.mxu0 %v2030
    %2274 = vmatprep.subr.bf16.mxu0 0
    %2275 = vmatpush1.bf16.msra.mxu0 %v2035
    %2276 = vmatprep.subr.bf16.mxu0 0
    %2277 = vmatpush1.bf16.msra.mxu0 %v2040
    %2278 = vmatprep.subr.bf16.mxu0 0
    %2279 = vmatpush1.bf16.msra.mxu0 %v2045
    %2280 = vmatprep.subr.bf16.mxu0 0
    %2281 = vmatpush1.bf16.msra.mxu0 0
    %2282 = vmatprep.subr.bf16.mxu0 0
    %2283 = vmatpush1.bf16.msra.mxu0 0
    %2284 = vmatprep.subr.bf16.mxu0 0
    %2285 = vmatpush1.bf16.msra.mxu0 0
    %2286 = vmatprep.subr.bf16.mxu0 0
    %2287 = vmatpush1.bf16.msra.mxu0 0
    %2288 = vmatprep.subr.bf16.mxu0 0
    %2289 = vmatpush1.bf16.msra.mxu0 0
    %2290 = vmatprep.subr.bf16.mxu0 0
    %2291 = vmatpush1.bf16.msra.mxu0 0
    %2292 = vmatprep.subr.bf16.mxu0 0
    %2293 = vmatpush1.bf16.msra.mxu0 0
    %2294 = vmatprep.subr.bf16.mxu0 0
    %2295 = vmatpush1.bf16.msra.mxu0 0
    %2296 = vmatprep.mubr.bf16.mxu0 0
    %2297 = vmatmul.mubr.bf16.gmra.mrb[0].mxu0 %v2110
    %v2298 = vpop.f32.mrb[0].mxu0
    %v2299 = vadd.f32 %v2057, %v2298
    %v2300 = vpop.f32.mrb[0].mxu0
    %v2301 = vpop.f32.mrb[0].mxu0
    %v2302 = vadd.f32 %v2062, %v2301
    %v2303 = vpop.f32.mrb[0].mxu0
    %2304 = vmatprep.mubr.bf16.mxu0 0
    %2305 = vmatmul.mubr.bf16.gmra.mrb[0].mxu0 %v2111
    %v2306 = vpop.f32.mrb[0].mxu0
    %v2307 = vadd.f32 %v2067, %v2306
    %v2308 = vpop.f32.mrb[0].mxu0
    %v2309 = vpop.f32.mrb[0].mxu0
    %v2310 = vadd.f32 %v2072, %v2309
    %v2311 = vpop.f32.mrb[0].mxu0
    %2312 = vmatprep.mubr.bf16.mxu0 0
    %2313 = vmatmul.mubr.bf16.gmra.mrb[0].mxu0 %v2112
    %v2314 = vpop.f32.mrb[0].mxu0
    %v2315 = vadd.f32 %v2077, %v2314
    %v2316 = vpop.f32.mrb[0].mxu0
    %v2317 = vpop.f32.mrb[0].mxu0
    %v2318 = vadd.f32 %v2082, %v2317
    %v2319 = vpop.f32.mrb[0].mxu0
    %2320 = vmatprep.mubr.bf16.mxu0 0
    %2321 = vmatmul.mubr.bf16.gmra.mrb[0].mxu0 %v2113
    %v2322 = vpop.f32.mrb[0].mxu0
    %v2323 = vadd.f32 %v2087, %v2322
    %v2324 = vpop.f32.mrb[0].mxu0
    %v2325 = vpop.f32.mrb[0].mxu0
    %v2326 = vadd.f32 %v2092, %v2325
    %v2327 = vpop.f32.mrb[0].mxu0
    %2328 = vdwg.mxu0
    %v2329 = vmax.f32 %v2153, 0.0
    %v2330 = vmax.f32 %v2155, 0.0
    %v2331 = vmax.f32 %v2226, 0.0
    %v2332 = vmax.f32 %v2228, 0.0
    %v2333 = vmax.f32 %v2299, 0.0
    %v2334 = vmax.f32 %v2157, 0.0
    %v2335 = vmax.f32 %v2159, 0.0
    %v2336 = vmax.f32 %v2230, 0.0
    %v2337 = vmax.f32 %v2232, 0.0
    %v2338 = vmax.f32 %v2302, 0.0
    %v2339 = vmax.f32 %v2163, 0.0
    %v2340 = vmax.f32 %v2165, 0.0
    %v2341 = vmax.f32 %v2236, 0.0
    %v2342 = vmax.f32 %v2238, 0.0
    %v2343 = vmax.f32 %v2307, 0.0
    %v2344 = vmax.f32 %v2167, 0.0
    %v2345 = vmax.f32 %v2169, 0.0
    %v2346 = vmax.f32 %v2240, 0.0
    %v2347 = vmax.f32 %v2242, 0.0
    %v2348 = vmax.f32 %v2310, 0.0
    %v2349 = vmax.f32 %v2173, 0.0
    %v2350 = vmax.f32 %v2175, 0.0
    %v2351 = vmax.f32 %v2246, 0.0
    %v2352 = vmax.f32 %v2248, 0.0
    %v2353 = vmax.f32 %v2315, 0.0
    %v2354 = vmax.f32 %v2177, 0.0
    %v2355 = vmax.f32 %v2179, 0.0
    %v2356 = vmax.f32 %v2250, 0.0
    %v2357 = vmax.f32 %v2252, 0.0
    %v2358 = vmax.f32 %v2318, 0.0
    %v2359 = vmax.f32 %v2183, 0.0
    %v2360 = vmax.f32 %v2185, 0.0
    %v2361 = vmax.f32 %v2256, 0.0
    %v2362 = vmax.f32 %v2258, 0.0
    %v2363 = vmax.f32 %v2323, 0.0
    %v2364 = vmax.f32 %v2187, 0.0
    %v2365 = vmax.f32 %v2189, 0.0
    %v2366 = vmax.f32 %v2260, 0.0
    %v2367 = vmax.f32 %v2262, 0.0
    %v2368 = vmax.f32 %v2326, 0.0
    %v2369 = vld [vmem:[%s7] sm:$0xff]
    %v2370 = vld [vmem:[%s7 + $0x8] sm:$0xff]
    %v2371 = vld [vmem:[%s7 + $0x10] sm:$0xff]
    %v2372 = vld [vmem:[%s7 + $0x18] sm:$0xff]
    %v2373 = vld [vmem:[%s7 + $0x20] sm:$0xff]
    %v2374 = vld [vmem:[%s7 + $0x28] sm:$0xff]
    %v2375 = vld [vmem:[%s7 + $0x30] sm:$0xff]
    %v2376 = vld [vmem:[%s7 + $0x38] sm:$0xff]
    %2378 = vset.pattern.permute.xlu0 0
    %2379 = vperm.xlu0 %2378, %v2369
    %v2380 = vpop.permute.xlu0 %2379
    %2383 = vset.pattern.permute.xlu0 0
    %2384 = vperm.xlu0 %2383, %v2370
    %v2385 = vpop.permute.xlu0 %2384
    %2388 = vset.pattern.permute.xlu0 0
    %2389 = vperm.xlu0 %2388, %v2371
    %v2390 = vpop.permute.xlu0 %2389
    %2393 = vset.pattern.permute.xlu0 0
    %2394 = vperm.xlu0 %2393, %v2372
    %v2395 = vpop.permute.xlu0 %2394
    %2398 = vset.pattern.permute.xlu0 0
    %2399 = vperm.xlu0 %2398, %v2373
    %v2400 = vpop.permute.xlu0 %2399
    %2403 = vset.pattern.permute.xlu0 0
    %2404 = vperm.xlu0 %2403, %v2374
    %v2405 = vpop.permute.xlu0 %2404
    %2408 = vset.pattern.permute.xlu0 0
    %2409 = vperm.xlu0 %2408, %v2375
    %v2410 = vpop.permute.xlu0 %2409
    %2413 = vset.pattern.permute.xlu0 0
    %2414 = vperm.xlu0 %2413, %v2376
    %v2415 = vpop.permute.xlu0 %2414
    %v2417 = vmul.f32 %v2329, %v2380
    %v2418 = vmul.f32 %v2330, %v2380
    %v2419 = vmul.f32 %v2331, %v2380
    %v2420 = vmul.f32 %v2332, %v2380
    %v2421 = vmul.f32 %v2333, %v2380
    %v2422 = vmul.f32 %v2334, %v2385
    %v2423 = vmul.f32 %v2335, %v2385
    %v2424 = vmul.f32 %v2336, %v2385
    %v2425 = vmul.f32 %v2337, %v2385
    %v2426 = vmul.f32 %v2338, %v2385
    %v2427 = vmul.f32 %v2339, %v2390
    %v2428 = vmul.f32 %v2340, %v2390
    %v2429 = vmul.f32 %v2341, %v2390
    %v2430 = vmul.f32 %v2342, %v2390
    %v2431 = vmul.f32 %v2343, %v2390
    %v2432 = vmul.f32 %v2344, %v2395
    %v2433 = vmul.f32 %v2345, %v2395
    %v2434 = vmul.f32 %v2346, %v2395
    %v2435 = vmul.f32 %v2347, %v2395
    %v2436 = vmul.f32 %v2348, %v2395
    %v2437 = vmul.f32 %v2349, %v2400
    %v2438 = vmul.f32 %v2350, %v2400
    %v2439 = vmul.f32 %v2351, %v2400
    %v2440 = vmul.f32 %v2352, %v2400
    %v2441 = vmul.f32 %v2353, %v2400
    %v2442 = vmul.f32 %v2354, %v2405
    %v2443 = vmul.f32 %v2355, %v2405
    %v2444 = vmul.f32 %v2356, %v2405
    %v2445 = vmul.f32 %v2357, %v2405
    %v2446 = vmul.f32 %v2358, %v2405
    %v2447 = vmul.f32 %v2359, %v2410
    %v2448 = vmul.f32 %v2360, %v2410
    %v2449 = vmul.f32 %v2361, %v2410
    %v2450 = vmul.f32 %v2362, %v2410
    %v2451 = vmul.f32 %v2363, %v2410
    %v2452 = vmul.f32 %v2364, %v2415
    %v2453 = vmul.f32 %v2365, %v2415
    %v2454 = vmul.f32 %v2366, %v2415
    %v2455 = vmul.f32 %v2367, %v2415
    %v2456 = vmul.f32 %v2368, %v2415
    %v2457 = vadd.f32 %v2417, %v2422
    %v2458 = vadd.f32 %v2457, %v2427
    %v2459 = vadd.f32 %v2458, %v2432
    %v2460 = vadd.f32 %v2459, %v2437
    %v2461 = vadd.f32 %v2460, %v2442
    %v2462 = vadd.f32 %v2461, %v2447
    %v2463 = vadd.f32 %v2462, %v2452
    %v2464 = vrot.slane %v2463, 4
    %v2465 = vadd.f32 %v2463, %v2464
    %v2466 = vrot.slane %v2465, 2
    %v2467 = vadd.f32 %v2465, %v2466
    %v2468 = vrot.slane %v2467, 1
    %v2469 = vadd.f32 %v2467, %v2468
    %v2470 = vadd.f32 %v2418, %v2423
    %v2471 = vadd.f32 %v2470, %v2428
    %v2472 = vadd.f32 %v2471, %v2433
    %v2473 = vadd.f32 %v2472, %v2438
    %v2474 = vadd.f32 %v2473, %v2443
    %v2475 = vadd.f32 %v2474, %v2448
    %v2476 = vadd.f32 %v2475, %v2453
    %v2477 = vrot.slane %v2476, 4
    %v2478 = vadd.f32 %v2476, %v2477
    %v2479 = vrot.slane %v2478, 2
    %v2480 = vadd.f32 %v2478, %v2479
    %v2481 = vrot.slane %v2480, 1
    %v2482 = vadd.f32 %v2480, %v2481
    %v2483 = vadd.f32 %v2419, %v2424
    %v2484 = vadd.f32 %v2483, %v2429
    %v2485 = vadd.f32 %v2484, %v2434
    %v2486 = vadd.f32 %v2485, %v2439
    %v2487 = vadd.f32 %v2486, %v2444
    %v2488 = vadd.f32 %v2487, %v2449
    %v2489 = vadd.f32 %v2488, %v2454
    %v2490 = vrot.slane %v2489, 4
    %v2491 = vadd.f32 %v2489, %v2490
    %v2492 = vrot.slane %v2491, 2
    %v2493 = vadd.f32 %v2491, %v2492
    %v2494 = vrot.slane %v2493, 1
    %v2495 = vadd.f32 %v2493, %v2494
    %v2496 = vadd.f32 %v2420, %v2425
    %v2497 = vadd.f32 %v2496, %v2430
    %v2498 = vadd.f32 %v2497, %v2435
    %v2499 = vadd.f32 %v2498, %v2440
    %v2500 = vadd.f32 %v2499, %v2445
    %v2501 = vadd.f32 %v2500, %v2450
    %v2502 = vadd.f32 %v2501, %v2455
    %v2503 = vrot.slane %v2502, 4
    %v2504 = vadd.f32 %v2502, %v2503
    %v2505 = vrot.slane %v2504, 2
    %v2506 = vadd.f32 %v2504, %v2505
    %v2507 = vrot.slane %v2506, 1
    %v2508 = vadd.f32 %v2506, %v2507
    %vm2509 = vcmask 719872
    %v2510 = vsel %vm2509, %v2421, 0.0
    %v2511 = vsel %vm2509, %v2426, 0.0
    %v2512 = vadd.f32 %v2510, %v2511
    %v2513 = vsel %vm2509, %v2431, 0.0
    %v2514 = vadd.f32 %v2512, %v2513
    %v2515 = vsel %vm2509, %v2436, 0.0
    %v2516 = vadd.f32 %v2514, %v2515
    %v2517 = vsel %vm2509, %v2441, 0.0
    %v2518 = vadd.f32 %v2516, %v2517
    %v2519 = vsel %vm2509, %v2446, 0.0
    %v2520 = vadd.f32 %v2518, %v2519
    %v2521 = vsel %vm2509, %v2451, 0.0
    %v2522 = vadd.f32 %v2520, %v2521
    %v2523 = vsel %vm2509, %v2456, 0.0
    %v2524 = vadd.f32 %v2522, %v2523
    %v2525 = vrot.slane %v2524, 4
    %v2526 = vadd.f32 %v2524, %v2525
    %v2527 = vrot.slane %v2526, 2
    %v2528 = vadd.f32 %v2526, %v2527
    %v2529 = vrot.slane %v2528, 1
    %v2530 = vadd.f32 %v2528, %v2529
    %v2531 = vld [vmem:[#allocation2] sm:$0x1]
    %2533 = vset.pattern.permute.xlu0 0
    %2534 = vperm.xlu0 %2533, %v2531
    %v2535 = vpop.permute.xlu0 %2534
    %v2537 = vlaneseq
    %v2538 = vshrl.u32 %v2537, 7
    %v2539 = vsub.s32 0, %v2538
    %v2540 = vrot.slane %v2535, %v2539
    %v2541 = vadd.f32 %v2469, %v2540
    %v2542 = vadd.f32 %v2482, %v2540
    %v2543 = vadd.f32 %v2495, %v2540
    %v2544 = vadd.f32 %v2508, %v2540
    %v2545 = vadd.f32 %v2530, %v2540
    %v2551 = vcombine.low %v2541, %v2542
    %v2552 = vcombine.low %v2543, %v2544
    %v2554 = vunpack.c.l.s4 1966171168
    %v2555 = vunpack.c.0.s8 %v2554
    %v2556 = vlaneseq
    %v2557 = vshrl.u32 %v2556, 7
    %v2558 = vsub.s32 %v2555, %v2557
    %v2559 = vrot.slane %v2551, %v2558
    %v2561 = vunpack.c.l.s4 1966171168
    %v2562 = vunpack.c.0.s8 %v2561
    %v2563 = vlaneseq
    %v2564 = vshrl.u32 %v2563, 7
    %v2565 = vsub.s32 %v2562, %v2564
    %v2566 = vrot.slane %v2552, %v2565
    %v2568 = vunpack.c.l.s4 1966171168
    %v2569 = vunpack.c.0.s8 %v2568
    %v2570 = vlaneseq
    %v2571 = vshrl.u32 %v2570, 7
    %v2572 = vsub.s32 %v2569, %v2571
    %v2573 = vrot.slane %v2545, %v2572
    %v2574 = vcombine.low %v2559, %v2566
    %v2576 = vunpack.c.l.s4 1966171168
    %v2577 = vunpack.c.0.s8 %v2576
    %v2578 = vlaneseq
    %v2579 = vshrl.u32 %v2578, 7
    %v2580 = vsub.s32 %v2577, %v2579
    %v2581 = vrot.slane %v2574, %v2580
    %v2583 = vunpack.c.l.s4 1966171168
    %v2584 = vunpack.c.0.s8 %v2583
    %v2585 = vlaneseq
    %v2586 = vshrl.u32 %v2585, 7
    %v2587 = vsub.s32 %v2584, %v2586
    %v2588 = vrot.slane %v2573, %v2587
    %v2589 = vcombine.low %v2581, %v2588
    %v2591 = vlaneseq
    %vm2592 = vcmp.ge.s32.totalorder %v2591, 0
    %vm2593 = vcmp.lt.s32.totalorder %v2591, 600
    %vm2594 = vmand %vm2592, %vm2593
    %2595 = vst.msk [vmem:[#allocation3] sm:$0x1f] %vm2594, %v2589
    // Predicated region
    $region38: #{_mlp_forward_impl.1} parent=1 // pred_check
      _
    $region39: #{_mlp_forward_impl.1} parent=1 // pred_check_branch
      %2597 = sbr.rel (0) target = $region41
    $region40: #{_mlp_forward_impl.1} parent=1 // pred_region
      %s2599 = ssub.s32 80, 80
      %2600 = vsyncadd [#allocation4], %s2599
      %s2602 = sshll.u32 [#allocation3], 4
      %s2603 = int_to_ptr.vmem [resolvable:$true] %s2602
      %2605 = dma.vmem_to_hbm [thread:$0]  %s2603, 80, %s9, [#allocation4]
    $region41: #{_mlp_forward_impl.1} parent=1 // pred_fallthru
      _
    // Predicated region
    $region42: #{_mlp_forward_impl.1} parent=1 // pred_check
      _
    $region43: #{_mlp_forward_impl.1} parent=1 // pred_check_branch
      %2607 = sbr.rel (0) target = $region45
    $region44: #{_mlp_forward_impl.1} parent=1 // pred_region
      %2608 = dma.done [#allocation4], 80
    $region45: #{_mlp_forward_impl.1} parent=1 // pred_fallthru
      _
    %2609 = vsyncpa [#allocation4], 1

</llo_original>
